<compile_context>
chip_gen: v6e
topology: v6e:2x2x1
jax: 0.10.0
libtpu: 0.0.40
codegen_flags: <defaults>
</compile_context>

<pallas_src>
import functools

import jax
import jax.numpy as jnp
from jax.experimental import pallas as pl
from jax.experimental.pallas import tpu as pltpu

BN_EPS = 1e-5
LRELU_SLOPE = 0.2
LANE = 128
MAX_TILE_M = 1024                # rows per grid step
VMEM_LIMIT = 32 * 1024 * 1024    # tight budget: fine on v7x 64 MiB, > v5e default


def _round_up(x, m):
    return (x + m - 1) // m * m


def _tile_m(m):
    if m <= MAX_TILE_M:
        return max(_round_up(m, 8), 8)
    return MAX_TILE_M


def _tile_k(kdim, max_tile=2048):
    assert kdim % LANE == 0, "contraction dim must be lane-padded"
    t = min(kdim, max_tile)
    t -= t % LANE
    while kdim % t:
        t -= LANE
    return t


# ----------------------------- Pallas kernels ------------------------------ #

def _conv_bn_lrelu_kernel(p_ref, w_ref, gamma_ref, beta_ref, o_ref,
                          sum_ref, sq_ref, *, inv_count):
    """Fused conv-matmul + BatchNorm(train) + LeakyReLU.

    grid = (2, n_tiles); phase 0 accumulates BN statistics (scratch persists
    across grid steps), phase 1 recomputes the cheap matmul and writes the
    normalized bf16 output.  Zero-padded rows / channels contribute zeros to
    the sums and are sliced away by the wrapper, so statistics stay exact.
    """
    phase = pl.program_id(0)
    i = pl.program_id(1)

    # (TM, Kp) bf16 @ (Kp, Cp) bf16 -> f32 on the MXU (done in both phases).
    y = jnp.dot(p_ref[...], w_ref[...], preferred_element_type=jnp.float32)

    @pl.when((phase == 0) & (i == 0))
    def _():
        sum_ref[...] = jnp.zeros_like(sum_ref)
        sq_ref[...] = jnp.zeros_like(sq_ref)

    @pl.when(phase == 0)
    def _():
        sum_ref[...] += jnp.sum(y, axis=0, keepdims=True)        # (1, Cp)
        sq_ref[...] += jnp.sum(y * y, axis=0, keepdims=True)     # (1, Cp)

    @pl.when(phase == 1)
    def _():
        # One-pass biased batch stats (N*H*W), matching PyTorch training-mode
        # BatchNorm2d normalization.  f32 accumulation; variance clamped >= 0.
        mean = sum_ref[...] * inv_count
        var = jnp.maximum(sq_ref[...] * inv_count - mean * mean, 0.0)
        inv = jax.lax.rsqrt(var + BN_EPS)
        scale = gamma_ref[...] * inv
        shift = beta_ref[...] - mean * scale
        z = y * scale + shift
        o_ref[...] = jnp.where(z > 0, z, LRELU_SLOPE * z).astype(o_ref.dtype)


def _linear_kernel(x_ref, w_ref, b_ref, o_ref, acc_ref):
    k = pl.program_id(0)

    @pl.when(k == 0)
    def _():
        acc_ref[...] = jnp.zeros_like(acc_ref)

    acc_ref[...] += jnp.dot(x_ref[...], w_ref[...],
                            preferred_element_type=jnp.float32)

    @pl.when(k == pl.num_programs(0) - 1)
    def _():
        o_ref[...] = (acc_ref[...] + b_ref[...]).astype(o_ref.dtype)


# ------------------------------- wrappers ----------------------------------- #

def conv_bn_lrelu(x_nhwc, w_packed, gamma, beta, stride, cin):
    """Conv2d(3x3, stride, pad=1, bias=False) + BN(train) + LeakyReLU(0.2)."""
    x = x_nhwc[..., :cin]             # drop lane-padding channels before im2col
    n, h, w, _ = x.shape
    kp, cp = w_packed.shape
    ho = (h + 2 - 3) // stride + 1
    wo = (w + 2 - 3) // stride + 1
    m = n * ho * wo

    # im2col glue (pure data movement, plain JAX, bf16 end-to-end).
    # TODO(synk): fuse into the kernel via haloed DMA tiles to remove 9x traffic.
    xp = jnp.pad(x, ((0, 0), (1, 1), (1, 1), (0, 0)))
    cols = [xp[:, kh:kh + ho * stride:stride, kw:kw + wo * stride:stride, :]
            for kh in range(3) for kw in range(3)]
    patches = jnp.concatenate(cols, axis=-1).reshape(m, 9 * cin)
    if kp > 9 * cin:                                  # lane-pad K only
        patches = jnp.pad(patches, ((0, 0), (0, kp - 9 * cin)))

    tm = _tile_m(m)
    m_pad = _round_up(m, tm)
    if m_pad > m:                                     # zero rows: stats unaffected
        patches = jnp.pad(patches, ((0, m_pad - m), (0, 0)))
    n_tiles = m_pad // tm

    out = pl.pallas_call(
        functools.partial(_conv_bn_lrelu_kernel, inv_count=1.0 / m),
        grid=(2, n_tiles),
        in_specs=[
            pl.BlockSpec((tm, kp), lambda p, i: (i, 0)),
            pl.BlockSpec((kp, cp), lambda p, i: (0, 0)),     # weights resident
            pl.BlockSpec((1, cp), lambda p, i: (0, 0)),
            pl.BlockSpec((1, cp), lambda p, i: (0, 0)),
        ],
        out_specs=pl.BlockSpec((tm, cp), lambda p, i: (i, 0)),
        out_shape=jax.ShapeDtypeStruct((m_pad, cp), jnp.bfloat16),
        scratch_shapes=[pltpu.VMEM((1, cp), jnp.float32),    # channel sums
                        pltpu.VMEM((1, cp), jnp.float32)],   # channel sum-sq
        compiler_params=pltpu.CompilerParams(
            dimension_semantics=("arbitrary", "arbitrary"),
            vmem_limit_bytes=VMEM_LIMIT),
        cost_estimate=pl.CostEstimate(
            flops=2 * 2 * m_pad * kp * cp,
            transcendentals=0,
            bytes_accessed=2 * m_pad * kp * 2 + kp * cp * 2 + m_pad * cp * 2),
    )(patches, w_packed, gamma, beta)

    # Padded channels carry gamma=beta=0 and stay exactly zero.
    return out[:m].reshape(n, ho, wo, cp)


def linear(x_flat, w_packed, b_packed, hidden_dim):
    """nn.Linear with pre-permuted / lane-padded weight, K-tiled accumulator."""
    n, k_real = x_flat.shape
    kp, hp = w_packed.shape
    n_pad = max(_round_up(n, 8), 8)                   # unmasked (8,128) stores

    x = x_flat.astype(jnp.bfloat16)
    if kp > k_real:
        x = jnp.pad(x, ((0, 0), (0, kp - k_real)))
    if n_pad > n:
        x = jnp.pad(x, ((0, n_pad - n), (0, 0)))

    tk = _tile_k(kp)
    n_k = kp // tk

    out = pl.pallas_call(
        _linear_kernel,
        grid=(n_k,),
        in_specs=[
            pl.BlockSpec((n_pad, tk), lambda k: (0, k)),
            pl.BlockSpec((tk, hp), lambda k: (k, 0)),
            pl.BlockSpec((1, hp), lambda k: (0, 0)),
        ],
        out_specs=pl.BlockSpec((n_pad, hp), lambda k: (0, 0)),
        out_shape=jax.ShapeDtypeStruct((n_pad, hp), jnp.float32),
        scratch_shapes=[pltpu.VMEM((n_pad, hp), jnp.float32)],
        compiler_params=pltpu.CompilerParams(
            dimension_semantics=("arbitrary",),
            vmem_limit_bytes=VMEM_LIMIT),
        cost_estimate=pl.CostEstimate(
            flops=2 * n_pad * kp * hp,
            transcendentals=0,
            bytes_accessed=n_pad * kp * 2 + kp * hp * 2 + n_pad * hp * 4),
    )(x, w_packed, b_packed)
    return out[:n, :hidden_dim]


# ---------------------------- Encoder (params) ------------------------------ #

def init_encoder_params(key, in_channel, n_filters, hidden_dim, image_hw):
    assert image_hw % 4 == 0, "Should be divided 4"
    cfg = [
        (in_channel,    n_filters,     1),
        (n_filters,     n_filters,     1),
        (n_filters,     2 * n_filters, 2),
        (2 * n_filters, 2 * n_filters, 1),
        (2 * n_filters, 3 * n_filters, 2),
        (3 * n_filters, 3 * n_filters, 1),
        (3 * n_filters, 3 * n_filters, 1),
    ]
    params = {"conv": [], "hidden_dim": hidden_dim, "c_last": 3 * n_filters}
    for (cin, cout, s) in cfg:
        key, k = jax.random.split(key)
        w = jax.random.normal(k, (cout, cin, 3, 3), jnp.float32) / jnp.sqrt(9.0 * cin)
        cp = _round_up(cout, LANE)
        k0 = 9 * cin
        kp = _round_up(k0, LANE)
        # (cout,cin,3,3) -> (kh,kw,cin,cout) -> (9*cin, cout), pad K & Cout to lanes.
        wt = jnp.transpose(w, (2, 3, 1, 0)).reshape(k0, cout)
        w_packed = jnp.pad(wt, ((0, kp - k0), (0, cp - cout))).astype(jnp.bfloat16)
        gamma = jnp.pad(jnp.ones((cout,), jnp.float32), (0, cp - cout)).reshape(1, cp)
        beta = jnp.zeros((1, cp), jnp.float32)
        params["conv"].append(
            {"w": w_packed, "gamma": gamma, "beta": beta, "stride": s, "cin": cin})

    # Final Linear: fold PyTorch's NCHW flatten order + lane padding into the
    # weight ONCE at init (no per-forward transposes).
    c_last = 3 * n_filters
    hf = wf = image_hw // 4
    flat = hf * wf * c_last
    kp_fc = _round_up(flat, LANE)
    hp = _round_up(hidden_dim, LANE)
    key, kw_, kb_ = jax.random.split(key, 3)
    fc_w = jax.random.normal(kw_, (hidden_dim, flat), jnp.float32) / jnp.sqrt(flat)
    fc_b = 0.01 * jax.random.normal(kb_, (hidden_dim,), jnp.float32)
    wt = jnp.transpose(fc_w.reshape(hidden_dim, c_last, hf, wf), (2, 3, 1, 0))
    wt = wt.reshape(flat, hidden_dim)
    params["fc_w"] = jnp.pad(
        wt, ((0, kp_fc - flat), (0, hp - hidden_dim))).astype(jnp.bfloat16)
    params["fc_b"] = jnp.pad(fc_b, (0, hp - hidden_dim)).reshape(1, hp)
    return params


def encoder_forward(params, x_nchw):
    # NCHW -> NHWC once at entry; bf16 once so layer-1 patches aren't built in f32.
    h = jnp.transpose(x_nchw, (0, 2, 3, 1)).astype(jnp.bfloat16)
    for layer in params["conv"]:
        h = conv_bn_lrelu(h, layer["w"], layer["gamma"], layer["beta"],
                          layer["stride"], layer["cin"])
    n = h.shape[0]
    # Flatten real channels only (NHWC order); fc weight was pre-permuted to match.
    h = h[..., :params["c_last"]].reshape(n, -1)
    return linear(h, params["fc_w"], params["fc_b"], params["hidden_dim"])


# --------------------------------- main ------------------------------------- #

if __name__ == "__main__":
    # Small shapes consistent with the module: image 16x16 (divisible by 4),
    # in_channel=3, n_filters=8, hidden_dim=32, batch=2.
    BATCH, IN_CH, HW, NF, HID = 2, 3, 16, 8, 32

    key = jax.random.PRNGKey(0)
    key, kx = jax.random.split(key)
    x = jax.random.normal(kx, (BATCH, IN_CH, HW, HW), jnp.float32)

    params = init_encoder_params(key, IN_CH, NF, HID, HW)

    fwd = jax.jit(lambda xx: encoder_forward(params, xx))
    out = jax.block_until_ready(fwd(x))

    assert out.shape == (BATCH, HID), out.shape
    assert out.dtype == jnp.float32
    print("KERNEL_OK")
</pallas_src>

<mosaic_0001>
module attributes {stable_mosaic.version = 11 : i64} {
  func.func @_conv_bn_lrelu_kernel(%arg0: i32, %arg1: i32, %arg2: memref<512x128xbf16, #tpu.memory_space<vmem>>, %arg3: memref<128x128xbf16, #tpu.memory_space<vmem>>, %arg4: memref<1x128xf32, #tpu.memory_space<vmem>>, %arg5: memref<1x128xf32, #tpu.memory_space<vmem>>, %arg6: memref<512x128xbf16, #tpu.memory_space<vmem>>, %arg7: memref<1x128xf32, #tpu.memory_space<vmem>>, %arg8: memref<1x128xf32, #tpu.memory_space<vmem>>) attributes {dimension_semantics = [#tpu.dimension_semantics<arbitrary>, #tpu.dimension_semantics<arbitrary>], iteration_bounds = array<i64: 2, 1>, scalar_prefetch = 0 : i64, scratch_operands = 2 : i64, tpu.core_type = #tpu.core_type<tc>, window_params = [{transform_indices = @transform_0, window_bounds = array<i64: 512, 128>}, {pipeline_mode = #tpu.pipeline_mode<synchronous>, transform_indices = @transform_1, window_bounds = array<i64: 128, 128>}, {pipeline_mode = #tpu.pipeline_mode<synchronous>, transform_indices = @transform_2, window_bounds = array<i64: 1, 128>}, {pipeline_mode = #tpu.pipeline_mode<synchronous>, transform_indices = @transform_3, window_bounds = array<i64: 1, 128>}, {transform_indices = @transform_4, window_bounds = array<i64: 512, 128>}]} {
    %c0 = arith.constant 0 : index
    %c0_0 = arith.constant 0 : index
    %0 = vector.load %arg2[%c0, %c0_0] : memref<512x128xbf16, #tpu.memory_space<vmem>>, vector<512x128xbf16>
    %c0_1 = arith.constant 0 : index
    %c0_2 = arith.constant 0 : index
    %1 = vector.load %arg3[%c0_1, %c0_2] : memref<128x128xbf16, #tpu.memory_space<vmem>>, vector<128x128xbf16>
    %cst = arith.constant dense<0.000000e+00> : vector<512x128xf32>
    %2 = tpu.matmul %0, %1, %cst {dimension_numbers = #tpu.dot_dimension_numbers<[1], [0], [0], [1], [0, 0, 1, 1], [], []>} : vector<512x128xbf16>, vector<128x128xbf16>, vector<512x128xf32> -> vector<512x128xf32>
    %c0_i32 = arith.constant 0 : i32
    %3 = arith.cmpi eq, %arg0, %c0_i32 : i32
    %c0_i32_3 = arith.constant 0 : i32
    %4 = arith.cmpi eq, %arg1, %c0_i32_3 : i32
    %5 = arith.andi %3, %4 : i1
    %6 = arith.extui %5 : i1 to i32
    %c0_i32_4 = arith.constant 0 : i32
    %7 = arith.cmpi ne, %6, %c0_i32_4 : i32
    scf.if %7 {
      %cst_8 = arith.constant 0.000000e+00 : f32
      %14 = vector.broadcast %cst_8 : f32 to vector<1x128xf32>
      %c0_9 = arith.constant 0 : index
      %c0_10 = arith.constant 0 : index
      %15 = vector.load %arg7[%c0_9, %c0_10] : memref<1x128xf32, #tpu.memory_space<vmem>>, vector<1x128xf32>
      tpu.vector_store %arg7[%c0_9, %c0_10], %14 {strides = array<i32>} : memref<1x128xf32, #tpu.memory_space<vmem>>, vector<1x128xf32>,
      %cst_11 = arith.constant 0.000000e+00 : f32
      %16 = vector.broadcast %cst_11 : f32 to vector<1x128xf32>
      %c0_12 = arith.constant 0 : index
      %c0_13 = arith.constant 0 : index
      %17 = vector.load %arg8[%c0_12, %c0_13] : memref<1x128xf32, #tpu.memory_space<vmem>>, vector<1x128xf32>
      tpu.vector_store %arg8[%c0_12, %c0_13], %16 {strides = array<i32>} : memref<1x128xf32, #tpu.memory_space<vmem>>, vector<1x128xf32>,
    } else {
    }
    %c0_i32_5 = arith.constant 0 : i32
    %8 = arith.cmpi eq, %arg0, %c0_i32_5 : i32
    %9 = arith.extui %8 : i1 to i32
    %c0_i32_6 = arith.constant 0 : i32
    %10 = arith.cmpi ne, %9, %c0_i32_6 : i32
    scf.if %10 {
      %c0_8 = arith.constant 0 : index
      %c0_9 = arith.constant 0 : index
      %14 = vector.load %arg7[%c0_8, %c0_9] : memref<1x128xf32, #tpu.memory_space<vmem>>, vector<1x128xf32>
      %cst_10 = arith.constant dense<0.000000e+00> : vector<128xf32>
      %15 = vector.multi_reduction <add>, %2, %cst_10 [0] : vector<512x128xf32> to vector<128xf32>
      %16 = vector.shape_cast %15 : vector<128xf32> to vector<1x128xf32>
      %17 = arith.addf %14, %16 : vector<1x128xf32>
      %c0_11 = arith.constant 0 : index
      %c0_12 = arith.constant 0 : index
      %18 = vector.load %arg7[%c0_11, %c0_12] : memref<1x128xf32, #tpu.memory_space<vmem>>, vector<1x128xf32>
      tpu.vector_store %arg7[%c0_11, %c0_12], %17 {strides = array<i32>} : memref<1x128xf32, #tpu.memory_space<vmem>>, vector<1x128xf32>,
      %c0_13 = arith.constant 0 : index
      %c0_14 = arith.constant 0 : index
      %19 = vector.load %arg8[%c0_13, %c0_14] : memref<1x128xf32, #tpu.memory_space<vmem>>, vector<1x128xf32>
      %20 = arith.mulf %2, %2 : vector<512x128xf32>
      %cst_15 = arith.constant dense<0.000000e+00> : vector<128xf32>
      %21 = vector.multi_reduction <add>, %20, %cst_15 [0] : vector<512x128xf32> to vector<128xf32>
      %22 = vector.shape_cast %21 : vector<128xf32> to vector<1x128xf32>
      %23 = arith.addf %19, %22 : vector<1x128xf32>
      %c0_16 = arith.constant 0 : index
      %c0_17 = arith.constant 0 : index
      %24 = vector.load %arg8[%c0_16, %c0_17] : memref<1x128xf32, #tpu.memory_space<vmem>>, vector<1x128xf32>
      tpu.vector_store %arg8[%c0_16, %c0_17], %23 {strides = array<i32>} : memref<1x128xf32, #tpu.memory_space<vmem>>, vector<1x128xf32>,
    } else {
    }
    %c1_i32 = arith.constant 1 : i32
    %11 = arith.cmpi eq, %arg0, %c1_i32 : i32
    %12 = arith.extui %11 : i1 to i32
    %c0_i32_7 = arith.constant 0 : i32
    %13 = arith.cmpi ne, %12, %c0_i32_7 : i32
    scf.if %13 {
      %c0_8 = arith.constant 0 : index
      %c0_9 = arith.constant 0 : index
      %14 = vector.load %arg7[%c0_8, %c0_9] : memref<1x128xf32, #tpu.memory_space<vmem>>, vector<1x128xf32>
      %cst_10 = arith.constant 0.001953125 : f32
      %15 = vector.broadcast %cst_10 : f32 to vector<1x128xf32>
      %16 = arith.mulf %14, %15 : vector<1x128xf32>
      %c0_11 = arith.constant 0 : index
      %c0_12 = arith.constant 0 : index
      %17 = vector.load %arg8[%c0_11, %c0_12] : memref<1x128xf32, #tpu.memory_space<vmem>>, vector<1x128xf32>
      %cst_13 = arith.constant 0.001953125 : f32
      %18 = vector.broadcast %cst_13 : f32 to vector<1x128xf32>
      %19 = arith.mulf %17, %18 : vector<1x128xf32>
      %20 = arith.mulf %16, %16 : vector<1x128xf32>
      %21 = arith.subf %19, %20 : vector<1x128xf32>
      %cst_14 = arith.constant 0.000000e+00 : f32
      %22 = vector.broadcast %cst_14 : f32 to vector<1x128xf32>
      %23 = arith.maximumf %21, %22 : vector<1x128xf32>
      %cst_15 = arith.constant 9.99999974E-6 : f32
      %24 = vector.broadcast %cst_15 : f32 to vector<1x128xf32>
      %25 = arith.addf %23, %24 : vector<1x128xf32>
      %26 = math.rsqrt %25 : vector<1x128xf32>
      %c0_16 = arith.constant 0 : index
      %c0_17 = arith.constant 0 : index
      %27 = vector.load %arg4[%c0_16, %c0_17] : memref<1x128xf32, #tpu.memory_space<vmem>>, vector<1x128xf32>
      %28 = arith.mulf %27, %26 : vector<1x128xf32>
      %c0_18 = arith.constant 0 : index
      %c0_19 = arith.constant 0 : index
      %29 = vector.load %arg5[%c0_18, %c0_19] : memref<1x128xf32, #tpu.memory_space<vmem>>, vector<1x128xf32>
      %30 = arith.mulf %16, %28 : vector<1x128xf32>
      %31 = arith.subf %29, %30 : vector<1x128xf32>
      %32 = vector.broadcast %28 : vector<1x128xf32> to vector<512x128xf32>
      %33 = arith.mulf %2, %32 : vector<512x128xf32>
      %34 = vector.broadcast %31 : vector<1x128xf32> to vector<512x128xf32>
      %35 = arith.addf %33, %34 : vector<512x128xf32>
      %cst_20 = arith.constant 0.000000e+00 : f32
      %36 = vector.broadcast %cst_20 : f32 to vector<512x128xf32>
      %37 = arith.cmpf ogt, %35, %36 : vector<512x128xf32>
      %cst_21 = arith.constant 2.000000e-01 : f32
      %38 = vector.broadcast %cst_21 : f32 to vector<512x128xf32>
      %39 = arith.mulf %38, %35 : vector<512x128xf32>
      %40 = arith.select %37, %35, %39 : vector<512x128xi1>, vector<512x128xf32>
      %41 = arith.truncf %40 : vector<512x128xf32> to vector<512x128xbf16>
      %c0_22 = arith.constant 0 : index
      %c0_23 = arith.constant 0 : index
      %42 = vector.load %arg6[%c0_22, %c0_23] : memref<512x128xbf16, #tpu.memory_space<vmem>>, vector<512x128xbf16>
      tpu.vector_store %arg6[%c0_22, %c0_23], %41 {strides = array<i32>} : memref<512x128xbf16, #tpu.memory_space<vmem>>, vector<512x128xbf16>,
    } else {
    }
    return
  }
  func.func @transform_0(%arg0: i32, %arg1: i32) -> (i32, i32) {
    %c0_i32 = arith.constant 0 : i32
    %c0_i32_0 = arith.constant 0 : i32
    return %arg1, %c0_i32 : i32, i32
  }
  func.func @transform_1(%arg0: i32, %arg1: i32) -> (i32, i32) {
    %c0_i32 = arith.constant 0 : i32
    %c0_i32_0 = arith.constant 0 : i32
    %c0_i32_1 = arith.constant 0 : i32
    return %c0_i32, %c0_i32_0 : i32, i32
  }
  func.func @transform_2(%arg0: i32, %arg1: i32) -> (i32, i32) {
    %c0_i32 = arith.constant 0 : i32
    %c0_i32_0 = arith.constant 0 : i32
    %c0_i32_1 = arith.constant 0 : i32
    return %c0_i32, %c0_i32_0 : i32, i32
  }
  func.func @transform_3(%arg0: i32, %arg1: i32) -> (i32, i32) {
    %c0_i32 = arith.constant 0 : i32
    %c0_i32_0 = arith.constant 0 : i32
    %c0_i32_1 = arith.constant 0 : i32
    return %c0_i32, %c0_i32_0 : i32, i32
  }
  func.func @transform_4(%arg0: i32, %arg1: i32) -> (i32, i32) {
    %c0_i32 = arith.constant 0 : i32
    %c0_i32_0 = arith.constant 0 : i32
    return %arg1, %c0_i32 : i32, i32
  }
}

module attributes {stable_mosaic.version = 11 : i64} {
  func.func @_conv_bn_lrelu_kernel(%arg0: i32, %arg1: i32, %arg2: memref<128x128xbf16, #tpu.memory_space<vmem>>, %arg3: memref<128x128xbf16, #tpu.memory_space<vmem>>, %arg4: memref<1x128xf32, #tpu.memory_space<vmem>>, %arg5: memref<1x128xf32, #tpu.memory_space<vmem>>, %arg6: memref<128x128xbf16, #tpu.memory_space<vmem>>, %arg7: memref<1x128xf32, #tpu.memory_space<vmem>>, %arg8: memref<1x128xf32, #tpu.memory_space<vmem>>) attributes {dimension_semantics = [#tpu.dimension_semantics<arbitrary>, #tpu.dimension_semantics<arbitrary>], iteration_bounds = array<i64: 2, 1>, scalar_prefetch = 0 : i64, scratch_operands = 2 : i64, tpu.core_type = #tpu.core_type<tc>, window_params = [{transform_indices = @transform_0, window_bounds = array<i64: 128, 128>}, {pipeline_mode = #tpu.pipeline_mode<synchronous>, transform_indices = @transform_1, window_bounds = array<i64: 128, 128>}, {pipeline_mode = #tpu.pipeline_mode<synchronous>, transform_indices = @transform_2, window_bounds = array<i64: 1, 128>}, {pipeline_mode = #tpu.pipeline_mode<synchronous>, transform_indices = @transform_3, window_bounds = array<i64: 1, 128>}, {transform_indices = @transform_4, window_bounds = array<i64: 128, 128>}]} {
    %c0 = arith.constant 0 : index
    %c0_0 = arith.constant 0 : index
    %0 = vector.load %arg2[%c0, %c0_0] : memref<128x128xbf16, #tpu.memory_space<vmem>>, vector<128x128xbf16>
    %c0_1 = arith.constant 0 : index
    %c0_2 = arith.constant 0 : index
    %1 = vector.load %arg3[%c0_1, %c0_2] : memref<128x128xbf16, #tpu.memory_space<vmem>>, vector<128x128xbf16>
    %cst = arith.constant dense<0.000000e+00> : vector<128x128xf32>
    %2 = tpu.matmul %0, %1, %cst {dimension_numbers = #tpu.dot_dimension_numbers<[1], [0], [0], [1], [0, 0, 1, 1], [], []>} : vector<128x128xbf16>, vector<128x128xbf16>, vector<128x128xf32> -> vector<128x128xf32>
    %c0_i32 = arith.constant 0 : i32
    %3 = arith.cmpi eq, %arg0, %c0_i32 : i32
    %c0_i32_3 = arith.constant 0 : i32
    %4 = arith.cmpi eq, %arg1, %c0_i32_3 : i32
    %5 = arith.andi %3, %4 : i1
    %6 = arith.extui %5 : i1 to i32
    %c0_i32_4 = arith.constant 0 : i32
    %7 = arith.cmpi ne, %6, %c0_i32_4 : i32
    scf.if %7 {
      %cst_8 = arith.constant 0.000000e+00 : f32
      %14 = vector.broadcast %cst_8 : f32 to vector<1x128xf32>
      %c0_9 = arith.constant 0 : index
      %c0_10 = arith.constant 0 : index
      %15 = vector.load %arg7[%c0_9, %c0_10] : memref<1x128xf32, #tpu.memory_space<vmem>>, vector<1x128xf32>
      tpu.vector_store %arg7[%c0_9, %c0_10], %14 {strides = array<i32>} : memref<1x128xf32, #tpu.memory_space<vmem>>, vector<1x128xf32>,
      %cst_11 = arith.constant 0.000000e+00 : f32
      %16 = vector.broadcast %cst_11 : f32 to vector<1x128xf32>
      %c0_12 = arith.constant 0 : index
      %c0_13 = arith.constant 0 : index
      %17 = vector.load %arg8[%c0_12, %c0_13] : memref<1x128xf32, #tpu.memory_space<vmem>>, vector<1x128xf32>
      tpu.vector_store %arg8[%c0_12, %c0_13], %16 {strides = array<i32>} : memref<1x128xf32, #tpu.memory_space<vmem>>, vector<1x128xf32>,
    } else {
    }
    %c0_i32_5 = arith.constant 0 : i32
    %8 = arith.cmpi eq, %arg0, %c0_i32_5 : i32
    %9 = arith.extui %8 : i1 to i32
    %c0_i32_6 = arith.constant 0 : i32
    %10 = arith.cmpi ne, %9, %c0_i32_6 : i32
    scf.if %10 {
      %c0_8 = arith.constant 0 : index
      %c0_9 = arith.constant 0 : index
      %14 = vector.load %arg7[%c0_8, %c0_9] : memref<1x128xf32, #tpu.memory_space<vmem>>, vector<1x128xf32>
      %cst_10 = arith.constant dense<0.000000e+00> : vector<128xf32>
      %15 = vector.multi_reduction <add>, %2, %cst_10 [0] : vector<128x128xf32> to vector<128xf32>
      %16 = vector.shape_cast %15 : vector<128xf32> to vector<1x128xf32>
      %17 = arith.addf %14, %16 : vector<1x128xf32>
      %c0_11 = arith.constant 0 : index
      %c0_12 = arith.constant 0 : index
      %18 = vector.load %arg7[%c0_11, %c0_12] : memref<1x128xf32, #tpu.memory_space<vmem>>, vector<1x128xf32>
      tpu.vector_store %arg7[%c0_11, %c0_12], %17 {strides = array<i32>} : memref<1x128xf32, #tpu.memory_space<vmem>>, vector<1x128xf32>,
      %c0_13 = arith.constant 0 : index
      %c0_14 = arith.constant 0 : index
      %19 = vector.load %arg8[%c0_13, %c0_14] : memref<1x128xf32, #tpu.memory_space<vmem>>, vector<1x128xf32>
      %20 = arith.mulf %2, %2 : vector<128x128xf32>
      %cst_15 = arith.constant dense<0.000000e+00> : vector<128xf32>
      %21 = vector.multi_reduction <add>, %20, %cst_15 [0] : vector<128x128xf32> to vector<128xf32>
      %22 = vector.shape_cast %21 : vector<128xf32> to vector<1x128xf32>
      %23 = arith.addf %19, %22 : vector<1x128xf32>
      %c0_16 = arith.constant 0 : index
      %c0_17 = arith.constant 0 : index
      %24 = vector.load %arg8[%c0_16, %c0_17] : memref<1x128xf32, #tpu.memory_space<vmem>>, vector<1x128xf32>
      tpu.vector_store %arg8[%c0_16, %c0_17], %23 {strides = array<i32>} : memref<1x128xf32, #tpu.memory_space<vmem>>, vector<1x128xf32>,
    } else {
    }
    %c1_i32 = arith.constant 1 : i32
    %11 = arith.cmpi eq, %arg0, %c1_i32 : i32
    %12 = arith.extui %11 : i1 to i32
    %c0_i32_7 = arith.constant 0 : i32
    %13 = arith.cmpi ne, %12, %c0_i32_7 : i32
    scf.if %13 {
      %c0_8 = arith.constant 0 : index
      %c0_9 = arith.constant 0 : index
      %14 = vector.load %arg7[%c0_8, %c0_9] : memref<1x128xf32, #tpu.memory_space<vmem>>, vector<1x128xf32>
      %cst_10 = arith.constant 7.812500e-03 : f32
      %15 = vector.broadcast %cst_10 : f32 to vector<1x128xf32>
      %16 = arith.mulf %14, %15 : vector<1x128xf32>
      %c0_11 = arith.constant 0 : index
      %c0_12 = arith.constant 0 : index
      %17 = vector.load %arg8[%c0_11, %c0_12] : memref<1x128xf32, #tpu.memory_space<vmem>>, vector<1x128xf32>
      %cst_13 = arith.constant 7.812500e-03 : f32
      %18 = vector.broadcast %cst_13 : f32 to vector<1x128xf32>
      %19 = arith.mulf %17, %18 : vector<1x128xf32>
      %20 = arith.mulf %16, %16 : vector<1x128xf32>
      %21 = arith.subf %19, %20 : vector<1x128xf32>
      %cst_14 = arith.constant 0.000000e+00 : f32
      %22 = vector.broadcast %cst_14 : f32 to vector<1x128xf32>
      %23 = arith.maximumf %21, %22 : vector<1x128xf32>
      %cst_15 = arith.constant 9.99999974E-6 : f32
      %24 = vector.broadcast %cst_15 : f32 to vector<1x128xf32>
      %25 = arith.addf %23, %24 : vector<1x128xf32>
      %26 = math.rsqrt %25 : vector<1x128xf32>
      %c0_16 = arith.constant 0 : index
      %c0_17 = arith.constant 0 : index
      %27 = vector.load %arg4[%c0_16, %c0_17] : memref<1x128xf32, #tpu.memory_space<vmem>>, vector<1x128xf32>
      %28 = arith.mulf %27, %26 : vector<1x128xf32>
      %c0_18 = arith.constant 0 : index
      %c0_19 = arith.constant 0 : index
      %29 = vector.load %arg5[%c0_18, %c0_19] : memref<1x128xf32, #tpu.memory_space<vmem>>, vector<1x128xf32>
      %30 = arith.mulf %16, %28 : vector<1x128xf32>
      %31 = arith.subf %29, %30 : vector<1x128xf32>
      %32 = vector.broadcast %28 : vector<1x128xf32> to vector<128x128xf32>
      %33 = arith.mulf %2, %32 : vector<128x128xf32>
      %34 = vector.broadcast %31 : vector<1x128xf32> to vector<128x128xf32>
      %35 = arith.addf %33, %34 : vector<128x128xf32>
      %cst_20 = arith.constant 0.000000e+00 : f32
      %36 = vector.broadcast %cst_20 : f32 to vector<128x128xf32>
      %37 = arith.cmpf ogt, %35, %36 : vector<128x128xf32>
      %cst_21 = arith.constant 2.000000e-01 : f32
      %38 = vector.broadcast %cst_21 : f32 to vector<128x128xf32>
      %39 = arith.mulf %38, %35 : vector<128x128xf32>
      %40 = arith.select %37, %35, %39 : vector<128x128xi1>, vector<128x128xf32>
      %41 = arith.truncf %40 : vector<128x128xf32> to vector<128x128xbf16>
      %c0_22 = arith.constant 0 : index
      %c0_23 = arith.constant 0 : index
      %42 = vector.load %arg6[%c0_22, %c0_23] : memref<128x128xbf16, #tpu.memory_space<vmem>>, vector<128x128xbf16>
      tpu.vector_store %arg6[%c0_22, %c0_23], %41 {strides = array<i32>} : memref<128x128xbf16, #tpu.memory_space<vmem>>, vector<128x128xbf16>,
    } else {
    }
    return
  }
  func.func @transform_0(%arg0: i32, %arg1: i32) -> (i32, i32) {
    %c0_i32 = arith.constant 0 : i32
    %c0_i32_0 = arith.constant 0 : i32
    return %arg1, %c0_i32 : i32, i32
  }
  func.func @transform_1(%arg0: i32, %arg1: i32) -> (i32, i32) {
    %c0_i32 = arith.constant 0 : i32
    %c0_i32_0 = arith.constant 0 : i32
    %c0_i32_1 = arith.constant 0 : i32
    return %c0_i32, %c0_i32_0 : i32, i32
  }
  func.func @transform_2(%arg0: i32, %arg1: i32) -> (i32, i32) {
    %c0_i32 = arith.constant 0 : i32
    %c0_i32_0 = arith.constant 0 : i32
    %c0_i32_1 = arith.constant 0 : i32
    return %c0_i32, %c0_i32_0 : i32, i32
  }
  func.func @transform_3(%arg0: i32, %arg1: i32) -> (i32, i32) {
    %c0_i32 = arith.constant 0 : i32
    %c0_i32_0 = arith.constant 0 : i32
    %c0_i32_1 = arith.constant 0 : i32
    return %c0_i32, %c0_i32_0 : i32, i32
  }
  func.func @transform_4(%arg0: i32, %arg1: i32) -> (i32, i32) {
    %c0_i32 = arith.constant 0 : i32
    %c0_i32_0 = arith.constant 0 : i32
    return %arg1, %c0_i32 : i32, i32
  }
}

module attributes {stable_mosaic.version = 11 : i64} {
  func.func @_conv_bn_lrelu_kernel(%arg0: i32, %arg1: i32, %arg2: memref<128x256xbf16, #tpu.memory_space<vmem>>, %arg3: memref<256x128xbf16, #tpu.memory_space<vmem>>, %arg4: memref<1x128xf32, #tpu.memory_space<vmem>>, %arg5: memref<1x128xf32, #tpu.memory_space<vmem>>, %arg6: memref<128x128xbf16, #tpu.memory_space<vmem>>, %arg7: memref<1x128xf32, #tpu.memory_space<vmem>>, %arg8: memref<1x128xf32, #tpu.memory_space<vmem>>) attributes {dimension_semantics = [#tpu.dimension_semantics<arbitrary>, #tpu.dimension_semantics<arbitrary>], iteration_bounds = array<i64: 2, 1>, scalar_prefetch = 0 : i64, scratch_operands = 2 : i64, tpu.core_type = #tpu.core_type<tc>, window_params = [{transform_indices = @transform_0, window_bounds = array<i64: 128, 256>}, {pipeline_mode = #tpu.pipeline_mode<synchronous>, transform_indices = @transform_1, window_bounds = array<i64: 256, 128>}, {pipeline_mode = #tpu.pipeline_mode<synchronous>, transform_indices = @transform_2, window_bounds = array<i64: 1, 128>}, {pipeline_mode = #tpu.pipeline_mode<synchronous>, transform_indices = @transform_3, window_bounds = array<i64: 1, 128>}, {transform_indices = @transform_4, window_bounds = array<i64: 128, 128>}]} {
    %c0 = arith.constant 0 : index
    %c0_0 = arith.constant 0 : index
    %0 = vector.load %arg2[%c0, %c0_0] : memref<128x256xbf16, #tpu.memory_space<vmem>>, vector<128x256xbf16>
    %c0_1 = arith.constant 0 : index
    %c0_2 = arith.constant 0 : index
    %1 = vector.load %arg3[%c0_1, %c0_2] : memref<256x128xbf16, #tpu.memory_space<vmem>>, vector<256x128xbf16>
    %cst = arith.constant dense<0.000000e+00> : vector<128x128xf32>
    %2 = tpu.matmul %0, %1, %cst {dimension_numbers = #tpu.dot_dimension_numbers<[1], [0], [0], [1], [0, 0, 1, 1], [], []>} : vector<128x256xbf16>, vector<256x128xbf16>, vector<128x128xf32> -> vector<128x128xf32>
    %c0_i32 = arith.constant 0 : i32
    %3 = arith.cmpi eq, %arg0, %c0_i32 : i32
    %c0_i32_3 = arith.constant 0 : i32
    %4 = arith.cmpi eq, %arg1, %c0_i32_3 : i32
    %5 = arith.andi %3, %4 : i1
    %6 = arith.extui %5 : i1 to i32
    %c0_i32_4 = arith.constant 0 : i32
    %7 = arith.cmpi ne, %6, %c0_i32_4 : i32
    scf.if %7 {
      %cst_8 = arith.constant 0.000000e+00 : f32
      %14 = vector.broadcast %cst_8 : f32 to vector<1x128xf32>
      %c0_9 = arith.constant 0 : index
      %c0_10 = arith.constant 0 : index
      %15 = vector.load %arg7[%c0_9, %c0_10] : memref<1x128xf32, #tpu.memory_space<vmem>>, vector<1x128xf32>
      tpu.vector_store %arg7[%c0_9, %c0_10], %14 {strides = array<i32>} : memref<1x128xf32, #tpu.memory_space<vmem>>, vector<1x128xf32>,
      %cst_11 = arith.constant 0.000000e+00 : f32
      %16 = vector.broadcast %cst_11 : f32 to vector<1x128xf32>
      %c0_12 = arith.constant 0 : index
      %c0_13 = arith.constant 0 : index
      %17 = vector.load %arg8[%c0_12, %c0_13] : memref<1x128xf32, #tpu.memory_space<vmem>>, vector<1x128xf32>
      tpu.vector_store %arg8[%c0_12, %c0_13], %16 {strides = array<i32>} : memref<1x128xf32, #tpu.memory_space<vmem>>, vector<1x128xf32>,
    } else {
    }
    %c0_i32_5 = arith.constant 0 : i32
    %8 = arith.cmpi eq, %arg0, %c0_i32_5 : i32
    %9 = arith.extui %8 : i1 to i32
    %c0_i32_6 = arith.constant 0 : i32
    %10 = arith.cmpi ne, %9, %c0_i32_6 : i32
    scf.if %10 {
      %c0_8 = arith.constant 0 : index
      %c0_9 = arith.constant 0 : index
      %14 = vector.load %arg7[%c0_8, %c0_9] : memref<1x128xf32, #tpu.memory_space<vmem>>, vector<1x128xf32>
      %cst_10 = arith.constant dense<0.000000e+00> : vector<128xf32>
      %15 = vector.multi_reduction <add>, %2, %cst_10 [0] : vector<128x128xf32> to vector<128xf32>
      %16 = vector.shape_cast %15 : vector<128xf32> to vector<1x128xf32>
      %17 = arith.addf %14, %16 : vector<1x128xf32>
      %c0_11 = arith.constant 0 : index
      %c0_12 = arith.constant 0 : index
      %18 = vector.load %arg7[%c0_11, %c0_12] : memref<1x128xf32, #tpu.memory_space<vmem>>, vector<1x128xf32>
      tpu.vector_store %arg7[%c0_11, %c0_12], %17 {strides = array<i32>} : memref<1x128xf32, #tpu.memory_space<vmem>>, vector<1x128xf32>,
      %c0_13 = arith.constant 0 : index
      %c0_14 = arith.constant 0 : index
      %19 = vector.load %arg8[%c0_13, %c0_14] : memref<1x128xf32, #tpu.memory_space<vmem>>, vector<1x128xf32>
      %20 = arith.mulf %2, %2 : vector<128x128xf32>
      %cst_15 = arith.constant dense<0.000000e+00> : vector<128xf32>
      %21 = vector.multi_reduction <add>, %20, %cst_15 [0] : vector<128x128xf32> to vector<128xf32>
      %22 = vector.shape_cast %21 : vector<128xf32> to vector<1x128xf32>
      %23 = arith.addf %19, %22 : vector<1x128xf32>
      %c0_16 = arith.constant 0 : index
      %c0_17 = arith.constant 0 : index
      %24 = vector.load %arg8[%c0_16, %c0_17] : memref<1x128xf32, #tpu.memory_space<vmem>>, vector<1x128xf32>
      tpu.vector_store %arg8[%c0_16, %c0_17], %23 {strides = array<i32>} : memref<1x128xf32, #tpu.memory_space<vmem>>, vector<1x128xf32>,
    } else {
    }
    %c1_i32 = arith.constant 1 : i32
    %11 = arith.cmpi eq, %arg0, %c1_i32 : i32
    %12 = arith.extui %11 : i1 to i32
    %c0_i32_7 = arith.constant 0 : i32
    %13 = arith.cmpi ne, %12, %c0_i32_7 : i32
    scf.if %13 {
      %c0_8 = arith.constant 0 : index
      %c0_9 = arith.constant 0 : index
      %14 = vector.load %arg7[%c0_8, %c0_9] : memref<1x128xf32, #tpu.memory_space<vmem>>, vector<1x128xf32>
      %cst_10 = arith.constant 7.812500e-03 : f32
      %15 = vector.broadcast %cst_10 : f32 to vector<1x128xf32>
      %16 = arith.mulf %14, %15 : vector<1x128xf32>
      %c0_11 = arith.constant 0 : index
      %c0_12 = arith.constant 0 : index
      %17 = vector.load %arg8[%c0_11, %c0_12] : memref<1x128xf32, #tpu.memory_space<vmem>>, vector<1x128xf32>
      %cst_13 = arith.constant 7.812500e-03 : f32
      %18 = vector.broadcast %cst_13 : f32 to vector<1x128xf32>
      %19 = arith.mulf %17, %18 : vector<1x128xf32>
      %20 = arith.mulf %16, %16 : vector<1x128xf32>
      %21 = arith.subf %19, %20 : vector<1x128xf32>
      %cst_14 = arith.constant 0.000000e+00 : f32
      %22 = vector.broadcast %cst_14 : f32 to vector<1x128xf32>
      %23 = arith.maximumf %21, %22 : vector<1x128xf32>
      %cst_15 = arith.constant 9.99999974E-6 : f32
      %24 = vector.broadcast %cst_15 : f32 to vector<1x128xf32>
      %25 = arith.addf %23, %24 : vector<1x128xf32>
      %26 = math.rsqrt %25 : vector<1x128xf32>
      %c0_16 = arith.constant 0 : index
      %c0_17 = arith.constant 0 : index
      %27 = vector.load %arg4[%c0_16, %c0_17] : memref<1x128xf32, #tpu.memory_space<vmem>>, vector<1x128xf32>
      %28 = arith.mulf %27, %26 : vector<1x128xf32>
      %c0_18 = arith.constant 0 : index
      %c0_19 = arith.constant 0 : index
      %29 = vector.load %arg5[%c0_18, %c0_19] : memref<1x128xf32, #tpu.memory_space<vmem>>, vector<1x128xf32>
      %30 = arith.mulf %16, %28 : vector<1x128xf32>
      %31 = arith.subf %29, %30 : vector<1x128xf32>
      %32 = vector.broadcast %28 : vector<1x128xf32> to vector<128x128xf32>
      %33 = arith.mulf %2, %32 : vector<128x128xf32>
      %34 = vector.broadcast %31 : vector<1x128xf32> to vector<128x128xf32>
      %35 = arith.addf %33, %34 : vector<128x128xf32>
      %cst_20 = arith.constant 0.000000e+00 : f32
      %36 = vector.broadcast %cst_20 : f32 to vector<128x128xf32>
      %37 = arith.cmpf ogt, %35, %36 : vector<128x128xf32>
      %cst_21 = arith.constant 2.000000e-01 : f32
      %38 = vector.broadcast %cst_21 : f32 to vector<128x128xf32>
      %39 = arith.mulf %38, %35 : vector<128x128xf32>
      %40 = arith.select %37, %35, %39 : vector<128x128xi1>, vector<128x128xf32>
      %41 = arith.truncf %40 : vector<128x128xf32> to vector<128x128xbf16>
      %c0_22 = arith.constant 0 : index
      %c0_23 = arith.constant 0 : index
      %42 = vector.load %arg6[%c0_22, %c0_23] : memref<128x128xbf16, #tpu.memory_space<vmem>>, vector<128x128xbf16>
      tpu.vector_store %arg6[%c0_22, %c0_23], %41 {strides = array<i32>} : memref<128x128xbf16, #tpu.memory_space<vmem>>, vector<128x128xbf16>,
    } else {
    }
    return
  }
  func.func @transform_0(%arg0: i32, %arg1: i32) -> (i32, i32) {
    %c0_i32 = arith.constant 0 : i32
    %c0_i32_0 = arith.constant 0 : i32
    return %arg1, %c0_i32 : i32, i32
  }
  func.func @transform_1(%arg0: i32, %arg1: i32) -> (i32, i32) {
    %c0_i32 = arith.constant 0 : i32
    %c0_i32_0 = arith.constant 0 : i32
    %c0_i32_1 = arith.constant 0 : i32
    return %c0_i32, %c0_i32_0 : i32, i32
  }
  func.func @transform_2(%arg0: i32, %arg1: i32) -> (i32, i32) {
    %c0_i32 = arith.constant 0 : i32
    %c0_i32_0 = arith.constant 0 : i32
    %c0_i32_1 = arith.constant 0 : i32
    return %c0_i32, %c0_i32_0 : i32, i32
  }
  func.func @transform_3(%arg0: i32, %arg1: i32) -> (i32, i32) {
    %c0_i32 = arith.constant 0 : i32
    %c0_i32_0 = arith.constant 0 : i32
    %c0_i32_1 = arith.constant 0 : i32
    return %c0_i32, %c0_i32_0 : i32, i32
  }
  func.func @transform_4(%arg0: i32, %arg1: i32) -> (i32, i32) {
    %c0_i32 = arith.constant 0 : i32
    %c0_i32_0 = arith.constant 0 : i32
    return %arg1, %c0_i32 : i32, i32
  }
}

module attributes {stable_mosaic.version = 11 : i64} {
  func.func @_conv_bn_lrelu_kernel(%arg0: i32, %arg1: i32, %arg2: memref<32x256xbf16, #tpu.memory_space<vmem>>, %arg3: memref<256x128xbf16, #tpu.memory_space<vmem>>, %arg4: memref<1x128xf32, #tpu.memory_space<vmem>>, %arg5: memref<1x128xf32, #tpu.memory_space<vmem>>, %arg6: memref<32x128xbf16, #tpu.memory_space<vmem>>, %arg7: memref<1x128xf32, #tpu.memory_space<vmem>>, %arg8: memref<1x128xf32, #tpu.memory_space<vmem>>) attributes {dimension_semantics = [#tpu.dimension_semantics<arbitrary>, #tpu.dimension_semantics<arbitrary>], iteration_bounds = array<i64: 2, 1>, scalar_prefetch = 0 : i64, scratch_operands = 2 : i64, tpu.core_type = #tpu.core_type<tc>, window_params = [{transform_indices = @transform_0, window_bounds = array<i64: 32, 256>}, {pipeline_mode = #tpu.pipeline_mode<synchronous>, transform_indices = @transform_1, window_bounds = array<i64: 256, 128>}, {pipeline_mode = #tpu.pipeline_mode<synchronous>, transform_indices = @transform_2, window_bounds = array<i64: 1, 128>}, {pipeline_mode = #tpu.pipeline_mode<synchronous>, transform_indices = @transform_3, window_bounds = array<i64: 1, 128>}, {transform_indices = @transform_4, window_bounds = array<i64: 32, 128>}]} {
    %c0 = arith.constant 0 : index
    %c0_0 = arith.constant 0 : index
    %0 = vector.load %arg2[%c0, %c0_0] : memref<32x256xbf16, #tpu.memory_space<vmem>>, vector<32x256xbf16>
    %c0_1 = arith.constant 0 : index
    %c0_2 = arith.constant 0 : index
    %1 = vector.load %arg3[%c0_1, %c0_2] : memref<256x128xbf16, #tpu.memory_space<vmem>>, vector<256x128xbf16>
    %cst = arith.constant dense<0.000000e+00> : vector<32x128xf32>
    %2 = tpu.matmul %0, %1, %cst {dimension_numbers = #tpu.dot_dimension_numbers<[1], [0], [0], [1], [0, 0, 1, 1], [], []>} : vector<32x256xbf16>, vector<256x128xbf16>, vector<32x128xf32> -> vector<32x128xf32>
    %c0_i32 = arith.constant 0 : i32
    %3 = arith.cmpi eq, %arg0, %c0_i32 : i32
    %c0_i32_3 = arith.constant 0 : i32
    %4 = arith.cmpi eq, %arg1, %c0_i32_3 : i32
    %5 = arith.andi %3, %4 : i1
    %6 = arith.extui %5 : i1 to i32
    %c0_i32_4 = arith.constant 0 : i32
    %7 = arith.cmpi ne, %6, %c0_i32_4 : i32
    scf.if %7 {
      %cst_8 = arith.constant 0.000000e+00 : f32
      %14 = vector.broadcast %cst_8 : f32 to vector<1x128xf32>
      %c0_9 = arith.constant 0 : index
      %c0_10 = arith.constant 0 : index
      %15 = vector.load %arg7[%c0_9, %c0_10] : memref<1x128xf32, #tpu.memory_space<vmem>>, vector<1x128xf32>
      tpu.vector_store %arg7[%c0_9, %c0_10], %14 {strides = array<i32>} : memref<1x128xf32, #tpu.memory_space<vmem>>, vector<1x128xf32>,
      %cst_11 = arith.constant 0.000000e+00 : f32
      %16 = vector.broadcast %cst_11 : f32 to vector<1x128xf32>
      %c0_12 = arith.constant 0 : index
      %c0_13 = arith.constant 0 : index
      %17 = vector.load %arg8[%c0_12, %c0_13] : memref<1x128xf32, #tpu.memory_space<vmem>>, vector<1x128xf32>
      tpu.vector_store %arg8[%c0_12, %c0_13], %16 {strides = array<i32>} : memref<1x128xf32, #tpu.memory_space<vmem>>, vector<1x128xf32>,
    } else {
    }
    %c0_i32_5 = arith.constant 0 : i32
    %8 = arith.cmpi eq, %arg0, %c0_i32_5 : i32
    %9 = arith.extui %8 : i1 to i32
    %c0_i32_6 = arith.constant 0 : i32
    %10 = arith.cmpi ne, %9, %c0_i32_6 : i32
    scf.if %10 {
      %c0_8 = arith.constant 0 : index
      %c0_9 = arith.constant 0 : index
      %14 = vector.load %arg7[%c0_8, %c0_9] : memref<1x128xf32, #tpu.memory_space<vmem>>, vector<1x128xf32>
      %cst_10 = arith.constant dense<0.000000e+00> : vector<128xf32>
      %15 = vector.multi_reduction <add>, %2, %cst_10 [0] : vector<32x128xf32> to vector<128xf32>
      %16 = vector.shape_cast %15 : vector<128xf32> to vector<1x128xf32>
      %17 = arith.addf %14, %16 : vector<1x128xf32>
      %c0_11 = arith.constant 0 : index
      %c0_12 = arith.constant 0 : index
      %18 = vector.load %arg7[%c0_11, %c0_12] : memref<1x128xf32, #tpu.memory_space<vmem>>, vector<1x128xf32>
      tpu.vector_store %arg7[%c0_11, %c0_12], %17 {strides = array<i32>} : memref<1x128xf32, #tpu.memory_space<vmem>>, vector<1x128xf32>,
      %c0_13 = arith.constant 0 : index
      %c0_14 = arith.constant 0 : index
      %19 = vector.load %arg8[%c0_13, %c0_14] : memref<1x128xf32, #tpu.memory_space<vmem>>, vector<1x128xf32>
      %20 = arith.mulf %2, %2 : vector<32x128xf32>
      %cst_15 = arith.constant dense<0.000000e+00> : vector<128xf32>
      %21 = vector.multi_reduction <add>, %20, %cst_15 [0] : vector<32x128xf32> to vector<128xf32>
      %22 = vector.shape_cast %21 : vector<128xf32> to vector<1x128xf32>
      %23 = arith.addf %19, %22 : vector<1x128xf32>
      %c0_16 = arith.constant 0 : index
      %c0_17 = arith.constant 0 : index
      %24 = vector.load %arg8[%c0_16, %c0_17] : memref<1x128xf32, #tpu.memory_space<vmem>>, vector<1x128xf32>
      tpu.vector_store %arg8[%c0_16, %c0_17], %23 {strides = array<i32>} : memref<1x128xf32, #tpu.memory_space<vmem>>, vector<1x128xf32>,
    } else {
    }
    %c1_i32 = arith.constant 1 : i32
    %11 = arith.cmpi eq, %arg0, %c1_i32 : i32
    %12 = arith.extui %11 : i1 to i32
    %c0_i32_7 = arith.constant 0 : i32
    %13 = arith.cmpi ne, %12, %c0_i32_7 : i32
    scf.if %13 {
      %c0_8 = arith.constant 0 : index
      %c0_9 = arith.constant 0 : index
      %14 = vector.load %arg7[%c0_8, %c0_9] : memref<1x128xf32, #tpu.memory_space<vmem>>, vector<1x128xf32>
      %cst_10 = arith.constant 3.125000e-02 : f32
      %15 = vector.broadcast %cst_10 : f32 to vector<1x128xf32>
      %16 = arith.mulf %14, %15 : vector<1x128xf32>
      %c0_11 = arith.constant 0 : index
      %c0_12 = arith.constant 0 : index
      %17 = vector.load %arg8[%c0_11, %c0_12] : memref<1x128xf32, #tpu.memory_space<vmem>>, vector<1x128xf32>
      %cst_13 = arith.constant 3.125000e-02 : f32
      %18 = vector.broadcast %cst_13 : f32 to vector<1x128xf32>
      %19 = arith.mulf %17, %18 : vector<1x128xf32>
      %20 = arith.mulf %16, %16 : vector<1x128xf32>
      %21 = arith.subf %19, %20 : vector<1x128xf32>
      %cst_14 = arith.constant 0.000000e+00 : f32
      %22 = vector.broadcast %cst_14 : f32 to vector<1x128xf32>
      %23 = arith.maximumf %21, %22 : vector<1x128xf32>
      %cst_15 = arith.constant 9.99999974E-6 : f32
      %24 = vector.broadcast %cst_15 : f32 to vector<1x128xf32>
      %25 = arith.addf %23, %24 : vector<1x128xf32>
      %26 = math.rsqrt %25 : vector<1x128xf32>
      %c0_16 = arith.constant 0 : index
      %c0_17 = arith.constant 0 : index
      %27 = vector.load %arg4[%c0_16, %c0_17] : memref<1x128xf32, #tpu.memory_space<vmem>>, vector<1x128xf32>
      %28 = arith.mulf %27, %26 : vector<1x128xf32>
      %c0_18 = arith.constant 0 : index
      %c0_19 = arith.constant 0 : index
      %29 = vector.load %arg5[%c0_18, %c0_19] : memref<1x128xf32, #tpu.memory_space<vmem>>, vector<1x128xf32>
      %30 = arith.mulf %16, %28 : vector<1x128xf32>
      %31 = arith.subf %29, %30 : vector<1x128xf32>
      %32 = vector.broadcast %28 : vector<1x128xf32> to vector<32x128xf32>
      %33 = arith.mulf %2, %32 : vector<32x128xf32>
      %34 = vector.broadcast %31 : vector<1x128xf32> to vector<32x128xf32>
      %35 = arith.addf %33, %34 : vector<32x128xf32>
      %cst_20 = arith.constant 0.000000e+00 : f32
      %36 = vector.broadcast %cst_20 : f32 to vector<32x128xf32>
      %37 = arith.cmpf ogt, %35, %36 : vector<32x128xf32>
      %cst_21 = arith.constant 2.000000e-01 : f32
      %38 = vector.broadcast %cst_21 : f32 to vector<32x128xf32>
      %39 = arith.mulf %38, %35 : vector<32x128xf32>
      %40 = arith.select %37, %35, %39 : vector<32x128xi1>, vector<32x128xf32>
      %41 = arith.truncf %40 : vector<32x128xf32> to vector<32x128xbf16>
      %c0_22 = arith.constant 0 : index
      %c0_23 = arith.constant 0 : index
      %42 = vector.load %arg6[%c0_22, %c0_23] : memref<32x128xbf16, #tpu.memory_space<vmem>>, vector<32x128xbf16>
      tpu.vector_store %arg6[%c0_22, %c0_23], %41 {strides = array<i32>} : memref<32x128xbf16, #tpu.memory_space<vmem>>, vector<32x128xbf16>,
    } else {
    }
    return
  }
  func.func @transform_0(%arg0: i32, %arg1: i32) -> (i32, i32) {
    %c0_i32 = arith.constant 0 : i32
    %c0_i32_0 = arith.constant 0 : i32
    return %arg1, %c0_i32 : i32, i32
  }
  func.func @transform_1(%arg0: i32, %arg1: i32) -> (i32, i32) {
    %c0_i32 = arith.constant 0 : i32
    %c0_i32_0 = arith.constant 0 : i32
    %c0_i32_1 = arith.constant 0 : i32
    return %c0_i32, %c0_i32_0 : i32, i32
  }
  func.func @transform_2(%arg0: i32, %arg1: i32) -> (i32, i32) {
    %c0_i32 = arith.constant 0 : i32
    %c0_i32_0 = arith.constant 0 : i32
    %c0_i32_1 = arith.constant 0 : i32
    return %c0_i32, %c0_i32_0 : i32, i32
  }
  func.func @transform_3(%arg0: i32, %arg1: i32) -> (i32, i32) {
    %c0_i32 = arith.constant 0 : i32
    %c0_i32_0 = arith.constant 0 : i32
    %c0_i32_1 = arith.constant 0 : i32
    return %c0_i32, %c0_i32_0 : i32, i32
  }
  func.func @transform_4(%arg0: i32, %arg1: i32) -> (i32, i32) {
    %c0_i32 = arith.constant 0 : i32
    %c0_i32_0 = arith.constant 0 : i32
    return %arg1, %c0_i32 : i32, i32
  }
}

module attributes {stable_mosaic.version = 11 : i64} {
  func.func @_linear_kernel(%arg0: i32, %arg1: memref<8x384xbf16, #tpu.memory_space<vmem>>, %arg2: memref<384x128xbf16, #tpu.memory_space<vmem>>, %arg3: memref<1x128xf32, #tpu.memory_space<vmem>>, %arg4: memref<8x128xf32, #tpu.memory_space<vmem>>, %arg5: memref<8x128xf32, #tpu.memory_space<vmem>>) attributes {dimension_semantics = [#tpu.dimension_semantics<arbitrary>], iteration_bounds = array<i64: 1>, scalar_prefetch = 0 : i64, scratch_operands = 1 : i64, tpu.core_type = #tpu.core_type<tc>, window_params = [{transform_indices = @transform_0, window_bounds = array<i64: 8, 384>}, {transform_indices = @transform_1, window_bounds = array<i64: 384, 128>}, {pipeline_mode = #tpu.pipeline_mode<synchronous>, transform_indices = @transform_2, window_bounds = array<i64: 1, 128>}, {pipeline_mode = #tpu.pipeline_mode<synchronous>, transform_indices = @transform_3, window_bounds = array<i64: 8, 128>}]} {
    %c0_i32 = arith.constant 0 : i32
    %0 = arith.cmpi eq, %arg0, %c0_i32 : i32
    %1 = arith.extui %0 : i1 to i32
    %c0_i32_0 = arith.constant 0 : i32
    %2 = arith.cmpi ne, %1, %c0_i32_0 : i32
    scf.if %2 {
      %cst_10 = arith.constant 0.000000e+00 : f32
      %12 = vector.broadcast %cst_10 : f32 to vector<8x128xf32>
      %c0_11 = arith.constant 0 : index
      %c0_12 = arith.constant 0 : index
      %13 = vector.load %arg5[%c0_11, %c0_12] : memref<8x128xf32, #tpu.memory_space<vmem>>, vector<8x128xf32>
      tpu.vector_store %arg5[%c0_11, %c0_12], %12 {strides = array<i32>} : memref<8x128xf32, #tpu.memory_space<vmem>>, vector<8x128xf32>,
    } else {
    }
    %c0 = arith.constant 0 : index
    %c0_1 = arith.constant 0 : index
    %3 = vector.load %arg5[%c0, %c0_1] : memref<8x128xf32, #tpu.memory_space<vmem>>, vector<8x128xf32>
    %c0_2 = arith.constant 0 : index
    %c0_3 = arith.constant 0 : index
    %4 = vector.load %arg1[%c0_2, %c0_3] : memref<8x384xbf16, #tpu.memory_space<vmem>>, vector<8x384xbf16>
    %c0_4 = arith.constant 0 : index
    %c0_5 = arith.constant 0 : index
    %5 = vector.load %arg2[%c0_4, %c0_5] : memref<384x128xbf16, #tpu.memory_space<vmem>>, vector<384x128xbf16>
    %cst = arith.constant dense<0.000000e+00> : vector<8x128xf32>
    %6 = tpu.matmul %4, %5, %cst {dimension_numbers = #tpu.dot_dimension_numbers<[1], [0], [0], [1], [0, 0, 1, 1], [], []>} : vector<8x384xbf16>, vector<384x128xbf16>, vector<8x128xf32> -> vector<8x128xf32>
    %7 = arith.addf %3, %6 : vector<8x128xf32>
    %c0_6 = arith.constant 0 : index
    %c0_7 = arith.constant 0 : index
    %8 = vector.load %arg5[%c0_6, %c0_7] : memref<8x128xf32, #tpu.memory_space<vmem>>, vector<8x128xf32>
    tpu.vector_store %arg5[%c0_6, %c0_7], %7 {strides = array<i32>} : memref<8x128xf32, #tpu.memory_space<vmem>>, vector<8x128xf32>,
    %c0_i32_8 = arith.constant 0 : i32
    %9 = arith.cmpi eq, %arg0, %c0_i32_8 : i32
    %10 = arith.extui %9 : i1 to i32
    %c0_i32_9 = arith.constant 0 : i32
    %11 = arith.cmpi ne, %10, %c0_i32_9 : i32
    scf.if %11 {
      %c0_10 = arith.constant 0 : index
      %c0_11 = arith.constant 0 : index
      %12 = vector.load %arg5[%c0_10, %c0_11] : memref<8x128xf32, #tpu.memory_space<vmem>>, vector<8x128xf32>
      %c0_12 = arith.constant 0 : index
      %c0_13 = arith.constant 0 : index
      %13 = vector.load %arg3[%c0_12, %c0_13] : memref<1x128xf32, #tpu.memory_space<vmem>>, vector<1x128xf32>
      %14 = vector.broadcast %13 : vector<1x128xf32> to vector<8x128xf32>
      %15 = arith.addf %12, %14 : vector<8x128xf32>
      %c0_14 = arith.constant 0 : index
      %c0_15 = arith.constant 0 : index
      %16 = vector.load %arg4[%c0_14, %c0_15] : memref<8x128xf32, #tpu.memory_space<vmem>>, vector<8x128xf32>
      tpu.vector_store %arg4[%c0_14, %c0_15], %15 {strides = array<i32>} : memref<8x128xf32, #tpu.memory_space<vmem>>, vector<8x128xf32>,
    } else {
    }
    return
  }
  func.func @transform_0(%arg0: i32) -> (i32, i32) {
    %c0_i32 = arith.constant 0 : i32
    %c0_i32_0 = arith.constant 0 : i32
    return %c0_i32, %arg0 : i32, i32
  }
  func.func @transform_1(%arg0: i32) -> (i32, i32) {
    %c0_i32 = arith.constant 0 : i32
    %c0_i32_0 = arith.constant 0 : i32
    return %arg0, %c0_i32 : i32, i32
  }
  func.func @transform_2(%arg0: i32) -> (i32, i32) {
    %c0_i32 = arith.constant 0 : i32
    %c0_i32_0 = arith.constant 0 : i32
    %c0_i32_1 = arith.constant 0 : i32
    return %c0_i32, %c0_i32_0 : i32, i32
  }
  func.func @transform_3(%arg0: i32) -> (i32, i32) {
    %c0_i32 = arith.constant 0 : i32
    %c0_i32_0 = arith.constant 0 : i32
    %c0_i32_1 = arith.constant 0 : i32
    return %c0_i32, %c0_i32_0 : i32, i32
  }
}

</mosaic_0001>

<llo_original>
// kernel: _lambda_.8
$region0: #{_lambda_.8}
  #allocation0 [shape = 'u32[]', space=smem, size = 0x4, offset = 0x4, fixed_abs, tag = 'smem constant byte address 0x4 - core index']
  #allocation1 [shape = 'u32[144,128]{1,0:T(1,128)}', space=vmem, size = 0x12000, scoped, tag = 'internal scratch']
  #allocation2 [shape = 'f32[1,128]{1,0:T(1,128)}', space=vmem, size = 0x200, scoped, tag = 'scratch operand']
  #allocation3 [shape = 'f32[1,128]{1,0:T(1,128)}', space=vmem, size = 0x200, scoped, tag = 'scratch operand']
  %s0 = inlined_call_operand.vmem [shape: bf16[512,128], index: 0, kind: input, shape index: {}]
  %s1 = inlined_call_operand.vmem [shape: bf16[128,128], index: 1, kind: input, shape index: {}]
  %s2 = inlined_call_operand.vmem [shape: f32[1,128], index: 2, kind: input, shape index: {}]
  %s3 = inlined_call_operand.vmem [shape: f32[1,128], index: 3, kind: input, shape index: {}]
  %s4 = inlined_call_operand.vmem [shape: bf16[512,128], index: 4, kind: output, shape index: {}]
  %s5 = sld [smem:[#allocation0]]
  $region61: #{_lambda_.8} parent=0
    _
  %s7 = ssub.s32 1, %s5
  %s8 = scalar_select 0, %s7, %s5
  loop: start=0, step=1, limit=4
  $region2: #{_lambda_.8} parent=0 // loop_pre_header
    _
  $region3: #{_lambda_.8} parent=0 // loop_header
    %s10 = sphi 0, %s14
    %p11 = scmp.ge.s32.totalorder %s10, 4
    %s17 = sphi 0, %s29
    %s18 = sphi 0, %s25
    %s19 = sphi 0, %s17
    %s20 = sphi 0, %s18
    %s21 = sphi 0, %s19
    %s22 = sphi 0, %s20
    %s32 = sphi 0, %s34
    %s35 = sphi 0, %s32
    %s36 = sphi 0, %s35
    %s52 = sphi 0, %s36
    %s56 = sphi 0, %s56
    %s58 = sphi 0, %s56
    %s59 = sphi 0, %s58
    %s73 = sphi 0, %s59
    %s77 = sphi 0, %s77
    %s79 = sphi 0, %s77
    %s80 = sphi 0, %s79
    %s94 = sphi 0, %s80
    %s98 = sphi 0, %s98
    %s100 = sphi 0, %s98
    %s101 = sphi 0, %s100
    %s115 = sphi 0, %s101
    %s121 = sphi 0, %s123
    %s124 = sphi 0, %s121
    %s125 = sphi 0, %s124
    %s141 = sphi 0, %s125
  $region4: #{_lambda_.8} parent=0 // loop_header_branch
    %13 = sbr.rel (%p11) target = $region8
  $region5: #{_lambda_.8} parent=0 // loop_body
    %s15 = ssub.s32 %s10, 1
    %s16 = ssub.s32 %s10, 2
    %s23 = sadd.s32 1, %s18
    %p24 = scmp.ge.s32.totalorder %s23, 1
    %s25 = scalar_select %p24, 0, %s23
    %s26 = sadd.s32 1, %s17
    %s27 = scalar_select %p24, %s26, %s17
    %p28 = scmp.ge.s32.totalorder %s27, 2
    %s29 = scalar_select %p28, 0, %s27
    %s30 = ssub.s32 %s18, %s25
    %p31 = scmp.eq.s32.totalorder %s30, 0
    %s33 = sadd.s32 %s32, 1
    %s34 = scalar_select %p31, %s32, %s33
    %p37 = pneg %p31
    %p38 = scmp.eq.s32.totalorder %s10, 1
    %p39 = por %p37, %p38
    %p40 = scmp.ne.s32.totalorder %s32, %s35
    %p41 = scmp.eq.s32.totalorder %s10, 0
    %p42 = por %p40, %p41
    %p43 = scmp.ne.s32.totalorder %s32, %s35
    %p44 = scmp.eq.s32.totalorder %s15, 1
    %p45 = por %p43, %p44
    %p46 = scmp.ne.s32.totalorder %s35, %s36
    %p47 = scmp.eq.s32.totalorder %s15, 0
    %p48 = por %p46, %p47
    %p49 = scmp.ne.s32.totalorder %s35, %s36
    %p50 = scmp.eq.s32.totalorder %s16, 1
    %p51 = por %p49, %p50
    %p53 = scmp.ne.s32.totalorder %s36, %s52
    %p54 = scmp.eq.s32.totalorder %s16, 0
    %p55 = por %p53, %p54
    %s57 = sadd.s32 %s56, 1
    %p60 = scmp.eq.s32.totalorder %s10, 1
    %p61 = scmp.ne.s32.totalorder %s56, %s58
    %p62 = scmp.eq.s32.totalorder %s10, 0
    %p63 = por %p61, %p62
    %p64 = scmp.ne.s32.totalorder %s56, %s58
    %p65 = scmp.eq.s32.totalorder %s15, 1
    %p66 = por %p64, %p65
    %p67 = scmp.ne.s32.totalorder %s58, %s59
    %p68 = scmp.eq.s32.totalorder %s15, 0
    %p69 = por %p67, %p68
    %p70 = scmp.ne.s32.totalorder %s58, %s59
    %p71 = scmp.eq.s32.totalorder %s16, 1
    %p72 = por %p70, %p71
    %p74 = scmp.ne.s32.totalorder %s59, %s73
    %p75 = scmp.eq.s32.totalorder %s16, 0
    %p76 = por %p74, %p75
    %s78 = sadd.s32 %s77, 1
    %p81 = scmp.eq.s32.totalorder %s10, 1
    %p82 = scmp.ne.s32.totalorder %s77, %s79
    %p83 = scmp.eq.s32.totalorder %s10, 0
    %p84 = por %p82, %p83
    %p85 = scmp.ne.s32.totalorder %s77, %s79
    %p86 = scmp.eq.s32.totalorder %s15, 1
    %p87 = por %p85, %p86
    %p88 = scmp.ne.s32.totalorder %s79, %s80
    %p89 = scmp.eq.s32.totalorder %s15, 0
    %p90 = por %p88, %p89
    %p91 = scmp.ne.s32.totalorder %s79, %s80
    %p92 = scmp.eq.s32.totalorder %s16, 1
    %p93 = por %p91, %p92
    %p95 = scmp.ne.s32.totalorder %s80, %s94
    %p96 = scmp.eq.s32.totalorder %s16, 0
    %p97 = por %p95, %p96
    %s99 = sadd.s32 %s98, 1
    %p102 = scmp.eq.s32.totalorder %s10, 1
    %p103 = scmp.ne.s32.totalorder %s98, %s100
    %p104 = scmp.eq.s32.totalorder %s10, 0
    %p105 = por %p103, %p104
    %p106 = scmp.ne.s32.totalorder %s98, %s100
    %p107 = scmp.eq.s32.totalorder %s15, 1
    %p108 = por %p106, %p107
    %p109 = scmp.ne.s32.totalorder %s100, %s101
    %p110 = scmp.eq.s32.totalorder %s15, 0
    %p111 = por %p109, %p110
    %p112 = scmp.ne.s32.totalorder %s100, %s101
    %p113 = scmp.eq.s32.totalorder %s16, 1
    %p114 = por %p112, %p113
    %p116 = scmp.ne.s32.totalorder %s101, %s115
    %p117 = scmp.eq.s32.totalorder %s16, 0
    %p118 = por %p116, %p117
    %s119 = ssub.s32 %s18, %s25
    %p120 = scmp.eq.s32.totalorder %s119, 0
    %s122 = sadd.s32 %s121, 1
    %s123 = scalar_select %p120, %s121, %s122
    %p126 = pneg %p120
    %p127 = scmp.eq.s32.totalorder %s10, 1
    %p128 = por %p126, %p127
    %p129 = scmp.ne.s32.totalorder %s121, %s124
    %p130 = scmp.eq.s32.totalorder %s10, 0
    %p131 = por %p129, %p130
    %p132 = scmp.ne.s32.totalorder %s121, %s124
    %p133 = scmp.eq.s32.totalorder %s15, 1
    %p134 = por %p132, %p133
    %p135 = scmp.ne.s32.totalorder %s124, %s125
    %p136 = scmp.eq.s32.totalorder %s15, 0
    %p137 = por %p135, %p136
    %p138 = scmp.ne.s32.totalorder %s124, %s125
    %p139 = scmp.eq.s32.totalorder %s16, 1
    %p140 = por %p138, %p139
    %p142 = scmp.ne.s32.totalorder %s125, %s141
    %p143 = scmp.eq.s32.totalorder %s16, 0
    %p144 = por %p142, %p143
    %p145 = scmp.le.s32.totalorder 1, %s10
    %p146 = scmp.lt.s32.totalorder %s10, 3
    %p147 = pnand %p145, %p146
    %p148 = pneg %p147
    // Predicated region
    $region9: #{_lambda_.8} parent=5 // pred_check
      _
    $region10: #{_lambda_.8} parent=5 // pred_check_branch
      %150 = sbr.rel (%p147) target = $region12
    $region11: #{_lambda_.8} parent=5 // pred_region
      %s151 = ssub.s32 %s10, 1
      // Predicated region
      $region13: #{_lambda_.8} parent=11 // pred_check
        %p152 = pneg %p48
      $region14: #{_lambda_.8} parent=11 // pred_check_branch
        %154 = sbr.rel (%p152) target = $region16
      $region15: #{_lambda_.8} parent=11 // pred_region
        %s155 = smul.u32 64, %s20
        %p156 = scmp.lt.s32.totalorder %s155, 63
        %s157 = scalar_select %p156, %s155, 63
        %s158 = smul.addr %s157, 4
        %s159 = scalar_lea.vmem %s0, %s158
        %s160 = smul.u32 64, %s20
      $region16: #{_lambda_.8} parent=11 // pred_fallthru
        _
      // Predicated region
      $region17: #{_lambda_.8} parent=11 // pred_check
        %p161 = pneg %p69
      $region18: #{_lambda_.8} parent=11 // pred_check_branch
        %163 = sbr.rel (%p161) target = $region20
      $region19: #{_lambda_.8} parent=11 // pred_region
        _
      $region20: #{_lambda_.8} parent=11 // pred_fallthru
        _
      // Predicated region
      $region21: #{_lambda_.8} parent=11 // pred_check
        %p164 = pneg %p90
      $region22: #{_lambda_.8} parent=11 // pred_check_branch
        %166 = sbr.rel (%p164) target = $region24
      $region23: #{_lambda_.8} parent=11 // pred_region
        _
      $region24: #{_lambda_.8} parent=11 // pred_fallthru
        _
      // Predicated region
      $region25: #{_lambda_.8} parent=11 // pred_check
        %p167 = pneg %p111
      $region26: #{_lambda_.8} parent=11 // pred_check_branch
        %169 = sbr.rel (%p167) target = $region28
      $region27: #{_lambda_.8} parent=11 // pred_region
        _
      $region28: #{_lambda_.8} parent=11 // pred_fallthru
        _
    $region12: #{_lambda_.8} parent=5 // pred_fallthru
      _
    %p170 = scmp.lt.s32.totalorder %s10, 2
    // Predicated region
    $region29: #{_lambda_.8} parent=5 // pred_check
      %p171 = pneg %p170
    $region30: #{_lambda_.8} parent=5 // pred_check_branch
      %173 = sbr.rel (%p171) target = $region32
    $region31: #{_lambda_.8} parent=5 // pred_region
      _
    $region32: #{_lambda_.8} parent=5 // pred_fallthru
      _
    %p174 = scmp.le.s32.totalorder 1, %s10
    %p175 = scmp.lt.s32.totalorder %s10, 3
    %p176 = pnand %p174, %p175
    %p177 = pneg %p176
    // Predicated region
    $region33: #{_lambda_.8} parent=5 // pred_check
      _
    $region34: #{_lambda_.8} parent=5 // pred_check_branch
      %179 = sbr.rel (%p176) target = $region36
    $region35: #{_lambda_.8} parent=5 // pred_region
      %s180 = ssub.s32 %s10, 1
      %s181 = smul.u32 64, %s20
      %p182 = scmp.lt.s32.totalorder %s181, 63
      %s183 = scalar_select %p182, %s181, 63
      %s184 = smul.addr %s183, 4
      %s185 = scalar_lea.vmem %s0, %s184
      %p186 = pneg %p48
      %p187 = pneg %p45
      %p188 = pneg %p69
      %p189 = pneg %p66
      %p190 = pneg %p90
      %p191 = pneg %p87
      %p192 = pneg %p111
      %p193 = pneg %p108
      %p194 = pneg %p137
      %p195 = pneg %p134
      %s196 = smul.u32 64, %s20
      %p197 = scmp.lt.s32.totalorder %s196, 63
      %s198 = scalar_select %p197, %s196, 63
      %s199 = smul.addr %s198, 4
      %s200 = scalar_lea.vmem %s4, %s199
      %s201 = smul.u32 64, %s20
      %p202 = scmp.lt.s32.totalorder %s201, 63
      %s203 = scalar_select %p202, %s201, 63
      %s204 = smul.addr %s203, 4
      %s205 = scalar_lea.vmem %s0, %s204
      %s206 = smul.u32 64, %s20
      %s207 = smul.u32 64, %s20
      %p208 = scmp.lt.s32.totalorder %s207, 63
      %s209 = scalar_select %p208, %s207, 63
      %s210 = smul.addr %s209, 4
      %s211 = scalar_lea.vmem %s4, %s210
      %s212 = smul.u32 64, %s20
      %v214 = vld [vmem:[%s205] sm:$0xf]
      %v215 = vld [vmem:[%s205 + $0x4] sm:$0xf]
      %v216 = vld [vmem:[%s205 + $0x8] sm:$0xf]
      %v217 = vld [vmem:[%s205 + $0xc] sm:$0xf]
      %v218 = vld [vmem:[%s205 + $0x10] sm:$0xf]
      %v219 = vld [vmem:[%s205 + $0x14] sm:$0xf]
      %v220 = vld [vmem:[%s205 + $0x18] sm:$0xf]
      %v221 = vld [vmem:[%s205 + $0x1c] sm:$0xf]
      %v222 = vld [vmem:[%s205 + $0x20] sm:$0xf]
      %v223 = vld [vmem:[%s205 + $0x24] sm:$0xf]
      %v224 = vld [vmem:[%s205 + $0x28] sm:$0xf]
      %v225 = vld [vmem:[%s205 + $0x2c] sm:$0xf]
      %v226 = vld [vmem:[%s205 + $0x30] sm:$0xf]
      %v227 = vld [vmem:[%s205 + $0x34] sm:$0xf]
      %v228 = vld [vmem:[%s205 + $0x38] sm:$0xf]
      %v229 = vld [vmem:[%s205 + $0x3c] sm:$0xf]
      %v230 = vld [vmem:[%s205 + $0x40] sm:$0xf]
      %v231 = vld [vmem:[%s205 + $0x44] sm:$0xf]
      %v232 = vld [vmem:[%s205 + $0x48] sm:$0xf]
      %v233 = vld [vmem:[%s205 + $0x4c] sm:$0xf]
      %v234 = vld [vmem:[%s205 + $0x50] sm:$0xf]
      %v235 = vld [vmem:[%s205 + $0x54] sm:$0xf]
      %v236 = vld [vmem:[%s205 + $0x58] sm:$0xf]
      %v237 = vld [vmem:[%s205 + $0x5c] sm:$0xf]
      %v238 = vld [vmem:[%s205 + $0x60] sm:$0xf]
      %v239 = vld [vmem:[%s205 + $0x64] sm:$0xf]
      %v240 = vld [vmem:[%s205 + $0x68] sm:$0xf]
      %v241 = vld [vmem:[%s205 + $0x6c] sm:$0xf]
      %v242 = vld [vmem:[%s205 + $0x70] sm:$0xf]
      %v243 = vld [vmem:[%s205 + $0x74] sm:$0xf]
      %v244 = vld [vmem:[%s205 + $0x78] sm:$0xf]
      %v245 = vld [vmem:[%s205 + $0x7c] sm:$0xf]
      %v246 = vld [vmem:[%s205 + $0x80] sm:$0xf]
      %v247 = vld [vmem:[%s205 + $0x84] sm:$0xf]
      %v248 = vld [vmem:[%s205 + $0x88] sm:$0xf]
      %v249 = vld [vmem:[%s205 + $0x8c] sm:$0xf]
      %v250 = vld [vmem:[%s205 + $0x90] sm:$0xf]
      %v251 = vld [vmem:[%s205 + $0x94] sm:$0xf]
      %v252 = vld [vmem:[%s205 + $0x98] sm:$0xf]
      %v253 = vld [vmem:[%s205 + $0x9c] sm:$0xf]
      %v254 = vld [vmem:[%s205 + $0xa0] sm:$0xf]
      %v255 = vld [vmem:[%s205 + $0xa4] sm:$0xf]
      %v256 = vld [vmem:[%s205 + $0xa8] sm:$0xf]
      %v257 = vld [vmem:[%s205 + $0xac] sm:$0xf]
      %v258 = vld [vmem:[%s205 + $0xb0] sm:$0xf]
      %v259 = vld [vmem:[%s205 + $0xb4] sm:$0xf]
      %v260 = vld [vmem:[%s205 + $0xb8] sm:$0xf]
      %v261 = vld [vmem:[%s205 + $0xbc] sm:$0xf]
      %v262 = vld [vmem:[%s205 + $0xc0] sm:$0xf]
      %v263 = vld [vmem:[%s205 + $0xc4] sm:$0xf]
      %v264 = vld [vmem:[%s205 + $0xc8] sm:$0xf]
      %v265 = vld [vmem:[%s205 + $0xcc] sm:$0xf]
      %v266 = vld [vmem:[%s205 + $0xd0] sm:$0xf]
      %v267 = vld [vmem:[%s205 + $0xd4] sm:$0xf]
      %v268 = vld [vmem:[%s205 + $0xd8] sm:$0xf]
      %v269 = vld [vmem:[%s205 + $0xdc] sm:$0xf]
      %v270 = vld [vmem:[%s205 + $0xe0] sm:$0xf]
      %v271 = vld [vmem:[%s205 + $0xe4] sm:$0xf]
      %v272 = vld [vmem:[%s205 + $0xe8] sm:$0xf]
      %v273 = vld [vmem:[%s205 + $0xec] sm:$0xf]
      %v274 = vld [vmem:[%s205 + $0xf0] sm:$0xf]
      %v275 = vld [vmem:[%s205 + $0xf4] sm:$0xf]
      %v276 = vld [vmem:[%s205 + $0xf8] sm:$0xf]
      %v277 = vld [vmem:[%s205 + $0xfc] sm:$0xf]
      %v278 = vld [vmem:[%s1] sm:$0xf]
      %v279 = vld [vmem:[%s1 + $0x4] sm:$0xf]
      %v280 = vld [vmem:[%s1 + $0x8] sm:$0xf]
      %v281 = vld [vmem:[%s1 + $0xc] sm:$0xf]
      %v282 = vld [vmem:[%s1 + $0x10] sm:$0xf]
      %v283 = vld [vmem:[%s1 + $0x14] sm:$0xf]
      %v284 = vld [vmem:[%s1 + $0x18] sm:$0xf]
      %v285 = vld [vmem:[%s1 + $0x1c] sm:$0xf]
      %v286 = vld [vmem:[%s1 + $0x20] sm:$0xf]
      %v287 = vld [vmem:[%s1 + $0x24] sm:$0xf]
      %v288 = vld [vmem:[%s1 + $0x28] sm:$0xf]
      %v289 = vld [vmem:[%s1 + $0x2c] sm:$0xf]
      %v290 = vld [vmem:[%s1 + $0x30] sm:$0xf]
      %v291 = vld [vmem:[%s1 + $0x34] sm:$0xf]
      %v292 = vld [vmem:[%s1 + $0x38] sm:$0xf]
      %v293 = vld [vmem:[%s1 + $0x3c] sm:$0xf]
      %v358 = vunpack.c.l.b16 %v214
      %v359 = vunpack.c.l.b16 %v215
      %v360 = vunpack.c.l.b16 %v216
      %v361 = vunpack.c.l.b16 %v217
      %v362 = vunpack.c.l.b16 %v218
      %v363 = vunpack.c.l.b16 %v219
      %v364 = vunpack.c.l.b16 %v220
      %v365 = vunpack.c.l.b16 %v221
      %v366 = vunpack.c.l.b16 %v222
      %v367 = vunpack.c.l.b16 %v223
      %v368 = vunpack.c.l.b16 %v224
      %v369 = vunpack.c.l.b16 %v225
      %v370 = vunpack.c.l.b16 %v226
      %v371 = vunpack.c.l.b16 %v227
      %v372 = vunpack.c.l.b16 %v228
      %v373 = vunpack.c.l.b16 %v229
      %v374 = vunpack.c.l.b16 %v230
      %v375 = vunpack.c.l.b16 %v231
      %v376 = vunpack.c.l.b16 %v232
      %v377 = vunpack.c.l.b16 %v233
      %v378 = vunpack.c.l.b16 %v234
      %v379 = vunpack.c.l.b16 %v235
      %v380 = vunpack.c.l.b16 %v236
      %v381 = vunpack.c.l.b16 %v237
      %v382 = vunpack.c.l.b16 %v238
      %v383 = vunpack.c.l.b16 %v239
      %v384 = vunpack.c.l.b16 %v240
      %v385 = vunpack.c.l.b16 %v241
      %v386 = vunpack.c.l.b16 %v242
      %v387 = vunpack.c.l.b16 %v243
      %v388 = vunpack.c.l.b16 %v244
      %v389 = vunpack.c.l.b16 %v245
      %v390 = vunpack.c.l.b16 %v246
      %v391 = vunpack.c.l.b16 %v247
      %v392 = vunpack.c.l.b16 %v248
      %v393 = vunpack.c.l.b16 %v249
      %v394 = vunpack.c.l.b16 %v250
      %v395 = vunpack.c.l.b16 %v251
      %v396 = vunpack.c.l.b16 %v252
      %v397 = vunpack.c.l.b16 %v253
      %v398 = vunpack.c.l.b16 %v254
      %v399 = vunpack.c.l.b16 %v255
      %v400 = vunpack.c.l.b16 %v256
      %v401 = vunpack.c.l.b16 %v257
      %v402 = vunpack.c.l.b16 %v258
      %v403 = vunpack.c.l.b16 %v259
      %v404 = vunpack.c.l.b16 %v260
      %v405 = vunpack.c.l.b16 %v261
      %v406 = vunpack.c.l.b16 %v262
      %v407 = vunpack.c.l.b16 %v263
      %v408 = vunpack.c.l.b16 %v264
      %v409 = vunpack.c.l.b16 %v265
      %v410 = vunpack.c.l.b16 %v266
      %v411 = vunpack.c.l.b16 %v267
      %v412 = vunpack.c.l.b16 %v268
      %v413 = vunpack.c.l.b16 %v269
      %v414 = vunpack.c.l.b16 %v270
      %v415 = vunpack.c.l.b16 %v271
      %v416 = vunpack.c.l.b16 %v272
      %v417 = vunpack.c.l.b16 %v273
      %v418 = vunpack.c.l.b16 %v274
      %v419 = vunpack.c.l.b16 %v275
      %v420 = vunpack.c.l.b16 %v276
      %v421 = vunpack.c.l.b16 %v277
      %v422 = vpack.c.b16 %v359, %v358
      %v423 = vpack.c.b16 %v361, %v360
      %v424 = vpack.c.b16 %v363, %v362
      %v425 = vpack.c.b16 %v365, %v364
      %v426 = vpack.c.b16 %v367, %v366
      %v427 = vpack.c.b16 %v369, %v368
      %v428 = vpack.c.b16 %v371, %v370
      %v429 = vpack.c.b16 %v373, %v372
      %v430 = vpack.c.b16 %v375, %v374
      %v431 = vpack.c.b16 %v377, %v376
      %v432 = vpack.c.b16 %v379, %v378
      %v433 = vpack.c.b16 %v381, %v380
      %v434 = vpack.c.b16 %v383, %v382
      %v435 = vpack.c.b16 %v385, %v384
      %v436 = vpack.c.b16 %v387, %v386
      %v437 = vpack.c.b16 %v389, %v388
      %v438 = vpack.c.b16 %v391, %v390
      %v439 = vpack.c.b16 %v393, %v392
      %v440 = vpack.c.b16 %v395, %v394
      %v441 = vpack.c.b16 %v397, %v396
      %v442 = vpack.c.b16 %v399, %v398
      %v443 = vpack.c.b16 %v401, %v400
      %v444 = vpack.c.b16 %v403, %v402
      %v445 = vpack.c.b16 %v405, %v404
      %v446 = vpack.c.b16 %v407, %v406
      %v447 = vpack.c.b16 %v409, %v408
      %v448 = vpack.c.b16 %v411, %v410
      %v449 = vpack.c.b16 %v413, %v412
      %v450 = vpack.c.b16 %v415, %v414
      %v451 = vpack.c.b16 %v417, %v416
      %v452 = vpack.c.b16 %v419, %v418
      %v453 = vpack.c.b16 %v421, %v420
      %v502 = vunpack.c.l.b16 %v278
      %v503 = vunpack.c.l.b16 %v279
      %v504 = vunpack.c.l.b16 %v280
      %v505 = vunpack.c.l.b16 %v281
      %v506 = vunpack.c.l.b16 %v282
      %v507 = vunpack.c.l.b16 %v283
      %v508 = vunpack.c.l.b16 %v284
      %v509 = vunpack.c.l.b16 %v285
      %v510 = vunpack.c.l.b16 %v286
      %v511 = vunpack.c.l.b16 %v287
      %v512 = vunpack.c.l.b16 %v288
      %v513 = vunpack.c.l.b16 %v289
      %v514 = vunpack.c.l.b16 %v290
      %v515 = vunpack.c.l.b16 %v291
      %v516 = vunpack.c.l.b16 %v292
      %v517 = vunpack.c.l.b16 %v293
      %v518 = vpack.c.b16 %v503, %v502
      %v519 = vpack.c.b16 %v505, %v504
      %v520 = vpack.c.b16 %v507, %v506
      %v521 = vpack.c.b16 %v509, %v508
      %v522 = vpack.c.b16 %v511, %v510
      %v523 = vpack.c.b16 %v513, %v512
      %v524 = vpack.c.b16 %v515, %v514
      %v525 = vpack.c.b16 %v517, %v516
      %534 = vmatprep.subr.bf16.mxu0 0
      %535 = vmatpush1.bf16.msra.mxu0 %v525
      %536 = vmatprep.subr.bf16.mxu0 0
      %537 = vmatpush1.bf16.msra.mxu0 %v524
      %538 = vmatprep.subr.bf16.mxu0 0
      %539 = vmatpush1.bf16.msra.mxu0 %v523
      %540 = vmatprep.subr.bf16.mxu0 0
      %541 = vmatpush1.bf16.msra.mxu0 %v522
      %542 = vmatprep.subr.bf16.mxu0 0
      %543 = vmatpush1.bf16.msra.mxu0 %v521
      %544 = vmatprep.subr.bf16.mxu0 0
      %545 = vmatpush1.bf16.msra.mxu0 %v520
      %546 = vmatprep.subr.bf16.mxu0 0
      %547 = vmatpush1.bf16.msra.mxu0 %v519
      %548 = vmatprep.subr.bf16.mxu0 0
      %549 = vmatpush1.bf16.msra.mxu0 %v518
      %550 = vmatprep.subr.bf16.mxu0 0
      %551 = vmatpush2.bf16.msra.mxu0 0
      %552 = vmatprep.subr.bf16.mxu0 0
      %553 = vmatpush2.bf16.msra.mxu0 0
      %554 = vmatprep.subr.bf16.mxu0 0
      %555 = vmatpush2.bf16.msra.mxu0 0
      %556 = vmatprep.subr.bf16.mxu0 0
      %557 = vmatpush2.bf16.msra.mxu0 0
      %558 = vmatprep.subr.bf16.mxu0 0
      %559 = vmatpush2.bf16.msra.mxu0 0
      %560 = vmatprep.subr.bf16.mxu0 0
      %561 = vmatpush2.bf16.msra.mxu0 0
      %562 = vmatprep.subr.bf16.mxu0 0
      %563 = vmatpush2.bf16.msra.mxu0 0
      %564 = vmatprep.subr.bf16.mxu0 0
      %565 = vmatpush2.bf16.msra.mxu0 0
      %566 = vmatprep.mubr.bf16.mxu0 0
      %567 = vmatmul.mubr.bf16.gmra.mxu0 %v422
      %v568 = vpop.f32.mrf.mxu0
      %v569 = vadd.f32 0.0, %v568
      %v570 = vpop.f32.mrf.mxu0
      %v571 = vpop.f32.mrf.mxu0
      %v572 = vadd.f32 0.0, %v571
      %v573 = vpop.f32.mrf.mxu0
      %574 = vmatprep.mubr.bf16.mxu0 0
      %575 = vmatmul.mubr.bf16.gmra.mxu0 %v423
      %v576 = vpop.f32.mrf.mxu0
      %v577 = vadd.f32 0.0, %v576
      %v578 = vpop.f32.mrf.mxu0
      %v579 = vpop.f32.mrf.mxu0
      %v580 = vadd.f32 0.0, %v579
      %v581 = vpop.f32.mrf.mxu0
      %582 = vmatprep.mubr.bf16.mxu0 0
      %583 = vmatmul.mubr.bf16.gmra.mxu0 %v424
      %v584 = vpop.f32.mrf.mxu0
      %v585 = vadd.f32 0.0, %v584
      %v586 = vpop.f32.mrf.mxu0
      %v587 = vpop.f32.mrf.mxu0
      %v588 = vadd.f32 0.0, %v587
      %v589 = vpop.f32.mrf.mxu0
      %590 = vmatprep.mubr.bf16.mxu0 0
      %591 = vmatmul.mubr.bf16.gmra.mxu0 %v425
      %v592 = vpop.f32.mrf.mxu0
      %v593 = vadd.f32 0.0, %v592
      %v594 = vpop.f32.mrf.mxu0
      %v595 = vpop.f32.mrf.mxu0
      %v596 = vadd.f32 0.0, %v595
      %v597 = vpop.f32.mrf.mxu0
      %598 = vmatprep.mubr.bf16.mxu0 0
      %599 = vmatmul.mubr.bf16.gmra.mxu0 %v426
      %v600 = vpop.f32.mrf.mxu0
      %v601 = vadd.f32 0.0, %v600
      %v602 = vpop.f32.mrf.mxu0
      %v603 = vpop.f32.mrf.mxu0
      %v604 = vadd.f32 0.0, %v603
      %v605 = vpop.f32.mrf.mxu0
      %606 = vmatprep.mubr.bf16.mxu0 0
      %607 = vmatmul.mubr.bf16.gmra.mxu0 %v427
      %v608 = vpop.f32.mrf.mxu0
      %v609 = vadd.f32 0.0, %v608
      %v610 = vpop.f32.mrf.mxu0
      %v611 = vpop.f32.mrf.mxu0
      %v612 = vadd.f32 0.0, %v611
      %v613 = vpop.f32.mrf.mxu0
      %614 = vmatprep.mubr.bf16.mxu0 0
      %615 = vmatmul.mubr.bf16.gmra.mxu0 %v428
      %v616 = vpop.f32.mrf.mxu0
      %v617 = vadd.f32 0.0, %v616
      %v618 = vpop.f32.mrf.mxu0
      %v619 = vpop.f32.mrf.mxu0
      %v620 = vadd.f32 0.0, %v619
      %v621 = vpop.f32.mrf.mxu0
      %622 = vmatprep.mubr.bf16.mxu0 0
      %623 = vmatmul.mubr.bf16.gmra.mxu0 %v429
      %v624 = vpop.f32.mrf.mxu0
      %v625 = vadd.f32 0.0, %v624
      %v626 = vpop.f32.mrf.mxu0
      %v627 = vpop.f32.mrf.mxu0
      %v628 = vadd.f32 0.0, %v627
      %v629 = vpop.f32.mrf.mxu0
      %630 = vmatprep.mubr.bf16.mxu0 0
      %631 = vmatmul.mubr.bf16.gmra.mxu0 %v430
      %v632 = vpop.f32.mrf.mxu0
      %v633 = vadd.f32 0.0, %v632
      %v634 = vpop.f32.mrf.mxu0
      %v635 = vpop.f32.mrf.mxu0
      %v636 = vadd.f32 0.0, %v635
      %v637 = vpop.f32.mrf.mxu0
      %638 = vmatprep.mubr.bf16.mxu0 0
      %639 = vmatmul.mubr.bf16.gmra.mxu0 %v431
      %v640 = vpop.f32.mrf.mxu0
      %v641 = vadd.f32 0.0, %v640
      %v642 = vpop.f32.mrf.mxu0
      %v643 = vpop.f32.mrf.mxu0
      %v644 = vadd.f32 0.0, %v643
      %v645 = vpop.f32.mrf.mxu0
      %646 = vmatprep.mubr.bf16.mxu0 0
      %647 = vmatmul.mubr.bf16.gmra.mxu0 %v432
      %v648 = vpop.f32.mrf.mxu0
      %v649 = vadd.f32 0.0, %v648
      %v650 = vpop.f32.mrf.mxu0
      %v651 = vpop.f32.mrf.mxu0
      %v652 = vadd.f32 0.0, %v651
      %v653 = vpop.f32.mrf.mxu0
      %654 = vmatprep.mubr.bf16.mxu0 0
      %655 = vmatmul.mubr.bf16.gmra.mxu0 %v433
      %v656 = vpop.f32.mrf.mxu0
      %v657 = vadd.f32 0.0, %v656
      %v658 = vpop.f32.mrf.mxu0
      %v659 = vpop.f32.mrf.mxu0
      %v660 = vadd.f32 0.0, %v659
      %v661 = vpop.f32.mrf.mxu0
      %662 = vmatprep.mubr.bf16.mxu0 0
      %663 = vmatmul.mubr.bf16.gmra.mxu0 %v434
      %v664 = vpop.f32.mrf.mxu0
      %v665 = vadd.f32 0.0, %v664
      %v666 = vpop.f32.mrf.mxu0
      %v667 = vpop.f32.mrf.mxu0
      %v668 = vadd.f32 0.0, %v667
      %v669 = vpop.f32.mrf.mxu0
      %670 = vmatprep.mubr.bf16.mxu0 0
      %671 = vmatmul.mubr.bf16.gmra.mxu0 %v435
      %v672 = vpop.f32.mrf.mxu0
      %v673 = vadd.f32 0.0, %v672
      %v674 = vpop.f32.mrf.mxu0
      %v675 = vpop.f32.mrf.mxu0
      %v676 = vadd.f32 0.0, %v675
      %v677 = vpop.f32.mrf.mxu0
      %678 = vmatprep.mubr.bf16.mxu0 0
      %679 = vmatmul.mubr.bf16.gmra.mxu0 %v436
      %v680 = vpop.f32.mrf.mxu0
      %v681 = vadd.f32 0.0, %v680
      %v682 = vpop.f32.mrf.mxu0
      %v683 = vpop.f32.mrf.mxu0
      %v684 = vadd.f32 0.0, %v683
      %v685 = vpop.f32.mrf.mxu0
      %686 = vmatprep.mubr.bf16.mxu0 0
      %687 = vmatmul.mubr.bf16.gmra.mxu0 %v437
      %v688 = vpop.f32.mrf.mxu0
      %v689 = vadd.f32 0.0, %v688
      %v690 = vpop.f32.mrf.mxu0
      %v691 = vpop.f32.mrf.mxu0
      %v692 = vadd.f32 0.0, %v691
      %v693 = vpop.f32.mrf.mxu0
      %694 = vmatprep.mubr.bf16.mxu0 0
      %695 = vmatmul.mubr.bf16.gmra.mxu0 %v438
      %v696 = vpop.f32.mrf.mxu0
      %v697 = vadd.f32 0.0, %v696
      %v698 = vpop.f32.mrf.mxu0
      %v699 = vpop.f32.mrf.mxu0
      %v700 = vadd.f32 0.0, %v699
      %v701 = vpop.f32.mrf.mxu0
      %702 = vmatprep.mubr.bf16.mxu0 0
      %703 = vmatmul.mubr.bf16.gmra.mxu0 %v439
      %v704 = vpop.f32.mrf.mxu0
      %v705 = vadd.f32 0.0, %v704
      %v706 = vpop.f32.mrf.mxu0
      %v707 = vpop.f32.mrf.mxu0
      %v708 = vadd.f32 0.0, %v707
      %v709 = vpop.f32.mrf.mxu0
      %710 = vmatprep.mubr.bf16.mxu0 0
      %711 = vmatmul.mubr.bf16.gmra.mxu0 %v440
      %v712 = vpop.f32.mrf.mxu0
      %v713 = vadd.f32 0.0, %v712
      %v714 = vpop.f32.mrf.mxu0
      %v715 = vpop.f32.mrf.mxu0
      %v716 = vadd.f32 0.0, %v715
      %v717 = vpop.f32.mrf.mxu0
      %718 = vmatprep.mubr.bf16.mxu0 0
      %719 = vmatmul.mubr.bf16.gmra.mxu0 %v441
      %v720 = vpop.f32.mrf.mxu0
      %v721 = vadd.f32 0.0, %v720
      %v722 = vpop.f32.mrf.mxu0
      %v723 = vpop.f32.mrf.mxu0
      %v724 = vadd.f32 0.0, %v723
      %v725 = vpop.f32.mrf.mxu0
      %726 = vmatprep.mubr.bf16.mxu0 0
      %727 = vmatmul.mubr.bf16.gmra.mxu0 %v442
      %v728 = vpop.f32.mrf.mxu0
      %v729 = vadd.f32 0.0, %v728
      %v730 = vpop.f32.mrf.mxu0
      %v731 = vpop.f32.mrf.mxu0
      %v732 = vadd.f32 0.0, %v731
      %v733 = vpop.f32.mrf.mxu0
      %734 = vmatprep.mubr.bf16.mxu0 0
      %735 = vmatmul.mubr.bf16.gmra.mxu0 %v443
      %v736 = vpop.f32.mrf.mxu0
      %v737 = vadd.f32 0.0, %v736
      %v738 = vpop.f32.mrf.mxu0
      %v739 = vpop.f32.mrf.mxu0
      %v740 = vadd.f32 0.0, %v739
      %v741 = vpop.f32.mrf.mxu0
      %742 = vmatprep.mubr.bf16.mxu0 0
      %743 = vmatmul.mubr.bf16.gmra.mxu0 %v444
      %v744 = vpop.f32.mrf.mxu0
      %v745 = vadd.f32 0.0, %v744
      %v746 = vpop.f32.mrf.mxu0
      %v747 = vpop.f32.mrf.mxu0
      %v748 = vadd.f32 0.0, %v747
      %v749 = vpop.f32.mrf.mxu0
      %750 = vmatprep.mubr.bf16.mxu0 0
      %751 = vmatmul.mubr.bf16.gmra.mxu0 %v445
      %v752 = vpop.f32.mrf.mxu0
      %v753 = vadd.f32 0.0, %v752
      %v754 = vpop.f32.mrf.mxu0
      %v755 = vpop.f32.mrf.mxu0
      %v756 = vadd.f32 0.0, %v755
      %v757 = vpop.f32.mrf.mxu0
      %758 = vmatprep.mubr.bf16.mxu0 0
      %759 = vmatmul.mubr.bf16.gmra.mxu0 %v446
      %v760 = vpop.f32.mrf.mxu0
      %v761 = vadd.f32 0.0, %v760
      %v762 = vpop.f32.mrf.mxu0
      %v763 = vpop.f32.mrf.mxu0
      %v764 = vadd.f32 0.0, %v763
      %v765 = vpop.f32.mrf.mxu0
      %766 = vmatprep.mubr.bf16.mxu0 0
      %767 = vmatmul.mubr.bf16.gmra.mxu0 %v447
      %v768 = vpop.f32.mrf.mxu0
      %v769 = vadd.f32 0.0, %v768
      %v770 = vpop.f32.mrf.mxu0
      %v771 = vpop.f32.mrf.mxu0
      %v772 = vadd.f32 0.0, %v771
      %v773 = vpop.f32.mrf.mxu0
      %774 = vmatprep.mubr.bf16.mxu0 0
      %775 = vmatmul.mubr.bf16.gmra.mxu0 %v448
      %v776 = vpop.f32.mrf.mxu0
      %v777 = vadd.f32 0.0, %v776
      %v778 = vpop.f32.mrf.mxu0
      %v779 = vpop.f32.mrf.mxu0
      %v780 = vadd.f32 0.0, %v779
      %v781 = vpop.f32.mrf.mxu0
      %782 = vmatprep.mubr.bf16.mxu0 0
      %783 = vmatmul.mubr.bf16.gmra.mxu0 %v449
      %v784 = vpop.f32.mrf.mxu0
      %v785 = vadd.f32 0.0, %v784
      %v786 = vpop.f32.mrf.mxu0
      %v787 = vpop.f32.mrf.mxu0
      %v788 = vadd.f32 0.0, %v787
      %v789 = vpop.f32.mrf.mxu0
      %790 = vmatprep.mubr.bf16.mxu0 0
      %791 = vmatmul.mubr.bf16.gmra.mxu0 %v450
      %v792 = vpop.f32.mrf.mxu0
      %v793 = vadd.f32 0.0, %v792
      %v794 = vpop.f32.mrf.mxu0
      %v795 = vpop.f32.mrf.mxu0
      %v796 = vadd.f32 0.0, %v795
      %v797 = vpop.f32.mrf.mxu0
      %798 = vmatprep.mubr.bf16.mxu0 0
      %799 = vmatmul.mubr.bf16.gmra.mxu0 %v451
      %v800 = vpop.f32.mrf.mxu0
      %v801 = vadd.f32 0.0, %v800
      %v802 = vpop.f32.mrf.mxu0
      %v803 = vpop.f32.mrf.mxu0
      %v804 = vadd.f32 0.0, %v803
      %v805 = vpop.f32.mrf.mxu0
      %806 = vmatprep.mubr.bf16.mxu0 0
      %807 = vmatmul.mubr.bf16.gmra.mxu0 %v452
      %v808 = vpop.f32.mrf.mxu0
      %v809 = vadd.f32 0.0, %v808
      %v810 = vpop.f32.mrf.mxu0
      %v811 = vpop.f32.mrf.mxu0
      %v812 = vadd.f32 0.0, %v811
      %v813 = vpop.f32.mrf.mxu0
      %814 = vmatprep.mubr.bf16.mxu0 0
      %815 = vmatmul.mubr.bf16.gmra.mxu0 %v453
      %v816 = vpop.f32.mrf.mxu0
      %v817 = vadd.f32 0.0, %v816
      %v818 = vpop.f32.mrf.mxu0
      %v819 = vpop.f32.mrf.mxu0
      %v820 = vadd.f32 0.0, %v819
      %v821 = vpop.f32.mrf.mxu0
      %822 = vdwg.mxu0
      %p823 = scmp.eq.s32.totalorder %s19, 0
      %p824 = scmp.eq.s32.totalorder %s20, 0
      %p825 = pnand %p823, %p824
      %p826 = pneg %p825
      // Predicated region
      $region37: #{_lambda_.8} parent=35 // pred_check
        _
      $region38: #{_lambda_.8} parent=35 // pred_check_branch
        %828 = sbr.rel (%p825) target = $region40
      $region39: #{_lambda_.8} parent=35 // pred_region
        %829 = vst [vmem:[#allocation2] sm:$0x1] 0.0
        %830 = vst [vmem:[#allocation3] sm:$0x1] 0.0
      $region40: #{_lambda_.8} parent=35 // pred_fallthru
        _
      // Predicated region
      $region41: #{_lambda_.8} parent=35 // pred_check
        %p831 = pneg %p823
      $region42: #{_lambda_.8} parent=35 // pred_check_branch
        %833 = sbr.rel (%p831) target = $region44
      $region43: #{_lambda_.8} parent=35 // pred_region
        %v834 = vld [vmem:[#allocation2] sm:$0x1]
        %v835 = vadd.f32 %v569, %v572
        %v836 = vadd.f32 %v835, %v577
        %v837 = vadd.f32 %v836, %v580
        %v838 = vadd.f32 %v837, %v585
        %v839 = vadd.f32 %v838, %v588
        %v840 = vadd.f32 %v839, %v593
        %v841 = vadd.f32 %v840, %v596
        %v842 = vadd.f32 %v841, %v601
        %v843 = vadd.f32 %v842, %v604
        %v844 = vadd.f32 %v843, %v609
        %v845 = vadd.f32 %v844, %v612
        %v846 = vadd.f32 %v845, %v617
        %v847 = vadd.f32 %v846, %v620
        %v848 = vadd.f32 %v847, %v625
        %v849 = vadd.f32 %v848, %v628
        %v850 = vadd.f32 %v849, %v633
        %v851 = vadd.f32 %v850, %v636
        %v852 = vadd.f32 %v851, %v641
        %v853 = vadd.f32 %v852, %v644
        %v854 = vadd.f32 %v853, %v649
        %v855 = vadd.f32 %v854, %v652
        %v856 = vadd.f32 %v855, %v657
        %v857 = vadd.f32 %v856, %v660
        %v858 = vadd.f32 %v857, %v665
        %v859 = vadd.f32 %v858, %v668
        %v860 = vadd.f32 %v859, %v673
        %v861 = vadd.f32 %v860, %v676
        %v862 = vadd.f32 %v861, %v681
        %v863 = vadd.f32 %v862, %v684
        %v864 = vadd.f32 %v863, %v689
        %v865 = vadd.f32 %v864, %v692
        %v866 = vadd.f32 %v865, %v697
        %v867 = vadd.f32 %v866, %v700
        %v868 = vadd.f32 %v867, %v705
        %v869 = vadd.f32 %v868, %v708
        %v870 = vadd.f32 %v869, %v713
        %v871 = vadd.f32 %v870, %v716
        %v872 = vadd.f32 %v871, %v721
        %v873 = vadd.f32 %v872, %v724
        %v874 = vadd.f32 %v873, %v729
        %v875 = vadd.f32 %v874, %v732
        %v876 = vadd.f32 %v875, %v737
        %v877 = vadd.f32 %v876, %v740
        %v878 = vadd.f32 %v877, %v745
        %v879 = vadd.f32 %v878, %v748
        %v880 = vadd.f32 %v879, %v753
        %v881 = vadd.f32 %v880, %v756
        %v882 = vadd.f32 %v881, %v761
        %v883 = vadd.f32 %v882, %v764
        %v884 = vadd.f32 %v883, %v769
        %v885 = vadd.f32 %v884, %v772
        %v886 = vadd.f32 %v885, %v777
        %v887 = vadd.f32 %v886, %v780
        %v888 = vadd.f32 %v887, %v785
        %v889 = vadd.f32 %v888, %v788
        %v890 = vadd.f32 %v889, %v793
        %v891 = vadd.f32 %v890, %v796
        %v892 = vadd.f32 %v891, %v801
        %v893 = vadd.f32 %v892, %v804
        %v894 = vadd.f32 %v893, %v809
        %v895 = vadd.f32 %v894, %v812
        %v896 = vadd.f32 %v895, %v817
        %v897 = vadd.f32 %v896, %v820
        %v898 = vrot.slane %v897, 4
        %v899 = vadd.f32 %v897, %v898
        %v900 = vrot.slane %v899, 2
        %v901 = vadd.f32 %v899, %v900
        %v902 = vrot.slane %v901, 1
        %v903 = vadd.f32 %v901, %v902
        %v904 = vadd.f32 %v834, %v903
        %905 = vst [vmem:[#allocation2] sm:$0x1] %v904
        %v906 = vld [vmem:[#allocation3] sm:$0x1]
        %v907 = vmul.f32 %v569, %v569
        %v908 = vmul.f32 %v572, %v572
        %v909 = vmul.f32 %v577, %v577
        %v910 = vmul.f32 %v580, %v580
        %v911 = vmul.f32 %v585, %v585
        %v912 = vmul.f32 %v588, %v588
        %v913 = vmul.f32 %v593, %v593
        %v914 = vmul.f32 %v596, %v596
        %v915 = vmul.f32 %v601, %v601
        %v916 = vmul.f32 %v604, %v604
        %v917 = vmul.f32 %v609, %v609
        %v918 = vmul.f32 %v612, %v612
        %v919 = vmul.f32 %v617, %v617
        %v920 = vmul.f32 %v620, %v620
        %v921 = vmul.f32 %v625, %v625
        %v922 = vmul.f32 %v628, %v628
        %v923 = vmul.f32 %v633, %v633
        %v924 = vmul.f32 %v636, %v636
        %v925 = vmul.f32 %v641, %v641
        %v926 = vmul.f32 %v644, %v644
        %v927 = vmul.f32 %v649, %v649
        %v928 = vmul.f32 %v652, %v652
        %v929 = vmul.f32 %v657, %v657
        %v930 = vmul.f32 %v660, %v660
        %v931 = vmul.f32 %v665, %v665
        %v932 = vmul.f32 %v668, %v668
        %v933 = vmul.f32 %v673, %v673
        %v934 = vmul.f32 %v676, %v676
        %v935 = vmul.f32 %v681, %v681
        %v936 = vmul.f32 %v684, %v684
        %v937 = vmul.f32 %v689, %v689
        %v938 = vmul.f32 %v692, %v692
        %v939 = vmul.f32 %v697, %v697
        %v940 = vmul.f32 %v700, %v700
        %v941 = vmul.f32 %v705, %v705
        %v942 = vmul.f32 %v708, %v708
        %v943 = vmul.f32 %v713, %v713
        %v944 = vmul.f32 %v716, %v716
        %v945 = vmul.f32 %v721, %v721
        %v946 = vmul.f32 %v724, %v724
        %v947 = vmul.f32 %v729, %v729
        %v948 = vmul.f32 %v732, %v732
        %v949 = vmul.f32 %v737, %v737
        %v950 = vmul.f32 %v740, %v740
        %v951 = vmul.f32 %v745, %v745
        %v952 = vmul.f32 %v748, %v748
        %v953 = vmul.f32 %v753, %v753
        %v954 = vmul.f32 %v756, %v756
        %v955 = vmul.f32 %v761, %v761
        %v956 = vmul.f32 %v764, %v764
        %v957 = vmul.f32 %v769, %v769
        %v958 = vmul.f32 %v772, %v772
        %v959 = vmul.f32 %v777, %v777
        %v960 = vmul.f32 %v780, %v780
        %v961 = vmul.f32 %v785, %v785
        %v962 = vmul.f32 %v788, %v788
        %v963 = vmul.f32 %v793, %v793
        %v964 = vmul.f32 %v796, %v796
        %v965 = vmul.f32 %v801, %v801
        %v966 = vmul.f32 %v804, %v804
        %v967 = vmul.f32 %v809, %v809
        %v968 = vmul.f32 %v812, %v812
        %v969 = vmul.f32 %v817, %v817
        %v970 = vmul.f32 %v820, %v820
        %v971 = vadd.f32 %v907, %v908
        %v972 = vadd.f32 %v971, %v909
        %v973 = vadd.f32 %v972, %v910
        %v974 = vadd.f32 %v973, %v911
        %v975 = vadd.f32 %v974, %v912
        %v976 = vadd.f32 %v975, %v913
        %v977 = vadd.f32 %v976, %v914
        %v978 = vadd.f32 %v977, %v915
        %v979 = vadd.f32 %v978, %v916
        %v980 = vadd.f32 %v979, %v917
        %v981 = vadd.f32 %v980, %v918
        %v982 = vadd.f32 %v981, %v919
        %v983 = vadd.f32 %v982, %v920
        %v984 = vadd.f32 %v983, %v921
        %v985 = vadd.f32 %v984, %v922
        %v986 = vadd.f32 %v985, %v923
        %v987 = vadd.f32 %v986, %v924
        %v988 = vadd.f32 %v987, %v925
        %v989 = vadd.f32 %v988, %v926
        %v990 = vadd.f32 %v989, %v927
        %v991 = vadd.f32 %v990, %v928
        %v992 = vadd.f32 %v991, %v929
        %v993 = vadd.f32 %v992, %v930
        %v994 = vadd.f32 %v993, %v931
        %v995 = vadd.f32 %v994, %v932
        %v996 = vadd.f32 %v995, %v933
        %v997 = vadd.f32 %v996, %v934
        %v998 = vadd.f32 %v997, %v935
        %v999 = vadd.f32 %v998, %v936
        %v1000 = vadd.f32 %v999, %v937
        %v1001 = vadd.f32 %v1000, %v938
        %v1002 = vadd.f32 %v1001, %v939
        %v1003 = vadd.f32 %v1002, %v940
        %v1004 = vadd.f32 %v1003, %v941
        %v1005 = vadd.f32 %v1004, %v942
        %v1006 = vadd.f32 %v1005, %v943
        %v1007 = vadd.f32 %v1006, %v944
        %v1008 = vadd.f32 %v1007, %v945
        %v1009 = vadd.f32 %v1008, %v946
        %v1010 = vadd.f32 %v1009, %v947
        %v1011 = vadd.f32 %v1010, %v948
        %v1012 = vadd.f32 %v1011, %v949
        %v1013 = vadd.f32 %v1012, %v950
        %v1014 = vadd.f32 %v1013, %v951
        %v1015 = vadd.f32 %v1014, %v952
        %v1016 = vadd.f32 %v1015, %v953
        %v1017 = vadd.f32 %v1016, %v954
        %v1018 = vadd.f32 %v1017, %v955
        %v1019 = vadd.f32 %v1018, %v956
        %v1020 = vadd.f32 %v1019, %v957
        %v1021 = vadd.f32 %v1020, %v958
        %v1022 = vadd.f32 %v1021, %v959
        %v1023 = vadd.f32 %v1022, %v960
        %v1024 = vadd.f32 %v1023, %v961
        %v1025 = vadd.f32 %v1024, %v962
        %v1026 = vadd.f32 %v1025, %v963
        %v1027 = vadd.f32 %v1026, %v964
        %v1028 = vadd.f32 %v1027, %v965
        %v1029 = vadd.f32 %v1028, %v966
        %v1030 = vadd.f32 %v1029, %v967
        %v1031 = vadd.f32 %v1030, %v968
        %v1032 = vadd.f32 %v1031, %v969
        %v1033 = vadd.f32 %v1032, %v970
        %v1034 = vrot.slane %v1033, 4
        %v1035 = vadd.f32 %v1033, %v1034
        %v1036 = vrot.slane %v1035, 2
        %v1037 = vadd.f32 %v1035, %v1036
        %v1038 = vrot.slane %v1037, 1
        %v1039 = vadd.f32 %v1037, %v1038
        %v1040 = vadd.f32 %v906, %v1039
        %1041 = vst [vmem:[#allocation3] sm:$0x1] %v1040
      $region44: #{_lambda_.8} parent=35 // pred_fallthru
        _
      %p1042 = scmp.eq.s32.totalorder %s19, 1
      // Predicated region
      $region45: #{_lambda_.8} parent=35 // pred_check
        %p1043 = pneg %p1042
      $region46: #{_lambda_.8} parent=35 // pred_check_branch
        %1045 = sbr.rel (%p1043) target = $region48
      $region47: #{_lambda_.8} parent=35 // pred_region
        %v1046 = vld [vmem:[#allocation2] sm:$0x1]
        %v1047 = vmul.f32 %v1046, 0.001953125
        %v1048 = vld [vmem:[#allocation3] sm:$0x1]
        %v1049 = vmul.f32 %v1048, 0.001953125
        %v1050 = vmul.f32 %v1047, %v1047
        %v1051 = vsub.f32 %v1049, %v1050
        %v1052 = vmax.f32 %v1051, 0.0
        %v1053 = vadd.f32 %v1052, 1e-05
        %v1054 = vrsqrt.pop %v1053
        %v1055 = vld [vmem:[%s2] sm:$0x1]
        %v1056 = vmul.f32 %v1055, %v1054
        %v1057 = vld [vmem:[%s3] sm:$0x1]
        %v1058 = vmul.f32 %v1047, %v1056
        %v1059 = vsub.f32 %v1057, %v1058
        %v1061 = vlaneseq
        %v1062 = vshrl.u32 %v1061, 7
        %v1063 = vsub.s32 0, %v1062
        %v1064 = vrot.slane %v1056, %v1063
        %v1066 = vmul.f32 %v569, %v1064
        %v1067 = vmul.f32 %v572, %v1064
        %v1068 = vmul.f32 %v577, %v1064
        %v1069 = vmul.f32 %v580, %v1064
        %v1070 = vmul.f32 %v585, %v1064
        %v1071 = vmul.f32 %v588, %v1064
        %v1072 = vmul.f32 %v593, %v1064
        %v1073 = vmul.f32 %v596, %v1064
        %v1074 = vmul.f32 %v601, %v1064
        %v1075 = vmul.f32 %v604, %v1064
        %v1076 = vmul.f32 %v609, %v1064
        %v1077 = vmul.f32 %v612, %v1064
        %v1078 = vmul.f32 %v617, %v1064
        %v1079 = vmul.f32 %v620, %v1064
        %v1080 = vmul.f32 %v625, %v1064
        %v1081 = vmul.f32 %v628, %v1064
        %v1082 = vmul.f32 %v633, %v1064
        %v1083 = vmul.f32 %v636, %v1064
        %v1084 = vmul.f32 %v641, %v1064
        %v1085 = vmul.f32 %v644, %v1064
        %v1086 = vmul.f32 %v649, %v1064
        %v1087 = vmul.f32 %v652, %v1064
        %v1088 = vmul.f32 %v657, %v1064
        %v1089 = vmul.f32 %v660, %v1064
        %v1090 = vmul.f32 %v665, %v1064
        %v1091 = vmul.f32 %v668, %v1064
        %v1092 = vmul.f32 %v673, %v1064
        %v1093 = vmul.f32 %v676, %v1064
        %v1094 = vmul.f32 %v681, %v1064
        %v1095 = vmul.f32 %v684, %v1064
        %v1096 = vmul.f32 %v689, %v1064
        %v1097 = vmul.f32 %v692, %v1064
        %v1098 = vmul.f32 %v697, %v1064
        %v1099 = vmul.f32 %v700, %v1064
        %v1100 = vmul.f32 %v705, %v1064
        %v1101 = vmul.f32 %v708, %v1064
        %v1102 = vmul.f32 %v713, %v1064
        %v1103 = vmul.f32 %v716, %v1064
        %v1104 = vmul.f32 %v721, %v1064
        %v1105 = vmul.f32 %v724, %v1064
        %v1106 = vmul.f32 %v729, %v1064
        %v1107 = vmul.f32 %v732, %v1064
        %v1108 = vmul.f32 %v737, %v1064
        %v1109 = vmul.f32 %v740, %v1064
        %v1110 = vmul.f32 %v745, %v1064
        %v1111 = vmul.f32 %v748, %v1064
        %v1112 = vmul.f32 %v753, %v1064
        %v1113 = vmul.f32 %v756, %v1064
        %v1114 = vmul.f32 %v761, %v1064
        %v1115 = vmul.f32 %v764, %v1064
        %v1116 = vmul.f32 %v769, %v1064
        %v1117 = vmul.f32 %v772, %v1064
        %v1118 = vmul.f32 %v777, %v1064
        %v1119 = vmul.f32 %v780, %v1064
        %v1120 = vmul.f32 %v785, %v1064
        %v1121 = vmul.f32 %v788, %v1064
        %v1122 = vmul.f32 %v793, %v1064
        %v1123 = vmul.f32 %v796, %v1064
        %v1124 = vmul.f32 %v801, %v1064
        %v1125 = vmul.f32 %v804, %v1064
        %v1126 = vmul.f32 %v809, %v1064
        %v1127 = vmul.f32 %v812, %v1064
        %v1128 = vmul.f32 %v817, %v1064
        %v1129 = vmul.f32 %v820, %v1064
        %v1131 = vlaneseq
        %v1132 = vshrl.u32 %v1131, 7
        %v1133 = vsub.s32 0, %v1132
        %v1134 = vrot.slane %v1059, %v1133
        %v1136 = vadd.f32 %v1066, %v1134
        %v1137 = vadd.f32 %v1067, %v1134
        %v1138 = vadd.f32 %v1068, %v1134
        %v1139 = vadd.f32 %v1069, %v1134
        %v1140 = vadd.f32 %v1070, %v1134
        %v1141 = vadd.f32 %v1071, %v1134
        %v1142 = vadd.f32 %v1072, %v1134
        %v1143 = vadd.f32 %v1073, %v1134
        %v1144 = vadd.f32 %v1074, %v1134
        %v1145 = vadd.f32 %v1075, %v1134
        %v1146 = vadd.f32 %v1076, %v1134
        %v1147 = vadd.f32 %v1077, %v1134
        %v1148 = vadd.f32 %v1078, %v1134
        %v1149 = vadd.f32 %v1079, %v1134
        %v1150 = vadd.f32 %v1080, %v1134
        %v1151 = vadd.f32 %v1081, %v1134
        %v1152 = vadd.f32 %v1082, %v1134
        %v1153 = vadd.f32 %v1083, %v1134
        %v1154 = vadd.f32 %v1084, %v1134
        %v1155 = vadd.f32 %v1085, %v1134
        %v1156 = vadd.f32 %v1086, %v1134
        %v1157 = vadd.f32 %v1087, %v1134
        %v1158 = vadd.f32 %v1088, %v1134
        %v1159 = vadd.f32 %v1089, %v1134
        %v1160 = vadd.f32 %v1090, %v1134
        %v1161 = vadd.f32 %v1091, %v1134
        %v1162 = vadd.f32 %v1092, %v1134
        %v1163 = vadd.f32 %v1093, %v1134
        %v1164 = vadd.f32 %v1094, %v1134
        %v1165 = vadd.f32 %v1095, %v1134
        %v1166 = vadd.f32 %v1096, %v1134
        %v1167 = vadd.f32 %v1097, %v1134
        %v1168 = vadd.f32 %v1098, %v1134
        %v1169 = vadd.f32 %v1099, %v1134
        %v1170 = vadd.f32 %v1100, %v1134
        %v1171 = vadd.f32 %v1101, %v1134
        %v1172 = vadd.f32 %v1102, %v1134
        %v1173 = vadd.f32 %v1103, %v1134
        %v1174 = vadd.f32 %v1104, %v1134
        %v1175 = vadd.f32 %v1105, %v1134
        %v1176 = vadd.f32 %v1106, %v1134
        %v1177 = vadd.f32 %v1107, %v1134
        %v1178 = vadd.f32 %v1108, %v1134
        %v1179 = vadd.f32 %v1109, %v1134
        %v1180 = vadd.f32 %v1110, %v1134
        %v1181 = vadd.f32 %v1111, %v1134
        %v1182 = vadd.f32 %v1112, %v1134
        %v1183 = vadd.f32 %v1113, %v1134
        %v1184 = vadd.f32 %v1114, %v1134
        %v1185 = vadd.f32 %v1115, %v1134
        %v1186 = vadd.f32 %v1116, %v1134
        %v1187 = vadd.f32 %v1117, %v1134
        %v1188 = vadd.f32 %v1118, %v1134
        %v1189 = vadd.f32 %v1119, %v1134
        %v1190 = vadd.f32 %v1120, %v1134
        %v1191 = vadd.f32 %v1121, %v1134
        %v1192 = vadd.f32 %v1122, %v1134
        %v1193 = vadd.f32 %v1123, %v1134
        %v1194 = vadd.f32 %v1124, %v1134
        %v1195 = vadd.f32 %v1125, %v1134
        %v1196 = vadd.f32 %v1126, %v1134
        %v1197 = vadd.f32 %v1127, %v1134
        %v1198 = vadd.f32 %v1128, %v1134
        %v1199 = vadd.f32 %v1129, %v1134
        %vm1200 = vcmp.gt.f32.partialorder %v1136, 0.0
        %vm1201 = vcmp.gt.f32.partialorder %v1137, 0.0
        %vm1202 = vcmp.gt.f32.partialorder %v1138, 0.0
        %vm1203 = vcmp.gt.f32.partialorder %v1139, 0.0
        %vm1204 = vcmp.gt.f32.partialorder %v1140, 0.0
        %vm1205 = vcmp.gt.f32.partialorder %v1141, 0.0
        %vm1206 = vcmp.gt.f32.partialorder %v1142, 0.0
        %vm1207 = vcmp.gt.f32.partialorder %v1143, 0.0
        %vm1208 = vcmp.gt.f32.partialorder %v1144, 0.0
        %vm1209 = vcmp.gt.f32.partialorder %v1145, 0.0
        %vm1210 = vcmp.gt.f32.partialorder %v1146, 0.0
        %vm1211 = vcmp.gt.f32.partialorder %v1147, 0.0
        %vm1212 = vcmp.gt.f32.partialorder %v1148, 0.0
        %vm1213 = vcmp.gt.f32.partialorder %v1149, 0.0
        %vm1214 = vcmp.gt.f32.partialorder %v1150, 0.0
        %vm1215 = vcmp.gt.f32.partialorder %v1151, 0.0
        %vm1216 = vcmp.gt.f32.partialorder %v1152, 0.0
        %vm1217 = vcmp.gt.f32.partialorder %v1153, 0.0
        %vm1218 = vcmp.gt.f32.partialorder %v1154, 0.0
        %vm1219 = vcmp.gt.f32.partialorder %v1155, 0.0
        %vm1220 = vcmp.gt.f32.partialorder %v1156, 0.0
        %vm1221 = vcmp.gt.f32.partialorder %v1157, 0.0
        %vm1222 = vcmp.gt.f32.partialorder %v1158, 0.0
        %vm1223 = vcmp.gt.f32.partialorder %v1159, 0.0
        %vm1224 = vcmp.gt.f32.partialorder %v1160, 0.0
        %vm1225 = vcmp.gt.f32.partialorder %v1161, 0.0
        %vm1226 = vcmp.gt.f32.partialorder %v1162, 0.0
        %vm1227 = vcmp.gt.f32.partialorder %v1163, 0.0
        %vm1228 = vcmp.gt.f32.partialorder %v1164, 0.0
        %vm1229 = vcmp.gt.f32.partialorder %v1165, 0.0
        %vm1230 = vcmp.gt.f32.partialorder %v1166, 0.0
        %vm1231 = vcmp.gt.f32.partialorder %v1167, 0.0
        %vm1232 = vcmp.gt.f32.partialorder %v1168, 0.0
        %vm1233 = vcmp.gt.f32.partialorder %v1169, 0.0
        %vm1234 = vcmp.gt.f32.partialorder %v1170, 0.0
        %vm1235 = vcmp.gt.f32.partialorder %v1171, 0.0
        %vm1236 = vcmp.gt.f32.partialorder %v1172, 0.0
        %vm1237 = vcmp.gt.f32.partialorder %v1173, 0.0
        %vm1238 = vcmp.gt.f32.partialorder %v1174, 0.0
        %vm1239 = vcmp.gt.f32.partialorder %v1175, 0.0
        %vm1240 = vcmp.gt.f32.partialorder %v1176, 0.0
        %vm1241 = vcmp.gt.f32.partialorder %v1177, 0.0
        %vm1242 = vcmp.gt.f32.partialorder %v1178, 0.0
        %vm1243 = vcmp.gt.f32.partialorder %v1179, 0.0
        %vm1244 = vcmp.gt.f32.partialorder %v1180, 0.0
        %vm1245 = vcmp.gt.f32.partialorder %v1181, 0.0
        %vm1246 = vcmp.gt.f32.partialorder %v1182, 0.0
        %vm1247 = vcmp.gt.f32.partialorder %v1183, 0.0
        %vm1248 = vcmp.gt.f32.partialorder %v1184, 0.0
        %vm1249 = vcmp.gt.f32.partialorder %v1185, 0.0
        %vm1250 = vcmp.gt.f32.partialorder %v1186, 0.0
        %vm1251 = vcmp.gt.f32.partialorder %v1187, 0.0
        %vm1252 = vcmp.gt.f32.partialorder %v1188, 0.0
        %vm1253 = vcmp.gt.f32.partialorder %v1189, 0.0
        %vm1254 = vcmp.gt.f32.partialorder %v1190, 0.0
        %vm1255 = vcmp.gt.f32.partialorder %v1191, 0.0
        %vm1256 = vcmp.gt.f32.partialorder %v1192, 0.0
        %vm1257 = vcmp.gt.f32.partialorder %v1193, 0.0
        %vm1258 = vcmp.gt.f32.partialorder %v1194, 0.0
        %vm1259 = vcmp.gt.f32.partialorder %v1195, 0.0
        %vm1260 = vcmp.gt.f32.partialorder %v1196, 0.0
        %vm1261 = vcmp.gt.f32.partialorder %v1197, 0.0
        %vm1262 = vcmp.gt.f32.partialorder %v1198, 0.0
        %vm1263 = vcmp.gt.f32.partialorder %v1199, 0.0
        %v1264 = vmul.f32 %v1136, 0.2
        %v1265 = vmul.f32 %v1137, 0.2
        %v1266 = vmul.f32 %v1138, 0.2
        %v1267 = vmul.f32 %v1139, 0.2
        %v1268 = vmul.f32 %v1140, 0.2
        %v1269 = vmul.f32 %v1141, 0.2
        %v1270 = vmul.f32 %v1142, 0.2
        %v1271 = vmul.f32 %v1143, 0.2
        %v1272 = vmul.f32 %v1144, 0.2
        %v1273 = vmul.f32 %v1145, 0.2
        %v1274 = vmul.f32 %v1146, 0.2
        %v1275 = vmul.f32 %v1147, 0.2
        %v1276 = vmul.f32 %v1148, 0.2
        %v1277 = vmul.f32 %v1149, 0.2
        %v1278 = vmul.f32 %v1150, 0.2
        %v1279 = vmul.f32 %v1151, 0.2
        %v1280 = vmul.f32 %v1152, 0.2
        %v1281 = vmul.f32 %v1153, 0.2
        %v1282 = vmul.f32 %v1154, 0.2
        %v1283 = vmul.f32 %v1155, 0.2
        %v1284 = vmul.f32 %v1156, 0.2
        %v1285 = vmul.f32 %v1157, 0.2
        %v1286 = vmul.f32 %v1158, 0.2
        %v1287 = vmul.f32 %v1159, 0.2
        %v1288 = vmul.f32 %v1160, 0.2
        %v1289 = vmul.f32 %v1161, 0.2
        %v1290 = vmul.f32 %v1162, 0.2
        %v1291 = vmul.f32 %v1163, 0.2
        %v1292 = vmul.f32 %v1164, 0.2
        %v1293 = vmul.f32 %v1165, 0.2
        %v1294 = vmul.f32 %v1166, 0.2
        %v1295 = vmul.f32 %v1167, 0.2
        %v1296 = vmul.f32 %v1168, 0.2
        %v1297 = vmul.f32 %v1169, 0.2
        %v1298 = vmul.f32 %v1170, 0.2
        %v1299 = vmul.f32 %v1171, 0.2
        %v1300 = vmul.f32 %v1172, 0.2
        %v1301 = vmul.f32 %v1173, 0.2
        %v1302 = vmul.f32 %v1174, 0.2
        %v1303 = vmul.f32 %v1175, 0.2
        %v1304 = vmul.f32 %v1176, 0.2
        %v1305 = vmul.f32 %v1177, 0.2
        %v1306 = vmul.f32 %v1178, 0.2
        %v1307 = vmul.f32 %v1179, 0.2
        %v1308 = vmul.f32 %v1180, 0.2
        %v1309 = vmul.f32 %v1181, 0.2
        %v1310 = vmul.f32 %v1182, 0.2
        %v1311 = vmul.f32 %v1183, 0.2
        %v1312 = vmul.f32 %v1184, 0.2
        %v1313 = vmul.f32 %v1185, 0.2
        %v1314 = vmul.f32 %v1186, 0.2
        %v1315 = vmul.f32 %v1187, 0.2
        %v1316 = vmul.f32 %v1188, 0.2
        %v1317 = vmul.f32 %v1189, 0.2
        %v1318 = vmul.f32 %v1190, 0.2
        %v1319 = vmul.f32 %v1191, 0.2
        %v1320 = vmul.f32 %v1192, 0.2
        %v1321 = vmul.f32 %v1193, 0.2
        %v1322 = vmul.f32 %v1194, 0.2
        %v1323 = vmul.f32 %v1195, 0.2
        %v1324 = vmul.f32 %v1196, 0.2
        %v1325 = vmul.f32 %v1197, 0.2
        %v1326 = vmul.f32 %v1198, 0.2
        %v1327 = vmul.f32 %v1199, 0.2
        %v1328 = vsel %vm1200, %v1136, %v1264
        %v1329 = vsel %vm1201, %v1137, %v1265
        %v1330 = vsel %vm1202, %v1138, %v1266
        %v1331 = vsel %vm1203, %v1139, %v1267
        %v1332 = vsel %vm1204, %v1140, %v1268
        %v1333 = vsel %vm1205, %v1141, %v1269
        %v1334 = vsel %vm1206, %v1142, %v1270
        %v1335 = vsel %vm1207, %v1143, %v1271
        %v1336 = vsel %vm1208, %v1144, %v1272
        %v1337 = vsel %vm1209, %v1145, %v1273
        %v1338 = vsel %vm1210, %v1146, %v1274
        %v1339 = vsel %vm1211, %v1147, %v1275
        %v1340 = vsel %vm1212, %v1148, %v1276
        %v1341 = vsel %vm1213, %v1149, %v1277
        %v1342 = vsel %vm1214, %v1150, %v1278
        %v1343 = vsel %vm1215, %v1151, %v1279
        %v1344 = vsel %vm1216, %v1152, %v1280
        %v1345 = vsel %vm1217, %v1153, %v1281
        %v1346 = vsel %vm1218, %v1154, %v1282
        %v1347 = vsel %vm1219, %v1155, %v1283
        %v1348 = vsel %vm1220, %v1156, %v1284
        %v1349 = vsel %vm1221, %v1157, %v1285
        %v1350 = vsel %vm1222, %v1158, %v1286
        %v1351 = vsel %vm1223, %v1159, %v1287
        %v1352 = vsel %vm1224, %v1160, %v1288
        %v1353 = vsel %vm1225, %v1161, %v1289
        %v1354 = vsel %vm1226, %v1162, %v1290
        %v1355 = vsel %vm1227, %v1163, %v1291
        %v1356 = vsel %vm1228, %v1164, %v1292
        %v1357 = vsel %vm1229, %v1165, %v1293
        %v1358 = vsel %vm1230, %v1166, %v1294
        %v1359 = vsel %vm1231, %v1167, %v1295
        %v1360 = vsel %vm1232, %v1168, %v1296
        %v1361 = vsel %vm1233, %v1169, %v1297
        %v1362 = vsel %vm1234, %v1170, %v1298
        %v1363 = vsel %vm1235, %v1171, %v1299
        %v1364 = vsel %vm1236, %v1172, %v1300
        %v1365 = vsel %vm1237, %v1173, %v1301
        %v1366 = vsel %vm1238, %v1174, %v1302
        %v1367 = vsel %vm1239, %v1175, %v1303
        %v1368 = vsel %vm1240, %v1176, %v1304
        %v1369 = vsel %vm1241, %v1177, %v1305
        %v1370 = vsel %vm1242, %v1178, %v1306
        %v1371 = vsel %vm1243, %v1179, %v1307
        %v1372 = vsel %vm1244, %v1180, %v1308
        %v1373 = vsel %vm1245, %v1181, %v1309
        %v1374 = vsel %vm1246, %v1182, %v1310
        %v1375 = vsel %vm1247, %v1183, %v1311
        %v1376 = vsel %vm1248, %v1184, %v1312
        %v1377 = vsel %vm1249, %v1185, %v1313
        %v1378 = vsel %vm1250, %v1186, %v1314
        %v1379 = vsel %vm1251, %v1187, %v1315
        %v1380 = vsel %vm1252, %v1188, %v1316
        %v1381 = vsel %vm1253, %v1189, %v1317
        %v1382 = vsel %vm1254, %v1190, %v1318
        %v1383 = vsel %vm1255, %v1191, %v1319
        %v1384 = vsel %vm1256, %v1192, %v1320
        %v1385 = vsel %vm1257, %v1193, %v1321
        %v1386 = vsel %vm1258, %v1194, %v1322
        %v1387 = vsel %vm1259, %v1195, %v1323
        %v1388 = vsel %vm1260, %v1196, %v1324
        %v1389 = vsel %vm1261, %v1197, %v1325
        %v1390 = vsel %vm1262, %v1198, %v1326
        %v1391 = vsel %vm1263, %v1199, %v1327
        %v1392 = vpack.c.bf16 %v1329, %v1328
        %v1393 = vpack.c.bf16 %v1331, %v1330
        %v1394 = vpack.c.bf16 %v1333, %v1332
        %v1395 = vpack.c.bf16 %v1335, %v1334
        %v1396 = vpack.c.bf16 %v1337, %v1336
        %v1397 = vpack.c.bf16 %v1339, %v1338
        %v1398 = vpack.c.bf16 %v1341, %v1340
        %v1399 = vpack.c.bf16 %v1343, %v1342
        %v1400 = vpack.c.bf16 %v1345, %v1344
        %v1401 = vpack.c.bf16 %v1347, %v1346
        %v1402 = vpack.c.bf16 %v1349, %v1348
        %v1403 = vpack.c.bf16 %v1351, %v1350
        %v1404 = vpack.c.bf16 %v1353, %v1352
        %v1405 = vpack.c.bf16 %v1355, %v1354
        %v1406 = vpack.c.bf16 %v1357, %v1356
        %v1407 = vpack.c.bf16 %v1359, %v1358
        %v1408 = vpack.c.bf16 %v1361, %v1360
        %v1409 = vpack.c.bf16 %v1363, %v1362
        %v1410 = vpack.c.bf16 %v1365, %v1364
        %v1411 = vpack.c.bf16 %v1367, %v1366
        %v1412 = vpack.c.bf16 %v1369, %v1368
        %v1413 = vpack.c.bf16 %v1371, %v1370
        %v1414 = vpack.c.bf16 %v1373, %v1372
        %v1415 = vpack.c.bf16 %v1375, %v1374
        %v1416 = vpack.c.bf16 %v1377, %v1376
        %v1417 = vpack.c.bf16 %v1379, %v1378
        %v1418 = vpack.c.bf16 %v1381, %v1380
        %v1419 = vpack.c.bf16 %v1383, %v1382
        %v1420 = vpack.c.bf16 %v1385, %v1384
        %v1421 = vpack.c.bf16 %v1387, %v1386
        %v1422 = vpack.c.bf16 %v1389, %v1388
        %v1423 = vpack.c.bf16 %v1391, %v1390
        %v1456 = vunpack.c.l.b16 %v1392
        %v1457 = vunpack.c.h.b16 %v1392
        %v1458 = vunpack.c.l.b16 %v1393
        %v1459 = vunpack.c.h.b16 %v1393
        %v1460 = vunpack.c.l.b16 %v1394
        %v1461 = vunpack.c.h.b16 %v1394
        %v1462 = vunpack.c.l.b16 %v1395
        %v1463 = vunpack.c.h.b16 %v1395
        %v1464 = vunpack.c.l.b16 %v1396
        %v1465 = vunpack.c.h.b16 %v1396
        %v1466 = vunpack.c.l.b16 %v1397
        %v1467 = vunpack.c.h.b16 %v1397
        %v1468 = vunpack.c.l.b16 %v1398
        %v1469 = vunpack.c.h.b16 %v1398
        %v1470 = vunpack.c.l.b16 %v1399
        %v1471 = vunpack.c.h.b16 %v1399
        %v1472 = vunpack.c.l.b16 %v1400
        %v1473 = vunpack.c.h.b16 %v1400
        %v1474 = vunpack.c.l.b16 %v1401
        %v1475 = vunpack.c.h.b16 %v1401
        %v1476 = vunpack.c.l.b16 %v1402
        %v1477 = vunpack.c.h.b16 %v1402
        %v1478 = vunpack.c.l.b16 %v1403
        %v1479 = vunpack.c.h.b16 %v1403
        %v1480 = vunpack.c.l.b16 %v1404
        %v1481 = vunpack.c.h.b16 %v1404
        %v1482 = vunpack.c.l.b16 %v1405
        %v1483 = vunpack.c.h.b16 %v1405
        %v1484 = vunpack.c.l.b16 %v1406
        %v1485 = vunpack.c.h.b16 %v1406
        %v1486 = vunpack.c.l.b16 %v1407
        %v1487 = vunpack.c.h.b16 %v1407
        %v1488 = vunpack.c.l.b16 %v1408
        %v1489 = vunpack.c.h.b16 %v1408
        %v1490 = vunpack.c.l.b16 %v1409
        %v1491 = vunpack.c.h.b16 %v1409
        %v1492 = vunpack.c.l.b16 %v1410
        %v1493 = vunpack.c.h.b16 %v1410
        %v1494 = vunpack.c.l.b16 %v1411
        %v1495 = vunpack.c.h.b16 %v1411
        %v1496 = vunpack.c.l.b16 %v1412
        %v1497 = vunpack.c.h.b16 %v1412
        %v1498 = vunpack.c.l.b16 %v1413
        %v1499 = vunpack.c.h.b16 %v1413
        %v1500 = vunpack.c.l.b16 %v1414
        %v1501 = vunpack.c.h.b16 %v1414
        %v1502 = vunpack.c.l.b16 %v1415
        %v1503 = vunpack.c.h.b16 %v1415
        %v1504 = vunpack.c.l.b16 %v1416
        %v1505 = vunpack.c.h.b16 %v1416
        %v1506 = vunpack.c.l.b16 %v1417
        %v1507 = vunpack.c.h.b16 %v1417
        %v1508 = vunpack.c.l.b16 %v1418
        %v1509 = vunpack.c.h.b16 %v1418
        %v1510 = vunpack.c.l.b16 %v1419
        %v1511 = vunpack.c.h.b16 %v1419
        %v1512 = vunpack.c.l.b16 %v1420
        %v1513 = vunpack.c.h.b16 %v1420
        %v1514 = vunpack.c.l.b16 %v1421
        %v1515 = vunpack.c.h.b16 %v1421
        %v1516 = vunpack.c.l.b16 %v1422
        %v1517 = vunpack.c.h.b16 %v1422
        %v1518 = vunpack.c.l.b16 %v1423
        %v1519 = vunpack.c.h.b16 %v1423
        %v1520 = vpack.c.b16 %v1456, %v1456
        %v1521 = vpack.c.b16 %v1457, %v1457
        %v1522 = vpack.c.b16 %v1458, %v1458
        %v1523 = vpack.c.b16 %v1459, %v1459
        %v1524 = vpack.c.b16 %v1460, %v1460
        %v1525 = vpack.c.b16 %v1461, %v1461
        %v1526 = vpack.c.b16 %v1462, %v1462
        %v1527 = vpack.c.b16 %v1463, %v1463
        %v1528 = vpack.c.b16 %v1464, %v1464
        %v1529 = vpack.c.b16 %v1465, %v1465
        %v1530 = vpack.c.b16 %v1466, %v1466
        %v1531 = vpack.c.b16 %v1467, %v1467
        %v1532 = vpack.c.b16 %v1468, %v1468
        %v1533 = vpack.c.b16 %v1469, %v1469
        %v1534 = vpack.c.b16 %v1470, %v1470
        %v1535 = vpack.c.b16 %v1471, %v1471
        %v1536 = vpack.c.b16 %v1472, %v1472
        %v1537 = vpack.c.b16 %v1473, %v1473
        %v1538 = vpack.c.b16 %v1474, %v1474
        %v1539 = vpack.c.b16 %v1475, %v1475
        %v1540 = vpack.c.b16 %v1476, %v1476
        %v1541 = vpack.c.b16 %v1477, %v1477
        %v1542 = vpack.c.b16 %v1478, %v1478
        %v1543 = vpack.c.b16 %v1479, %v1479
        %v1544 = vpack.c.b16 %v1480, %v1480
        %v1545 = vpack.c.b16 %v1481, %v1481
        %v1546 = vpack.c.b16 %v1482, %v1482
        %v1547 = vpack.c.b16 %v1483, %v1483
        %v1548 = vpack.c.b16 %v1484, %v1484
        %v1549 = vpack.c.b16 %v1485, %v1485
        %v1550 = vpack.c.b16 %v1486, %v1486
        %v1551 = vpack.c.b16 %v1487, %v1487
        %v1552 = vpack.c.b16 %v1488, %v1488
        %v1553 = vpack.c.b16 %v1489, %v1489
        %v1554 = vpack.c.b16 %v1490, %v1490
        %v1555 = vpack.c.b16 %v1491, %v1491
        %v1556 = vpack.c.b16 %v1492, %v1492
        %v1557 = vpack.c.b16 %v1493, %v1493
        %v1558 = vpack.c.b16 %v1494, %v1494
        %v1559 = vpack.c.b16 %v1495, %v1495
        %v1560 = vpack.c.b16 %v1496, %v1496
        %v1561 = vpack.c.b16 %v1497, %v1497
        %v1562 = vpack.c.b16 %v1498, %v1498
        %v1563 = vpack.c.b16 %v1499, %v1499
        %v1564 = vpack.c.b16 %v1500, %v1500
        %v1565 = vpack.c.b16 %v1501, %v1501
        %v1566 = vpack.c.b16 %v1502, %v1502
        %v1567 = vpack.c.b16 %v1503, %v1503
        %v1568 = vpack.c.b16 %v1504, %v1504
        %v1569 = vpack.c.b16 %v1505, %v1505
        %v1570 = vpack.c.b16 %v1506, %v1506
        %v1571 = vpack.c.b16 %v1507, %v1507
        %v1572 = vpack.c.b16 %v1508, %v1508
        %v1573 = vpack.c.b16 %v1509, %v1509
        %v1574 = vpack.c.b16 %v1510, %v1510
        %v1575 = vpack.c.b16 %v1511, %v1511
        %v1576 = vpack.c.b16 %v1512, %v1512
        %v1577 = vpack.c.b16 %v1513, %v1513
        %v1578 = vpack.c.b16 %v1514, %v1514
        %v1579 = vpack.c.b16 %v1515, %v1515
        %v1580 = vpack.c.b16 %v1516, %v1516
        %v1581 = vpack.c.b16 %v1517, %v1517
        %v1582 = vpack.c.b16 %v1518, %v1518
        %v1583 = vpack.c.b16 %v1519, %v1519
        %1648 = vst [vmem:[%s211] sm:$0xf] %v1520
        %1649 = vst [vmem:[%s211 + $0x4] sm:$0xf] %v1521
        %1650 = vst [vmem:[%s211 + $0x8] sm:$0xf] %v1522
        %1651 = vst [vmem:[%s211 + $0xc] sm:$0xf] %v1523
        %1652 = vst [vmem:[%s211 + $0x10] sm:$0xf] %v1524
        %1653 = vst [vmem:[%s211 + $0x14] sm:$0xf] %v1525
        %1654 = vst [vmem:[%s211 + $0x18] sm:$0xf] %v1526
        %1655 = vst [vmem:[%s211 + $0x1c] sm:$0xf] %v1527
        %1656 = vst [vmem:[%s211 + $0x20] sm:$0xf] %v1528
        %1657 = vst [vmem:[%s211 + $0x24] sm:$0xf] %v1529
        %1658 = vst [vmem:[%s211 + $0x28] sm:$0xf] %v1530
        %1659 = vst [vmem:[%s211 + $0x2c] sm:$0xf] %v1531
        %1660 = vst [vmem:[%s211 + $0x30] sm:$0xf] %v1532
        %1661 = vst [vmem:[%s211 + $0x34] sm:$0xf] %v1533
        %1662 = vst [vmem:[%s211 + $0x38] sm:$0xf] %v1534
        %1663 = vst [vmem:[%s211 + $0x3c] sm:$0xf] %v1535
        %1664 = vst [vmem:[%s211 + $0x40] sm:$0xf] %v1536
        %1665 = vst [vmem:[%s211 + $0x44] sm:$0xf] %v1537
        %1666 = vst [vmem:[%s211 + $0x48] sm:$0xf] %v1538
        %1667 = vst [vmem:[%s211 + $0x4c] sm:$0xf] %v1539
        %1668 = vst [vmem:[%s211 + $0x50] sm:$0xf] %v1540
        %1669 = vst [vmem:[%s211 + $0x54] sm:$0xf] %v1541
        %1670 = vst [vmem:[%s211 + $0x58] sm:$0xf] %v1542
        %1671 = vst [vmem:[%s211 + $0x5c] sm:$0xf] %v1543
        %1672 = vst [vmem:[%s211 + $0x60] sm:$0xf] %v1544
        %1673 = vst [vmem:[%s211 + $0x64] sm:$0xf] %v1545
        %1674 = vst [vmem:[%s211 + $0x68] sm:$0xf] %v1546
        %1675 = vst [vmem:[%s211 + $0x6c] sm:$0xf] %v1547
        %1676 = vst [vmem:[%s211 + $0x70] sm:$0xf] %v1548
        %1677 = vst [vmem:[%s211 + $0x74] sm:$0xf] %v1549
        %1678 = vst [vmem:[%s211 + $0x78] sm:$0xf] %v1550
        %1679 = vst [vmem:[%s211 + $0x7c] sm:$0xf] %v1551
        %1680 = vst [vmem:[%s211 + $0x80] sm:$0xf] %v1552
        %1681 = vst [vmem:[%s211 + $0x84] sm:$0xf] %v1553
        %1682 = vst [vmem:[%s211 + $0x88] sm:$0xf] %v1554
        %1683 = vst [vmem:[%s211 + $0x8c] sm:$0xf] %v1555
        %1684 = vst [vmem:[%s211 + $0x90] sm:$0xf] %v1556
        %1685 = vst [vmem:[%s211 + $0x94] sm:$0xf] %v1557
        %1686 = vst [vmem:[%s211 + $0x98] sm:$0xf] %v1558
        %1687 = vst [vmem:[%s211 + $0x9c] sm:$0xf] %v1559
        %1688 = vst [vmem:[%s211 + $0xa0] sm:$0xf] %v1560
        %1689 = vst [vmem:[%s211 + $0xa4] sm:$0xf] %v1561
        %1690 = vst [vmem:[%s211 + $0xa8] sm:$0xf] %v1562
        %1691 = vst [vmem:[%s211 + $0xac] sm:$0xf] %v1563
        %1692 = vst [vmem:[%s211 + $0xb0] sm:$0xf] %v1564
        %1693 = vst [vmem:[%s211 + $0xb4] sm:$0xf] %v1565
        %1694 = vst [vmem:[%s211 + $0xb8] sm:$0xf] %v1566
        %1695 = vst [vmem:[%s211 + $0xbc] sm:$0xf] %v1567
        %1696 = vst [vmem:[%s211 + $0xc0] sm:$0xf] %v1568
        %1697 = vst [vmem:[%s211 + $0xc4] sm:$0xf] %v1569
        %1698 = vst [vmem:[%s211 + $0xc8] sm:$0xf] %v1570
        %1699 = vst [vmem:[%s211 + $0xcc] sm:$0xf] %v1571
        %1700 = vst [vmem:[%s211 + $0xd0] sm:$0xf] %v1572
        %1701 = vst [vmem:[%s211 + $0xd4] sm:$0xf] %v1573
        %1702 = vst [vmem:[%s211 + $0xd8] sm:$0xf] %v1574
        %1703 = vst [vmem:[%s211 + $0xdc] sm:$0xf] %v1575
        %1704 = vst [vmem:[%s211 + $0xe0] sm:$0xf] %v1576
        %1705 = vst [vmem:[%s211 + $0xe4] sm:$0xf] %v1577
        %1706 = vst [vmem:[%s211 + $0xe8] sm:$0xf] %v1578
        %1707 = vst [vmem:[%s211 + $0xec] sm:$0xf] %v1579
        %1708 = vst [vmem:[%s211 + $0xf0] sm:$0xf] %v1580
        %1709 = vst [vmem:[%s211 + $0xf4] sm:$0xf] %v1581
        %1710 = vst [vmem:[%s211 + $0xf8] sm:$0xf] %v1582
        %1711 = vst [vmem:[%s211 + $0xfc] sm:$0xf] %v1583
      $region48: #{_lambda_.8} parent=35 // pred_fallthru
        _
      %s1712 = smul.u32 64, %s20
      %p1713 = scmp.lt.s32.totalorder %s1712, 63
      %s1714 = scalar_select %p1713, %s1712, 63
      %s1715 = smul.addr %s1714, 4
      %s1716 = scalar_lea.vmem %s4, %s1715
      // Predicated region
      $region49: #{_lambda_.8} parent=35 // pred_check
        %p1717 = pneg %p134
      $region50: #{_lambda_.8} parent=35 // pred_check_branch
        %1719 = sbr.rel (%p1717) target = $region52
      $region51: #{_lambda_.8} parent=35 // pred_region
        %s1720 = smul.u32 64, %s20
      $region52: #{_lambda_.8} parent=35 // pred_fallthru
        _
      // Predicated region
      $region53: #{_lambda_.8} parent=35 // pred_check
        %p1721 = pneg %p134
      $region54: #{_lambda_.8} parent=35 // pred_check_branch
        %1723 = sbr.rel (%p1721) target = $region56
      $region55: #{_lambda_.8} parent=35 // pred_region
        %s1724 = smul.u32 64, %s20
        %p1725 = scmp.lt.s32.totalorder %s1724, 63
        %s1726 = scalar_select %p1725, %s1724, 63
        %s1727 = smul.addr %s1726, 4
        %s1728 = scalar_lea.vmem %s4, %s1727
      $region56: #{_lambda_.8} parent=35 // pred_fallthru
        _
    $region36: #{_lambda_.8} parent=5 // pred_fallthru
      _
    %p1729 = scmp.le.s32.totalorder 2, %s10
    // Predicated region
    $region57: #{_lambda_.8} parent=5 // pred_check
      %p1730 = pneg %p1729
    $region58: #{_lambda_.8} parent=5 // pred_check_branch
      %1732 = sbr.rel (%p1730) target = $region60
    $region59: #{_lambda_.8} parent=5 // pred_region
      %s1733 = ssub.s32 %s10, 2
    $region60: #{_lambda_.8} parent=5 // pred_fallthru
      _
  $region6: #{_lambda_.8} parent=0 // loop_footer
    %s14 = sadd.s32 1, %s10
  $region7: #{_lambda_.8} parent=0 // loop_footer_branch
    %9 = sbr.rel target = $region3
  $region8: #{_lambda_.8} parent=0 // loop_exit
    _

// kernel: _lambda_.10
$region0: #{_lambda_.10}
  #allocation0 [shape = 'u32[]', space=smem, size = 0x4, offset = 0x4, fixed_abs, tag = 'smem constant byte address 0x4 - core index']
  #allocation1 [shape = 'u32[144,128]{1,0:T(1,128)}', space=vmem, size = 0x12000, scoped, tag = 'internal scratch']
  #allocation2 [shape = 'f32[1,128]{1,0:T(1,128)}', space=vmem, size = 0x200, scoped, tag = 'scratch operand']
  #allocation3 [shape = 'f32[1,128]{1,0:T(1,128)}', space=vmem, size = 0x200, scoped, tag = 'scratch operand']
  %s0 = inlined_call_operand.vmem [shape: bf16[128,128], index: 0, kind: input, shape index: {}]
  %s1 = inlined_call_operand.vmem [shape: bf16[128,128], index: 1, kind: input, shape index: {}]
  %s2 = inlined_call_operand.vmem [shape: f32[1,128], index: 2, kind: input, shape index: {}]
  %s3 = inlined_call_operand.vmem [shape: f32[1,128], index: 3, kind: input, shape index: {}]
  %s4 = inlined_call_operand.vmem [shape: bf16[128,128], index: 4, kind: output, shape index: {}]
  %s5 = sld [smem:[#allocation0]]
  $region61: #{_lambda_.10} parent=0
    _
  %s7 = ssub.s32 1, %s5
  %s8 = scalar_select 0, %s7, %s5
  loop: start=0, step=1, limit=4
  $region2: #{_lambda_.10} parent=0 // loop_pre_header
    _
  $region3: #{_lambda_.10} parent=0 // loop_header
    %s10 = sphi 0, %s14
    %p11 = scmp.ge.s32.totalorder %s10, 4
    %s17 = sphi 0, %s29
    %s18 = sphi 0, %s25
    %s19 = sphi 0, %s17
    %s20 = sphi 0, %s18
    %s21 = sphi 0, %s19
    %s22 = sphi 0, %s20
    %s32 = sphi 0, %s34
    %s35 = sphi 0, %s32
    %s36 = sphi 0, %s35
    %s52 = sphi 0, %s36
    %s56 = sphi 0, %s56
    %s58 = sphi 0, %s56
    %s59 = sphi 0, %s58
    %s73 = sphi 0, %s59
    %s77 = sphi 0, %s77
    %s79 = sphi 0, %s77
    %s80 = sphi 0, %s79
    %s94 = sphi 0, %s80
    %s98 = sphi 0, %s98
    %s100 = sphi 0, %s98
    %s101 = sphi 0, %s100
    %s115 = sphi 0, %s101
    %s121 = sphi 0, %s123
    %s124 = sphi 0, %s121
    %s125 = sphi 0, %s124
    %s141 = sphi 0, %s125
  $region4: #{_lambda_.10} parent=0 // loop_header_branch
    %13 = sbr.rel (%p11) target = $region8
  $region5: #{_lambda_.10} parent=0 // loop_body
    %s15 = ssub.s32 %s10, 1
    %s16 = ssub.s32 %s10, 2
    %s23 = sadd.s32 1, %s18
    %p24 = scmp.ge.s32.totalorder %s23, 1
    %s25 = scalar_select %p24, 0, %s23
    %s26 = sadd.s32 1, %s17
    %s27 = scalar_select %p24, %s26, %s17
    %p28 = scmp.ge.s32.totalorder %s27, 2
    %s29 = scalar_select %p28, 0, %s27
    %s30 = ssub.s32 %s18, %s25
    %p31 = scmp.eq.s32.totalorder %s30, 0
    %s33 = sadd.s32 %s32, 1
    %s34 = scalar_select %p31, %s32, %s33
    %p37 = pneg %p31
    %p38 = scmp.eq.s32.totalorder %s10, 1
    %p39 = por %p37, %p38
    %p40 = scmp.ne.s32.totalorder %s32, %s35
    %p41 = scmp.eq.s32.totalorder %s10, 0
    %p42 = por %p40, %p41
    %p43 = scmp.ne.s32.totalorder %s32, %s35
    %p44 = scmp.eq.s32.totalorder %s15, 1
    %p45 = por %p43, %p44
    %p46 = scmp.ne.s32.totalorder %s35, %s36
    %p47 = scmp.eq.s32.totalorder %s15, 0
    %p48 = por %p46, %p47
    %p49 = scmp.ne.s32.totalorder %s35, %s36
    %p50 = scmp.eq.s32.totalorder %s16, 1
    %p51 = por %p49, %p50
    %p53 = scmp.ne.s32.totalorder %s36, %s52
    %p54 = scmp.eq.s32.totalorder %s16, 0
    %p55 = por %p53, %p54
    %s57 = sadd.s32 %s56, 1
    %p60 = scmp.eq.s32.totalorder %s10, 1
    %p61 = scmp.ne.s32.totalorder %s56, %s58
    %p62 = scmp.eq.s32.totalorder %s10, 0
    %p63 = por %p61, %p62
    %p64 = scmp.ne.s32.totalorder %s56, %s58
    %p65 = scmp.eq.s32.totalorder %s15, 1
    %p66 = por %p64, %p65
    %p67 = scmp.ne.s32.totalorder %s58, %s59
    %p68 = scmp.eq.s32.totalorder %s15, 0
    %p69 = por %p67, %p68
    %p70 = scmp.ne.s32.totalorder %s58, %s59
    %p71 = scmp.eq.s32.totalorder %s16, 1
    %p72 = por %p70, %p71
    %p74 = scmp.ne.s32.totalorder %s59, %s73
    %p75 = scmp.eq.s32.totalorder %s16, 0
    %p76 = por %p74, %p75
    %s78 = sadd.s32 %s77, 1
    %p81 = scmp.eq.s32.totalorder %s10, 1
    %p82 = scmp.ne.s32.totalorder %s77, %s79
    %p83 = scmp.eq.s32.totalorder %s10, 0
    %p84 = por %p82, %p83
    %p85 = scmp.ne.s32.totalorder %s77, %s79
    %p86 = scmp.eq.s32.totalorder %s15, 1
    %p87 = por %p85, %p86
    %p88 = scmp.ne.s32.totalorder %s79, %s80
    %p89 = scmp.eq.s32.totalorder %s15, 0
    %p90 = por %p88, %p89
    %p91 = scmp.ne.s32.totalorder %s79, %s80
    %p92 = scmp.eq.s32.totalorder %s16, 1
    %p93 = por %p91, %p92
    %p95 = scmp.ne.s32.totalorder %s80, %s94
    %p96 = scmp.eq.s32.totalorder %s16, 0
    %p97 = por %p95, %p96
    %s99 = sadd.s32 %s98, 1
    %p102 = scmp.eq.s32.totalorder %s10, 1
    %p103 = scmp.ne.s32.totalorder %s98, %s100
    %p104 = scmp.eq.s32.totalorder %s10, 0
    %p105 = por %p103, %p104
    %p106 = scmp.ne.s32.totalorder %s98, %s100
    %p107 = scmp.eq.s32.totalorder %s15, 1
    %p108 = por %p106, %p107
    %p109 = scmp.ne.s32.totalorder %s100, %s101
    %p110 = scmp.eq.s32.totalorder %s15, 0
    %p111 = por %p109, %p110
    %p112 = scmp.ne.s32.totalorder %s100, %s101
    %p113 = scmp.eq.s32.totalorder %s16, 1
    %p114 = por %p112, %p113
    %p116 = scmp.ne.s32.totalorder %s101, %s115
    %p117 = scmp.eq.s32.totalorder %s16, 0
    %p118 = por %p116, %p117
    %s119 = ssub.s32 %s18, %s25
    %p120 = scmp.eq.s32.totalorder %s119, 0
    %s122 = sadd.s32 %s121, 1
    %s123 = scalar_select %p120, %s121, %s122
    %p126 = pneg %p120
    %p127 = scmp.eq.s32.totalorder %s10, 1
    %p128 = por %p126, %p127
    %p129 = scmp.ne.s32.totalorder %s121, %s124
    %p130 = scmp.eq.s32.totalorder %s10, 0
    %p131 = por %p129, %p130
    %p132 = scmp.ne.s32.totalorder %s121, %s124
    %p133 = scmp.eq.s32.totalorder %s15, 1
    %p134 = por %p132, %p133
    %p135 = scmp.ne.s32.totalorder %s124, %s125
    %p136 = scmp.eq.s32.totalorder %s15, 0
    %p137 = por %p135, %p136
    %p138 = scmp.ne.s32.totalorder %s124, %s125
    %p139 = scmp.eq.s32.totalorder %s16, 1
    %p140 = por %p138, %p139
    %p142 = scmp.ne.s32.totalorder %s125, %s141
    %p143 = scmp.eq.s32.totalorder %s16, 0
    %p144 = por %p142, %p143
    %p145 = scmp.le.s32.totalorder 1, %s10
    %p146 = scmp.lt.s32.totalorder %s10, 3
    %p147 = pnand %p145, %p146
    %p148 = pneg %p147
    // Predicated region
    $region9: #{_lambda_.10} parent=5 // pred_check
      _
    $region10: #{_lambda_.10} parent=5 // pred_check_branch
      %150 = sbr.rel (%p147) target = $region12
    $region11: #{_lambda_.10} parent=5 // pred_region
      %s151 = ssub.s32 %s10, 1
      // Predicated region
      $region13: #{_lambda_.10} parent=11 // pred_check
        %p152 = pneg %p48
      $region14: #{_lambda_.10} parent=11 // pred_check_branch
        %154 = sbr.rel (%p152) target = $region16
      $region15: #{_lambda_.10} parent=11 // pred_region
        %s155 = smul.u32 16, %s20
        %p156 = scmp.lt.s32.totalorder %s155, 15
        %s157 = scalar_select %p156, %s155, 15
        %s158 = smul.addr %s157, 4
        %s159 = scalar_lea.vmem %s0, %s158
        %s160 = smul.u32 16, %s20
      $region16: #{_lambda_.10} parent=11 // pred_fallthru
        _
      // Predicated region
      $region17: #{_lambda_.10} parent=11 // pred_check
        %p161 = pneg %p69
      $region18: #{_lambda_.10} parent=11 // pred_check_branch
        %163 = sbr.rel (%p161) target = $region20
      $region19: #{_lambda_.10} parent=11 // pred_region
        _
      $region20: #{_lambda_.10} parent=11 // pred_fallthru
        _
      // Predicated region
      $region21: #{_lambda_.10} parent=11 // pred_check
        %p164 = pneg %p90
      $region22: #{_lambda_.10} parent=11 // pred_check_branch
        %166 = sbr.rel (%p164) target = $region24
      $region23: #{_lambda_.10} parent=11 // pred_region
        _
      $region24: #{_lambda_.10} parent=11 // pred_fallthru
        _
      // Predicated region
      $region25: #{_lambda_.10} parent=11 // pred_check
        %p167 = pneg %p111
      $region26: #{_lambda_.10} parent=11 // pred_check_branch
        %169 = sbr.rel (%p167) target = $region28
      $region27: #{_lambda_.10} parent=11 // pred_region
        _
      $region28: #{_lambda_.10} parent=11 // pred_fallthru
        _
    $region12: #{_lambda_.10} parent=5 // pred_fallthru
      _
    %p170 = scmp.lt.s32.totalorder %s10, 2
    // Predicated region
    $region29: #{_lambda_.10} parent=5 // pred_check
      %p171 = pneg %p170
    $region30: #{_lambda_.10} parent=5 // pred_check_branch
      %173 = sbr.rel (%p171) target = $region32
    $region31: #{_lambda_.10} parent=5 // pred_region
      _
    $region32: #{_lambda_.10} parent=5 // pred_fallthru
      _
    %p174 = scmp.le.s32.totalorder 1, %s10
    %p175 = scmp.lt.s32.totalorder %s10, 3
    %p176 = pnand %p174, %p175
    %p177 = pneg %p176
    // Predicated region
    $region33: #{_lambda_.10} parent=5 // pred_check
      _
    $region34: #{_lambda_.10} parent=5 // pred_check_branch
      %179 = sbr.rel (%p176) target = $region36
    $region35: #{_lambda_.10} parent=5 // pred_region
      %s180 = ssub.s32 %s10, 1
      %s181 = smul.u32 16, %s20
      %p182 = scmp.lt.s32.totalorder %s181, 15
      %s183 = scalar_select %p182, %s181, 15
      %s184 = smul.addr %s183, 4
      %s185 = scalar_lea.vmem %s0, %s184
      %p186 = pneg %p48
      %p187 = pneg %p45
      %p188 = pneg %p69
      %p189 = pneg %p66
      %p190 = pneg %p90
      %p191 = pneg %p87
      %p192 = pneg %p111
      %p193 = pneg %p108
      %p194 = pneg %p137
      %p195 = pneg %p134
      %s196 = smul.u32 16, %s20
      %p197 = scmp.lt.s32.totalorder %s196, 15
      %s198 = scalar_select %p197, %s196, 15
      %s199 = smul.addr %s198, 4
      %s200 = scalar_lea.vmem %s4, %s199
      %s201 = smul.u32 16, %s20
      %p202 = scmp.lt.s32.totalorder %s201, 15
      %s203 = scalar_select %p202, %s201, 15
      %s204 = smul.addr %s203, 4
      %s205 = scalar_lea.vmem %s0, %s204
      %s206 = smul.u32 16, %s20
      %s207 = smul.u32 16, %s20
      %p208 = scmp.lt.s32.totalorder %s207, 15
      %s209 = scalar_select %p208, %s207, 15
      %s210 = smul.addr %s209, 4
      %s211 = scalar_lea.vmem %s4, %s210
      %s212 = smul.u32 16, %s20
      %v214 = vld [vmem:[%s205] sm:$0xf]
      %v215 = vld [vmem:[%s205 + $0x4] sm:$0xf]
      %v216 = vld [vmem:[%s205 + $0x8] sm:$0xf]
      %v217 = vld [vmem:[%s205 + $0xc] sm:$0xf]
      %v218 = vld [vmem:[%s205 + $0x10] sm:$0xf]
      %v219 = vld [vmem:[%s205 + $0x14] sm:$0xf]
      %v220 = vld [vmem:[%s205 + $0x18] sm:$0xf]
      %v221 = vld [vmem:[%s205 + $0x1c] sm:$0xf]
      %v222 = vld [vmem:[%s205 + $0x20] sm:$0xf]
      %v223 = vld [vmem:[%s205 + $0x24] sm:$0xf]
      %v224 = vld [vmem:[%s205 + $0x28] sm:$0xf]
      %v225 = vld [vmem:[%s205 + $0x2c] sm:$0xf]
      %v226 = vld [vmem:[%s205 + $0x30] sm:$0xf]
      %v227 = vld [vmem:[%s205 + $0x34] sm:$0xf]
      %v228 = vld [vmem:[%s205 + $0x38] sm:$0xf]
      %v229 = vld [vmem:[%s205 + $0x3c] sm:$0xf]
      %v230 = vld [vmem:[%s1] sm:$0xf]
      %v231 = vld [vmem:[%s1 + $0x4] sm:$0xf]
      %v232 = vld [vmem:[%s1 + $0x8] sm:$0xf]
      %v233 = vld [vmem:[%s1 + $0xc] sm:$0xf]
      %v234 = vld [vmem:[%s1 + $0x10] sm:$0xf]
      %v235 = vld [vmem:[%s1 + $0x14] sm:$0xf]
      %v236 = vld [vmem:[%s1 + $0x18] sm:$0xf]
      %v237 = vld [vmem:[%s1 + $0x1c] sm:$0xf]
      %v238 = vld [vmem:[%s1 + $0x20] sm:$0xf]
      %v239 = vld [vmem:[%s1 + $0x24] sm:$0xf]
      %v240 = vld [vmem:[%s1 + $0x28] sm:$0xf]
      %v241 = vld [vmem:[%s1 + $0x2c] sm:$0xf]
      %v242 = vld [vmem:[%s1 + $0x30] sm:$0xf]
      %v243 = vld [vmem:[%s1 + $0x34] sm:$0xf]
      %v244 = vld [vmem:[%s1 + $0x38] sm:$0xf]
      %v245 = vld [vmem:[%s1 + $0x3c] sm:$0xf]
      %v262 = vunpack.c.l.b16 %v214
      %v263 = vunpack.c.l.b16 %v215
      %v264 = vunpack.c.l.b16 %v216
      %v265 = vunpack.c.l.b16 %v217
      %v266 = vunpack.c.l.b16 %v218
      %v267 = vunpack.c.l.b16 %v219
      %v268 = vunpack.c.l.b16 %v220
      %v269 = vunpack.c.l.b16 %v221
      %v270 = vunpack.c.l.b16 %v222
      %v271 = vunpack.c.l.b16 %v223
      %v272 = vunpack.c.l.b16 %v224
      %v273 = vunpack.c.l.b16 %v225
      %v274 = vunpack.c.l.b16 %v226
      %v275 = vunpack.c.l.b16 %v227
      %v276 = vunpack.c.l.b16 %v228
      %v277 = vunpack.c.l.b16 %v229
      %v278 = vpack.c.b16 %v263, %v262
      %v279 = vpack.c.b16 %v265, %v264
      %v280 = vpack.c.b16 %v267, %v266
      %v281 = vpack.c.b16 %v269, %v268
      %v282 = vpack.c.b16 %v271, %v270
      %v283 = vpack.c.b16 %v273, %v272
      %v284 = vpack.c.b16 %v275, %v274
      %v285 = vpack.c.b16 %v277, %v276
      %v310 = vunpack.c.l.b16 %v230
      %v311 = vunpack.c.l.b16 %v231
      %v312 = vunpack.c.l.b16 %v232
      %v313 = vunpack.c.l.b16 %v233
      %v314 = vunpack.c.l.b16 %v234
      %v315 = vunpack.c.l.b16 %v235
      %v316 = vunpack.c.l.b16 %v236
      %v317 = vunpack.c.l.b16 %v237
      %v318 = vunpack.c.l.b16 %v238
      %v319 = vunpack.c.l.b16 %v239
      %v320 = vunpack.c.l.b16 %v240
      %v321 = vunpack.c.l.b16 %v241
      %v322 = vunpack.c.l.b16 %v242
      %v323 = vunpack.c.l.b16 %v243
      %v324 = vunpack.c.l.b16 %v244
      %v325 = vunpack.c.l.b16 %v245
      %v326 = vpack.c.b16 %v311, %v310
      %v327 = vpack.c.b16 %v313, %v312
      %v328 = vpack.c.b16 %v315, %v314
      %v329 = vpack.c.b16 %v317, %v316
      %v330 = vpack.c.b16 %v319, %v318
      %v331 = vpack.c.b16 %v321, %v320
      %v332 = vpack.c.b16 %v323, %v322
      %v333 = vpack.c.b16 %v325, %v324
      %342 = vmatprep.subr.bf16.mxu0 0
      %343 = vmatpush1.bf16.msra.mxu0 %v333
      %344 = vmatprep.subr.bf16.mxu0 0
      %345 = vmatpush1.bf16.msra.mxu0 %v332
      %346 = vmatprep.subr.bf16.mxu0 0
      %347 = vmatpush1.bf16.msra.mxu0 %v331
      %348 = vmatprep.subr.bf16.mxu0 0
      %349 = vmatpush1.bf16.msra.mxu0 %v330
      %350 = vmatprep.subr.bf16.mxu0 0
      %351 = vmatpush1.bf16.msra.mxu0 %v329
      %352 = vmatprep.subr.bf16.mxu0 0
      %353 = vmatpush1.bf16.msra.mxu0 %v328
      %354 = vmatprep.subr.bf16.mxu0 0
      %355 = vmatpush1.bf16.msra.mxu0 %v327
      %356 = vmatprep.subr.bf16.mxu0 0
      %357 = vmatpush1.bf16.msra.mxu0 %v326
      %358 = vmatprep.subr.bf16.mxu0 0
      %359 = vmatpush2.bf16.msra.mxu0 0
      %360 = vmatprep.subr.bf16.mxu0 0
      %361 = vmatpush2.bf16.msra.mxu0 0
      %362 = vmatprep.subr.bf16.mxu0 0
      %363 = vmatpush2.bf16.msra.mxu0 0
      %364 = vmatprep.subr.bf16.mxu0 0
      %365 = vmatpush2.bf16.msra.mxu0 0
      %366 = vmatprep.subr.bf16.mxu0 0
      %367 = vmatpush2.bf16.msra.mxu0 0
      %368 = vmatprep.subr.bf16.mxu0 0
      %369 = vmatpush2.bf16.msra.mxu0 0
      %370 = vmatprep.subr.bf16.mxu0 0
      %371 = vmatpush2.bf16.msra.mxu0 0
      %372 = vmatprep.subr.bf16.mxu0 0
      %373 = vmatpush2.bf16.msra.mxu0 0
      %374 = vmatprep.mubr.bf16.mxu0 0
      %375 = vmatmul.mubr.bf16.gmra.mxu0 %v278
      %v376 = vpop.f32.mrf.mxu0
      %v377 = vadd.f32 0.0, %v376
      %v378 = vpop.f32.mrf.mxu0
      %v379 = vpop.f32.mrf.mxu0
      %v380 = vadd.f32 0.0, %v379
      %v381 = vpop.f32.mrf.mxu0
      %382 = vmatprep.mubr.bf16.mxu0 0
      %383 = vmatmul.mubr.bf16.gmra.mxu0 %v279
      %v384 = vpop.f32.mrf.mxu0
      %v385 = vadd.f32 0.0, %v384
      %v386 = vpop.f32.mrf.mxu0
      %v387 = vpop.f32.mrf.mxu0
      %v388 = vadd.f32 0.0, %v387
      %v389 = vpop.f32.mrf.mxu0
      %390 = vmatprep.mubr.bf16.mxu0 0
      %391 = vmatmul.mubr.bf16.gmra.mxu0 %v280
      %v392 = vpop.f32.mrf.mxu0
      %v393 = vadd.f32 0.0, %v392
      %v394 = vpop.f32.mrf.mxu0
      %v395 = vpop.f32.mrf.mxu0
      %v396 = vadd.f32 0.0, %v395
      %v397 = vpop.f32.mrf.mxu0
      %398 = vmatprep.mubr.bf16.mxu0 0
      %399 = vmatmul.mubr.bf16.gmra.mxu0 %v281
      %v400 = vpop.f32.mrf.mxu0
      %v401 = vadd.f32 0.0, %v400
      %v402 = vpop.f32.mrf.mxu0
      %v403 = vpop.f32.mrf.mxu0
      %v404 = vadd.f32 0.0, %v403
      %v405 = vpop.f32.mrf.mxu0
      %406 = vmatprep.mubr.bf16.mxu0 0
      %407 = vmatmul.mubr.bf16.gmra.mxu0 %v282
      %v408 = vpop.f32.mrf.mxu0
      %v409 = vadd.f32 0.0, %v408
      %v410 = vpop.f32.mrf.mxu0
      %v411 = vpop.f32.mrf.mxu0
      %v412 = vadd.f32 0.0, %v411
      %v413 = vpop.f32.mrf.mxu0
      %414 = vmatprep.mubr.bf16.mxu0 0
      %415 = vmatmul.mubr.bf16.gmra.mxu0 %v283
      %v416 = vpop.f32.mrf.mxu0
      %v417 = vadd.f32 0.0, %v416
      %v418 = vpop.f32.mrf.mxu0
      %v419 = vpop.f32.mrf.mxu0
      %v420 = vadd.f32 0.0, %v419
      %v421 = vpop.f32.mrf.mxu0
      %422 = vmatprep.mubr.bf16.mxu0 0
      %423 = vmatmul.mubr.bf16.gmra.mxu0 %v284
      %v424 = vpop.f32.mrf.mxu0
      %v425 = vadd.f32 0.0, %v424
      %v426 = vpop.f32.mrf.mxu0
      %v427 = vpop.f32.mrf.mxu0
      %v428 = vadd.f32 0.0, %v427
      %v429 = vpop.f32.mrf.mxu0
      %430 = vmatprep.mubr.bf16.mxu0 0
      %431 = vmatmul.mubr.bf16.gmra.mxu0 %v285
      %v432 = vpop.f32.mrf.mxu0
      %v433 = vadd.f32 0.0, %v432
      %v434 = vpop.f32.mrf.mxu0
      %v435 = vpop.f32.mrf.mxu0
      %v436 = vadd.f32 0.0, %v435
      %v437 = vpop.f32.mrf.mxu0
      %438 = vdwg.mxu0
      %p439 = scmp.eq.s32.totalorder %s19, 0
      %p440 = scmp.eq.s32.totalorder %s20, 0
      %p441 = pnand %p439, %p440
      %p442 = pneg %p441
      // Predicated region
      $region37: #{_lambda_.10} parent=35 // pred_check
        _
      $region38: #{_lambda_.10} parent=35 // pred_check_branch
        %444 = sbr.rel (%p441) target = $region40
      $region39: #{_lambda_.10} parent=35 // pred_region
        %445 = vst [vmem:[#allocation2] sm:$0x1] 0.0
        %446 = vst [vmem:[#allocation3] sm:$0x1] 0.0
      $region40: #{_lambda_.10} parent=35 // pred_fallthru
        _
      // Predicated region
      $region41: #{_lambda_.10} parent=35 // pred_check
        %p447 = pneg %p439
      $region42: #{_lambda_.10} parent=35 // pred_check_branch
        %449 = sbr.rel (%p447) target = $region44
      $region43: #{_lambda_.10} parent=35 // pred_region
        %v450 = vld [vmem:[#allocation2] sm:$0x1]
        %v451 = vadd.f32 %v377, %v380
        %v452 = vadd.f32 %v451, %v385
        %v453 = vadd.f32 %v452, %v388
        %v454 = vadd.f32 %v453, %v393
        %v455 = vadd.f32 %v454, %v396
        %v456 = vadd.f32 %v455, %v401
        %v457 = vadd.f32 %v456, %v404
        %v458 = vadd.f32 %v457, %v409
        %v459 = vadd.f32 %v458, %v412
        %v460 = vadd.f32 %v459, %v417
        %v461 = vadd.f32 %v460, %v420
        %v462 = vadd.f32 %v461, %v425
        %v463 = vadd.f32 %v462, %v428
        %v464 = vadd.f32 %v463, %v433
        %v465 = vadd.f32 %v464, %v436
        %v466 = vrot.slane %v465, 4
        %v467 = vadd.f32 %v465, %v466
        %v468 = vrot.slane %v467, 2
        %v469 = vadd.f32 %v467, %v468
        %v470 = vrot.slane %v469, 1
        %v471 = vadd.f32 %v469, %v470
        %v472 = vadd.f32 %v450, %v471
        %473 = vst [vmem:[#allocation2] sm:$0x1] %v472
        %v474 = vld [vmem:[#allocation3] sm:$0x1]
        %v475 = vmul.f32 %v377, %v377
        %v476 = vmul.f32 %v380, %v380
        %v477 = vmul.f32 %v385, %v385
        %v478 = vmul.f32 %v388, %v388
        %v479 = vmul.f32 %v393, %v393
        %v480 = vmul.f32 %v396, %v396
        %v481 = vmul.f32 %v401, %v401
        %v482 = vmul.f32 %v404, %v404
        %v483 = vmul.f32 %v409, %v409
        %v484 = vmul.f32 %v412, %v412
        %v485 = vmul.f32 %v417, %v417
        %v486 = vmul.f32 %v420, %v420
        %v487 = vmul.f32 %v425, %v425
        %v488 = vmul.f32 %v428, %v428
        %v489 = vmul.f32 %v433, %v433
        %v490 = vmul.f32 %v436, %v436
        %v491 = vadd.f32 %v475, %v476
        %v492 = vadd.f32 %v491, %v477
        %v493 = vadd.f32 %v492, %v478
        %v494 = vadd.f32 %v493, %v479
        %v495 = vadd.f32 %v494, %v480
        %v496 = vadd.f32 %v495, %v481
        %v497 = vadd.f32 %v496, %v482
        %v498 = vadd.f32 %v497, %v483
        %v499 = vadd.f32 %v498, %v484
        %v500 = vadd.f32 %v499, %v485
        %v501 = vadd.f32 %v500, %v486
        %v502 = vadd.f32 %v501, %v487
        %v503 = vadd.f32 %v502, %v488
        %v504 = vadd.f32 %v503, %v489
        %v505 = vadd.f32 %v504, %v490
        %v506 = vrot.slane %v505, 4
        %v507 = vadd.f32 %v505, %v506
        %v508 = vrot.slane %v507, 2
        %v509 = vadd.f32 %v507, %v508
        %v510 = vrot.slane %v509, 1
        %v511 = vadd.f32 %v509, %v510
        %v512 = vadd.f32 %v474, %v511
        %513 = vst [vmem:[#allocation3] sm:$0x1] %v512
      $region44: #{_lambda_.10} parent=35 // pred_fallthru
        _
      %p514 = scmp.eq.s32.totalorder %s19, 1
      // Predicated region
      $region45: #{_lambda_.10} parent=35 // pred_check
        %p515 = pneg %p514
      $region46: #{_lambda_.10} parent=35 // pred_check_branch
        %517 = sbr.rel (%p515) target = $region48
      $region47: #{_lambda_.10} parent=35 // pred_region
        %v518 = vld [vmem:[#allocation2] sm:$0x1]
        %v519 = vmul.f32 %v518, 0.0078125
        %v520 = vld [vmem:[#allocation3] sm:$0x1]
        %v521 = vmul.f32 %v520, 0.0078125
        %v522 = vmul.f32 %v519, %v519
        %v523 = vsub.f32 %v521, %v522
        %v524 = vmax.f32 %v523, 0.0
        %v525 = vadd.f32 %v524, 1e-05
        %v526 = vrsqrt.pop %v525
        %v527 = vld [vmem:[%s2] sm:$0x1]
        %v528 = vmul.f32 %v527, %v526
        %v529 = vld [vmem:[%s3] sm:$0x1]
        %v530 = vmul.f32 %v519, %v528
        %v531 = vsub.f32 %v529, %v530
        %v533 = vlaneseq
        %v534 = vshrl.u32 %v533, 7
        %v535 = vsub.s32 0, %v534
        %v536 = vrot.slane %v528, %v535
        %v538 = vmul.f32 %v377, %v536
        %v539 = vmul.f32 %v380, %v536
        %v540 = vmul.f32 %v385, %v536
        %v541 = vmul.f32 %v388, %v536
        %v542 = vmul.f32 %v393, %v536
        %v543 = vmul.f32 %v396, %v536
        %v544 = vmul.f32 %v401, %v536
        %v545 = vmul.f32 %v404, %v536
        %v546 = vmul.f32 %v409, %v536
        %v547 = vmul.f32 %v412, %v536
        %v548 = vmul.f32 %v417, %v536
        %v549 = vmul.f32 %v420, %v536
        %v550 = vmul.f32 %v425, %v536
        %v551 = vmul.f32 %v428, %v536
        %v552 = vmul.f32 %v433, %v536
        %v553 = vmul.f32 %v436, %v536
        %v555 = vlaneseq
        %v556 = vshrl.u32 %v555, 7
        %v557 = vsub.s32 0, %v556
        %v558 = vrot.slane %v531, %v557
        %v560 = vadd.f32 %v538, %v558
        %v561 = vadd.f32 %v539, %v558
        %v562 = vadd.f32 %v540, %v558
        %v563 = vadd.f32 %v541, %v558
        %v564 = vadd.f32 %v542, %v558
        %v565 = vadd.f32 %v543, %v558
        %v566 = vadd.f32 %v544, %v558
        %v567 = vadd.f32 %v545, %v558
        %v568 = vadd.f32 %v546, %v558
        %v569 = vadd.f32 %v547, %v558
        %v570 = vadd.f32 %v548, %v558
        %v571 = vadd.f32 %v549, %v558
        %v572 = vadd.f32 %v550, %v558
        %v573 = vadd.f32 %v551, %v558
        %v574 = vadd.f32 %v552, %v558
        %v575 = vadd.f32 %v553, %v558
        %vm576 = vcmp.gt.f32.partialorder %v560, 0.0
        %vm577 = vcmp.gt.f32.partialorder %v561, 0.0
        %vm578 = vcmp.gt.f32.partialorder %v562, 0.0
        %vm579 = vcmp.gt.f32.partialorder %v563, 0.0
        %vm580 = vcmp.gt.f32.partialorder %v564, 0.0
        %vm581 = vcmp.gt.f32.partialorder %v565, 0.0
        %vm582 = vcmp.gt.f32.partialorder %v566, 0.0
        %vm583 = vcmp.gt.f32.partialorder %v567, 0.0
        %vm584 = vcmp.gt.f32.partialorder %v568, 0.0
        %vm585 = vcmp.gt.f32.partialorder %v569, 0.0
        %vm586 = vcmp.gt.f32.partialorder %v570, 0.0
        %vm587 = vcmp.gt.f32.partialorder %v571, 0.0
        %vm588 = vcmp.gt.f32.partialorder %v572, 0.0
        %vm589 = vcmp.gt.f32.partialorder %v573, 0.0
        %vm590 = vcmp.gt.f32.partialorder %v574, 0.0
        %vm591 = vcmp.gt.f32.partialorder %v575, 0.0
        %v592 = vmul.f32 %v560, 0.2
        %v593 = vmul.f32 %v561, 0.2
        %v594 = vmul.f32 %v562, 0.2
        %v595 = vmul.f32 %v563, 0.2
        %v596 = vmul.f32 %v564, 0.2
        %v597 = vmul.f32 %v565, 0.2
        %v598 = vmul.f32 %v566, 0.2
        %v599 = vmul.f32 %v567, 0.2
        %v600 = vmul.f32 %v568, 0.2
        %v601 = vmul.f32 %v569, 0.2
        %v602 = vmul.f32 %v570, 0.2
        %v603 = vmul.f32 %v571, 0.2
        %v604 = vmul.f32 %v572, 0.2
        %v605 = vmul.f32 %v573, 0.2
        %v606 = vmul.f32 %v574, 0.2
        %v607 = vmul.f32 %v575, 0.2
        %v608 = vsel %vm576, %v560, %v592
        %v609 = vsel %vm577, %v561, %v593
        %v610 = vsel %vm578, %v562, %v594
        %v611 = vsel %vm579, %v563, %v595
        %v612 = vsel %vm580, %v564, %v596
        %v613 = vsel %vm581, %v565, %v597
        %v614 = vsel %vm582, %v566, %v598
        %v615 = vsel %vm583, %v567, %v599
        %v616 = vsel %vm584, %v568, %v600
        %v617 = vsel %vm585, %v569, %v601
        %v618 = vsel %vm586, %v570, %v602
        %v619 = vsel %vm587, %v571, %v603
        %v620 = vsel %vm588, %v572, %v604
        %v621 = vsel %vm589, %v573, %v605
        %v622 = vsel %vm590, %v574, %v606
        %v623 = vsel %vm591, %v575, %v607
        %v624 = vpack.c.bf16 %v609, %v608
        %v625 = vpack.c.bf16 %v611, %v610
        %v626 = vpack.c.bf16 %v613, %v612
        %v627 = vpack.c.bf16 %v615, %v614
        %v628 = vpack.c.bf16 %v617, %v616
        %v629 = vpack.c.bf16 %v619, %v618
        %v630 = vpack.c.bf16 %v621, %v620
        %v631 = vpack.c.bf16 %v623, %v622
        %v640 = vunpack.c.l.b16 %v624
        %v641 = vunpack.c.h.b16 %v624
        %v642 = vunpack.c.l.b16 %v625
        %v643 = vunpack.c.h.b16 %v625
        %v644 = vunpack.c.l.b16 %v626
        %v645 = vunpack.c.h.b16 %v626
        %v646 = vunpack.c.l.b16 %v627
        %v647 = vunpack.c.h.b16 %v627
        %v648 = vunpack.c.l.b16 %v628
        %v649 = vunpack.c.h.b16 %v628
        %v650 = vunpack.c.l.b16 %v629
        %v651 = vunpack.c.h.b16 %v629
        %v652 = vunpack.c.l.b16 %v630
        %v653 = vunpack.c.h.b16 %v630
        %v654 = vunpack.c.l.b16 %v631
        %v655 = vunpack.c.h.b16 %v631
        %v656 = vpack.c.b16 %v640, %v640
        %v657 = vpack.c.b16 %v641, %v641
        %v658 = vpack.c.b16 %v642, %v642
        %v659 = vpack.c.b16 %v643, %v643
        %v660 = vpack.c.b16 %v644, %v644
        %v661 = vpack.c.b16 %v645, %v645
        %v662 = vpack.c.b16 %v646, %v646
        %v663 = vpack.c.b16 %v647, %v647
        %v664 = vpack.c.b16 %v648, %v648
        %v665 = vpack.c.b16 %v649, %v649
        %v666 = vpack.c.b16 %v650, %v650
        %v667 = vpack.c.b16 %v651, %v651
        %v668 = vpack.c.b16 %v652, %v652
        %v669 = vpack.c.b16 %v653, %v653
        %v670 = vpack.c.b16 %v654, %v654
        %v671 = vpack.c.b16 %v655, %v655
        %688 = vst [vmem:[%s211] sm:$0xf] %v656
        %689 = vst [vmem:[%s211 + $0x4] sm:$0xf] %v657
        %690 = vst [vmem:[%s211 + $0x8] sm:$0xf] %v658
        %691 = vst [vmem:[%s211 + $0xc] sm:$0xf] %v659
        %692 = vst [vmem:[%s211 + $0x10] sm:$0xf] %v660
        %693 = vst [vmem:[%s211 + $0x14] sm:$0xf] %v661
        %694 = vst [vmem:[%s211 + $0x18] sm:$0xf] %v662
        %695 = vst [vmem:[%s211 + $0x1c] sm:$0xf] %v663
        %696 = vst [vmem:[%s211 + $0x20] sm:$0xf] %v664
        %697 = vst [vmem:[%s211 + $0x24] sm:$0xf] %v665
        %698 = vst [vmem:[%s211 + $0x28] sm:$0xf] %v666
        %699 = vst [vmem:[%s211 + $0x2c] sm:$0xf] %v667
        %700 = vst [vmem:[%s211 + $0x30] sm:$0xf] %v668
        %701 = vst [vmem:[%s211 + $0x34] sm:$0xf] %v669
        %702 = vst [vmem:[%s211 + $0x38] sm:$0xf] %v670
        %703 = vst [vmem:[%s211 + $0x3c] sm:$0xf] %v671
      $region48: #{_lambda_.10} parent=35 // pred_fallthru
        _
      %s704 = smul.u32 16, %s20
      %p705 = scmp.lt.s32.totalorder %s704, 15
      %s706 = scalar_select %p705, %s704, 15
      %s707 = smul.addr %s706, 4
      %s708 = scalar_lea.vmem %s4, %s707
      // Predicated region
      $region49: #{_lambda_.10} parent=35 // pred_check
        %p709 = pneg %p134
      $region50: #{_lambda_.10} parent=35 // pred_check_branch
        %711 = sbr.rel (%p709) target = $region52
      $region51: #{_lambda_.10} parent=35 // pred_region
        %s712 = smul.u32 16, %s20
      $region52: #{_lambda_.10} parent=35 // pred_fallthru
        _
      // Predicated region
      $region53: #{_lambda_.10} parent=35 // pred_check
        %p713 = pneg %p134
      $region54: #{_lambda_.10} parent=35 // pred_check_branch
        %715 = sbr.rel (%p713) target = $region56
      $region55: #{_lambda_.10} parent=35 // pred_region
        %s716 = smul.u32 16, %s20
        %p717 = scmp.lt.s32.totalorder %s716, 15
        %s718 = scalar_select %p717, %s716, 15
        %s719 = smul.addr %s718, 4
        %s720 = scalar_lea.vmem %s4, %s719
      $region56: #{_lambda_.10} parent=35 // pred_fallthru
        _
    $region36: #{_lambda_.10} parent=5 // pred_fallthru
      _
    %p721 = scmp.le.s32.totalorder 2, %s10
    // Predicated region
    $region57: #{_lambda_.10} parent=5 // pred_check
      %p722 = pneg %p721
    $region58: #{_lambda_.10} parent=5 // pred_check_branch
      %724 = sbr.rel (%p722) target = $region60
    $region59: #{_lambda_.10} parent=5 // pred_region
      %s725 = ssub.s32 %s10, 2
    $region60: #{_lambda_.10} parent=5 // pred_fallthru
      _
  $region6: #{_lambda_.10} parent=0 // loop_footer
    %s14 = sadd.s32 1, %s10
  $region7: #{_lambda_.10} parent=0 // loop_footer_branch
    %9 = sbr.rel target = $region3
  $region8: #{_lambda_.10} parent=0 // loop_exit
    _

// kernel: _lambda_.11
$region0: #{_lambda_.11}
  #allocation0 [shape = 'u32[]', space=smem, size = 0x4, offset = 0x4, fixed_abs, tag = 'smem constant byte address 0x4 - core index']
  #allocation1 [shape = 'u32[144,128]{1,0:T(1,128)}', space=vmem, size = 0x12000, scoped, tag = 'internal scratch']
  #allocation2 [shape = 'f32[1,128]{1,0:T(1,128)}', space=vmem, size = 0x200, scoped, tag = 'scratch operand']
  #allocation3 [shape = 'f32[1,128]{1,0:T(1,128)}', space=vmem, size = 0x200, scoped, tag = 'scratch operand']
  %s0 = inlined_call_operand.vmem [shape: bf16[128,256], index: 0, kind: input, shape index: {}]
  %s1 = inlined_call_operand.vmem [shape: bf16[256,128], index: 1, kind: input, shape index: {}]
  %s2 = inlined_call_operand.vmem [shape: f32[1,128], index: 2, kind: input, shape index: {}]
  %s3 = inlined_call_operand.vmem [shape: f32[1,128], index: 3, kind: input, shape index: {}]
  %s4 = inlined_call_operand.vmem [shape: bf16[128,128], index: 4, kind: output, shape index: {}]
  %s5 = sld [smem:[#allocation0]]
  $region61: #{_lambda_.11} parent=0
    _
  %s7 = ssub.s32 1, %s5
  %s8 = scalar_select 0, %s7, %s5
  loop: start=0, step=1, limit=4
  $region2: #{_lambda_.11} parent=0 // loop_pre_header
    _
  $region3: #{_lambda_.11} parent=0 // loop_header
    %s10 = sphi 0, %s14
    %p11 = scmp.ge.s32.totalorder %s10, 4
    %s17 = sphi 0, %s29
    %s18 = sphi 0, %s25
    %s19 = sphi 0, %s17
    %s20 = sphi 0, %s18
    %s21 = sphi 0, %s19
    %s22 = sphi 0, %s20
    %s32 = sphi 0, %s34
    %s35 = sphi 0, %s32
    %s36 = sphi 0, %s35
    %s52 = sphi 0, %s36
    %s56 = sphi 0, %s56
    %s58 = sphi 0, %s56
    %s59 = sphi 0, %s58
    %s73 = sphi 0, %s59
    %s77 = sphi 0, %s77
    %s79 = sphi 0, %s77
    %s80 = sphi 0, %s79
    %s94 = sphi 0, %s80
    %s98 = sphi 0, %s98
    %s100 = sphi 0, %s98
    %s101 = sphi 0, %s100
    %s115 = sphi 0, %s101
    %s121 = sphi 0, %s123
    %s124 = sphi 0, %s121
    %s125 = sphi 0, %s124
    %s141 = sphi 0, %s125
  $region4: #{_lambda_.11} parent=0 // loop_header_branch
    %13 = sbr.rel (%p11) target = $region8
  $region5: #{_lambda_.11} parent=0 // loop_body
    %s15 = ssub.s32 %s10, 1
    %s16 = ssub.s32 %s10, 2
    %s23 = sadd.s32 1, %s18
    %p24 = scmp.ge.s32.totalorder %s23, 1
    %s25 = scalar_select %p24, 0, %s23
    %s26 = sadd.s32 1, %s17
    %s27 = scalar_select %p24, %s26, %s17
    %p28 = scmp.ge.s32.totalorder %s27, 2
    %s29 = scalar_select %p28, 0, %s27
    %s30 = ssub.s32 %s18, %s25
    %p31 = scmp.eq.s32.totalorder %s30, 0
    %s33 = sadd.s32 %s32, 1
    %s34 = scalar_select %p31, %s32, %s33
    %p37 = pneg %p31
    %p38 = scmp.eq.s32.totalorder %s10, 1
    %p39 = por %p37, %p38
    %p40 = scmp.ne.s32.totalorder %s32, %s35
    %p41 = scmp.eq.s32.totalorder %s10, 0
    %p42 = por %p40, %p41
    %p43 = scmp.ne.s32.totalorder %s32, %s35
    %p44 = scmp.eq.s32.totalorder %s15, 1
    %p45 = por %p43, %p44
    %p46 = scmp.ne.s32.totalorder %s35, %s36
    %p47 = scmp.eq.s32.totalorder %s15, 0
    %p48 = por %p46, %p47
    %p49 = scmp.ne.s32.totalorder %s35, %s36
    %p50 = scmp.eq.s32.totalorder %s16, 1
    %p51 = por %p49, %p50
    %p53 = scmp.ne.s32.totalorder %s36, %s52
    %p54 = scmp.eq.s32.totalorder %s16, 0
    %p55 = por %p53, %p54
    %s57 = sadd.s32 %s56, 1
    %p60 = scmp.eq.s32.totalorder %s10, 1
    %p61 = scmp.ne.s32.totalorder %s56, %s58
    %p62 = scmp.eq.s32.totalorder %s10, 0
    %p63 = por %p61, %p62
    %p64 = scmp.ne.s32.totalorder %s56, %s58
    %p65 = scmp.eq.s32.totalorder %s15, 1
    %p66 = por %p64, %p65
    %p67 = scmp.ne.s32.totalorder %s58, %s59
    %p68 = scmp.eq.s32.totalorder %s15, 0
    %p69 = por %p67, %p68
    %p70 = scmp.ne.s32.totalorder %s58, %s59
    %p71 = scmp.eq.s32.totalorder %s16, 1
    %p72 = por %p70, %p71
    %p74 = scmp.ne.s32.totalorder %s59, %s73
    %p75 = scmp.eq.s32.totalorder %s16, 0
    %p76 = por %p74, %p75
    %s78 = sadd.s32 %s77, 1
    %p81 = scmp.eq.s32.totalorder %s10, 1
    %p82 = scmp.ne.s32.totalorder %s77, %s79
    %p83 = scmp.eq.s32.totalorder %s10, 0
    %p84 = por %p82, %p83
    %p85 = scmp.ne.s32.totalorder %s77, %s79
    %p86 = scmp.eq.s32.totalorder %s15, 1
    %p87 = por %p85, %p86
    %p88 = scmp.ne.s32.totalorder %s79, %s80
    %p89 = scmp.eq.s32.totalorder %s15, 0
    %p90 = por %p88, %p89
    %p91 = scmp.ne.s32.totalorder %s79, %s80
    %p92 = scmp.eq.s32.totalorder %s16, 1
    %p93 = por %p91, %p92
    %p95 = scmp.ne.s32.totalorder %s80, %s94
    %p96 = scmp.eq.s32.totalorder %s16, 0
    %p97 = por %p95, %p96
    %s99 = sadd.s32 %s98, 1
    %p102 = scmp.eq.s32.totalorder %s10, 1
    %p103 = scmp.ne.s32.totalorder %s98, %s100
    %p104 = scmp.eq.s32.totalorder %s10, 0
    %p105 = por %p103, %p104
    %p106 = scmp.ne.s32.totalorder %s98, %s100
    %p107 = scmp.eq.s32.totalorder %s15, 1
    %p108 = por %p106, %p107
    %p109 = scmp.ne.s32.totalorder %s100, %s101
    %p110 = scmp.eq.s32.totalorder %s15, 0
    %p111 = por %p109, %p110
    %p112 = scmp.ne.s32.totalorder %s100, %s101
    %p113 = scmp.eq.s32.totalorder %s16, 1
    %p114 = por %p112, %p113
    %p116 = scmp.ne.s32.totalorder %s101, %s115
    %p117 = scmp.eq.s32.totalorder %s16, 0
    %p118 = por %p116, %p117
    %s119 = ssub.s32 %s18, %s25
    %p120 = scmp.eq.s32.totalorder %s119, 0
    %s122 = sadd.s32 %s121, 1
    %s123 = scalar_select %p120, %s121, %s122
    %p126 = pneg %p120
    %p127 = scmp.eq.s32.totalorder %s10, 1
    %p128 = por %p126, %p127
    %p129 = scmp.ne.s32.totalorder %s121, %s124
    %p130 = scmp.eq.s32.totalorder %s10, 0
    %p131 = por %p129, %p130
    %p132 = scmp.ne.s32.totalorder %s121, %s124
    %p133 = scmp.eq.s32.totalorder %s15, 1
    %p134 = por %p132, %p133
    %p135 = scmp.ne.s32.totalorder %s124, %s125
    %p136 = scmp.eq.s32.totalorder %s15, 0
    %p137 = por %p135, %p136
    %p138 = scmp.ne.s32.totalorder %s124, %s125
    %p139 = scmp.eq.s32.totalorder %s16, 1
    %p140 = por %p138, %p139
    %p142 = scmp.ne.s32.totalorder %s125, %s141
    %p143 = scmp.eq.s32.totalorder %s16, 0
    %p144 = por %p142, %p143
    %p145 = scmp.le.s32.totalorder 1, %s10
    %p146 = scmp.lt.s32.totalorder %s10, 3
    %p147 = pnand %p145, %p146
    %p148 = pneg %p147
    // Predicated region
    $region9: #{_lambda_.11} parent=5 // pred_check
      _
    $region10: #{_lambda_.11} parent=5 // pred_check_branch
      %150 = sbr.rel (%p147) target = $region12
    $region11: #{_lambda_.11} parent=5 // pred_region
      %s151 = ssub.s32 %s10, 1
      // Predicated region
      $region13: #{_lambda_.11} parent=11 // pred_check
        %p152 = pneg %p48
      $region14: #{_lambda_.11} parent=11 // pred_check_branch
        %154 = sbr.rel (%p152) target = $region16
      $region15: #{_lambda_.11} parent=11 // pred_region
        %s155 = smul.u32 16, %s20
        %p156 = scmp.lt.s32.totalorder %s155, 15
        %s157 = scalar_select %p156, %s155, 15
        %s158 = smul.addr %s157, 2
        %s159 = smul.addr %s158, 4
        %s160 = scalar_lea.vmem %s0, %s159
        %s161 = smul.u32 16, %s20
      $region16: #{_lambda_.11} parent=11 // pred_fallthru
        _
      // Predicated region
      $region17: #{_lambda_.11} parent=11 // pred_check
        %p162 = pneg %p69
      $region18: #{_lambda_.11} parent=11 // pred_check_branch
        %164 = sbr.rel (%p162) target = $region20
      $region19: #{_lambda_.11} parent=11 // pred_region
        _
      $region20: #{_lambda_.11} parent=11 // pred_fallthru
        _
      // Predicated region
      $region21: #{_lambda_.11} parent=11 // pred_check
        %p165 = pneg %p90
      $region22: #{_lambda_.11} parent=11 // pred_check_branch
        %167 = sbr.rel (%p165) target = $region24
      $region23: #{_lambda_.11} parent=11 // pred_region
        _
      $region24: #{_lambda_.11} parent=11 // pred_fallthru
        _
      // Predicated region
      $region25: #{_lambda_.11} parent=11 // pred_check
        %p168 = pneg %p111
      $region26: #{_lambda_.11} parent=11 // pred_check_branch
        %170 = sbr.rel (%p168) target = $region28
      $region27: #{_lambda_.11} parent=11 // pred_region
        _
      $region28: #{_lambda_.11} parent=11 // pred_fallthru
        _
    $region12: #{_lambda_.11} parent=5 // pred_fallthru
      _
    %p171 = scmp.lt.s32.totalorder %s10, 2
    // Predicated region
    $region29: #{_lambda_.11} parent=5 // pred_check
      %p172 = pneg %p171
    $region30: #{_lambda_.11} parent=5 // pred_check_branch
      %174 = sbr.rel (%p172) target = $region32
    $region31: #{_lambda_.11} parent=5 // pred_region
      _
    $region32: #{_lambda_.11} parent=5 // pred_fallthru
      _
    %p175 = scmp.le.s32.totalorder 1, %s10
    %p176 = scmp.lt.s32.totalorder %s10, 3
    %p177 = pnand %p175, %p176
    %p178 = pneg %p177
    // Predicated region
    $region33: #{_lambda_.11} parent=5 // pred_check
      _
    $region34: #{_lambda_.11} parent=5 // pred_check_branch
      %180 = sbr.rel (%p177) target = $region36
    $region35: #{_lambda_.11} parent=5 // pred_region
      %s181 = ssub.s32 %s10, 1
      %s182 = smul.u32 16, %s20
      %p183 = scmp.lt.s32.totalorder %s182, 15
      %s184 = scalar_select %p183, %s182, 15
      %s185 = smul.addr %s184, 2
      %s186 = smul.addr %s185, 4
      %s187 = scalar_lea.vmem %s0, %s186
      %p188 = pneg %p48
      %p189 = pneg %p45
      %p190 = pneg %p69
      %p191 = pneg %p66
      %p192 = pneg %p90
      %p193 = pneg %p87
      %p194 = pneg %p111
      %p195 = pneg %p108
      %p196 = pneg %p137
      %p197 = pneg %p134
      %s198 = smul.u32 16, %s20
      %p199 = scmp.lt.s32.totalorder %s198, 15
      %s200 = scalar_select %p199, %s198, 15
      %s201 = smul.addr %s200, 4
      %s202 = scalar_lea.vmem %s4, %s201
      %s203 = smul.u32 16, %s20
      %p204 = scmp.lt.s32.totalorder %s203, 15
      %s205 = scalar_select %p204, %s203, 15
      %s206 = smul.addr %s205, 2
      %s207 = smul.addr %s206, 4
      %s208 = scalar_lea.vmem %s0, %s207
      %s209 = smul.u32 16, %s20
      %s210 = smul.u32 16, %s20
      %p211 = scmp.lt.s32.totalorder %s210, 15
      %s212 = scalar_select %p211, %s210, 15
      %s213 = smul.addr %s212, 4
      %s214 = scalar_lea.vmem %s4, %s213
      %s215 = smul.u32 16, %s20
      %v217 = vld [vmem:[%s208] sm:$0xff]
      %v218 = vld [vmem:[%s208 + $0x8] sm:$0xff]
      %v219 = vld [vmem:[%s208 + $0x10] sm:$0xff]
      %v220 = vld [vmem:[%s208 + $0x18] sm:$0xff]
      %v221 = vld [vmem:[%s208 + $0x20] sm:$0xff]
      %v222 = vld [vmem:[%s208 + $0x28] sm:$0xff]
      %v223 = vld [vmem:[%s208 + $0x30] sm:$0xff]
      %v224 = vld [vmem:[%s208 + $0x38] sm:$0xff]
      %v225 = vld [vmem:[%s208 + $0x40] sm:$0xff]
      %v226 = vld [vmem:[%s208 + $0x48] sm:$0xff]
      %v227 = vld [vmem:[%s208 + $0x50] sm:$0xff]
      %v228 = vld [vmem:[%s208 + $0x58] sm:$0xff]
      %v229 = vld [vmem:[%s208 + $0x60] sm:$0xff]
      %v230 = vld [vmem:[%s208 + $0x68] sm:$0xff]
      %v231 = vld [vmem:[%s208 + $0x70] sm:$0xff]
      %v232 = vld [vmem:[%s208 + $0x78] sm:$0xff]
      %v233 = vld [vmem:[%s1] sm:$0xf]
      %v234 = vld [vmem:[%s1 + $0x4] sm:$0xf]
      %v235 = vld [vmem:[%s1 + $0x8] sm:$0xf]
      %v236 = vld [vmem:[%s1 + $0xc] sm:$0xf]
      %v237 = vld [vmem:[%s1 + $0x10] sm:$0xf]
      %v238 = vld [vmem:[%s1 + $0x14] sm:$0xf]
      %v239 = vld [vmem:[%s1 + $0x18] sm:$0xf]
      %v240 = vld [vmem:[%s1 + $0x1c] sm:$0xf]
      %v241 = vld [vmem:[%s1 + $0x20] sm:$0xf]
      %v242 = vld [vmem:[%s1 + $0x24] sm:$0xf]
      %v243 = vld [vmem:[%s1 + $0x28] sm:$0xf]
      %v244 = vld [vmem:[%s1 + $0x2c] sm:$0xf]
      %v245 = vld [vmem:[%s1 + $0x30] sm:$0xf]
      %v246 = vld [vmem:[%s1 + $0x34] sm:$0xf]
      %v247 = vld [vmem:[%s1 + $0x38] sm:$0xf]
      %v248 = vld [vmem:[%s1 + $0x3c] sm:$0xf]
      %v249 = vld [vmem:[%s1 + $0x40] sm:$0xf]
      %v250 = vld [vmem:[%s1 + $0x44] sm:$0xf]
      %v251 = vld [vmem:[%s1 + $0x48] sm:$0xf]
      %v252 = vld [vmem:[%s1 + $0x4c] sm:$0xf]
      %v253 = vld [vmem:[%s1 + $0x50] sm:$0xf]
      %v254 = vld [vmem:[%s1 + $0x54] sm:$0xf]
      %v255 = vld [vmem:[%s1 + $0x58] sm:$0xf]
      %v256 = vld [vmem:[%s1 + $0x5c] sm:$0xf]
      %v257 = vld [vmem:[%s1 + $0x60] sm:$0xf]
      %v258 = vld [vmem:[%s1 + $0x64] sm:$0xf]
      %v259 = vld [vmem:[%s1 + $0x68] sm:$0xf]
      %v260 = vld [vmem:[%s1 + $0x6c] sm:$0xf]
      %v261 = vld [vmem:[%s1 + $0x70] sm:$0xf]
      %v262 = vld [vmem:[%s1 + $0x74] sm:$0xf]
      %v263 = vld [vmem:[%s1 + $0x78] sm:$0xf]
      %v264 = vld [vmem:[%s1 + $0x7c] sm:$0xf]
      %v281 = vunpack.c.l.b16 %v217
      %v282 = vunpack.c.h.b16 %v217
      %v283 = vunpack.c.l.b16 %v218
      %v284 = vunpack.c.h.b16 %v218
      %v285 = vunpack.c.l.b16 %v219
      %v286 = vunpack.c.h.b16 %v219
      %v287 = vunpack.c.l.b16 %v220
      %v288 = vunpack.c.h.b16 %v220
      %v289 = vunpack.c.l.b16 %v221
      %v290 = vunpack.c.h.b16 %v221
      %v291 = vunpack.c.l.b16 %v222
      %v292 = vunpack.c.h.b16 %v222
      %v293 = vunpack.c.l.b16 %v223
      %v294 = vunpack.c.h.b16 %v223
      %v295 = vunpack.c.l.b16 %v224
      %v296 = vunpack.c.h.b16 %v224
      %v297 = vunpack.c.l.b16 %v225
      %v298 = vunpack.c.h.b16 %v225
      %v299 = vunpack.c.l.b16 %v226
      %v300 = vunpack.c.h.b16 %v226
      %v301 = vunpack.c.l.b16 %v227
      %v302 = vunpack.c.h.b16 %v227
      %v303 = vunpack.c.l.b16 %v228
      %v304 = vunpack.c.h.b16 %v228
      %v305 = vunpack.c.l.b16 %v229
      %v306 = vunpack.c.h.b16 %v229
      %v307 = vunpack.c.l.b16 %v230
      %v308 = vunpack.c.h.b16 %v230
      %v309 = vunpack.c.l.b16 %v231
      %v310 = vunpack.c.h.b16 %v231
      %v311 = vunpack.c.l.b16 %v232
      %v312 = vunpack.c.h.b16 %v232
      %v313 = vpack.c.b16 %v283, %v281
      %v314 = vpack.c.b16 %v284, %v282
      %v315 = vpack.c.b16 %v287, %v285
      %v316 = vpack.c.b16 %v288, %v286
      %v317 = vpack.c.b16 %v291, %v289
      %v318 = vpack.c.b16 %v292, %v290
      %v319 = vpack.c.b16 %v295, %v293
      %v320 = vpack.c.b16 %v296, %v294
      %v321 = vpack.c.b16 %v299, %v297
      %v322 = vpack.c.b16 %v300, %v298
      %v323 = vpack.c.b16 %v303, %v301
      %v324 = vpack.c.b16 %v304, %v302
      %v325 = vpack.c.b16 %v307, %v305
      %v326 = vpack.c.b16 %v308, %v306
      %v327 = vpack.c.b16 %v311, %v309
      %v328 = vpack.c.b16 %v312, %v310
      %v377 = vunpack.c.l.b16 %v233
      %v378 = vunpack.c.l.b16 %v234
      %v379 = vunpack.c.l.b16 %v235
      %v380 = vunpack.c.l.b16 %v236
      %v381 = vunpack.c.l.b16 %v237
      %v382 = vunpack.c.l.b16 %v238
      %v383 = vunpack.c.l.b16 %v239
      %v384 = vunpack.c.l.b16 %v240
      %v385 = vunpack.c.l.b16 %v241
      %v386 = vunpack.c.l.b16 %v242
      %v387 = vunpack.c.l.b16 %v243
      %v388 = vunpack.c.l.b16 %v244
      %v389 = vunpack.c.l.b16 %v245
      %v390 = vunpack.c.l.b16 %v246
      %v391 = vunpack.c.l.b16 %v247
      %v392 = vunpack.c.l.b16 %v248
      %v393 = vunpack.c.l.b16 %v249
      %v394 = vunpack.c.l.b16 %v250
      %v395 = vunpack.c.l.b16 %v251
      %v396 = vunpack.c.l.b16 %v252
      %v397 = vunpack.c.l.b16 %v253
      %v398 = vunpack.c.l.b16 %v254
      %v399 = vunpack.c.l.b16 %v255
      %v400 = vunpack.c.l.b16 %v256
      %v401 = vunpack.c.l.b16 %v257
      %v402 = vunpack.c.l.b16 %v258
      %v403 = vunpack.c.l.b16 %v259
      %v404 = vunpack.c.l.b16 %v260
      %v405 = vunpack.c.l.b16 %v261
      %v406 = vunpack.c.l.b16 %v262
      %v407 = vunpack.c.l.b16 %v263
      %v408 = vunpack.c.l.b16 %v264
      %v409 = vpack.c.b16 %v378, %v377
      %v410 = vpack.c.b16 %v380, %v379
      %v411 = vpack.c.b16 %v382, %v381
      %v412 = vpack.c.b16 %v384, %v383
      %v413 = vpack.c.b16 %v386, %v385
      %v414 = vpack.c.b16 %v388, %v387
      %v415 = vpack.c.b16 %v390, %v389
      %v416 = vpack.c.b16 %v392, %v391
      %v417 = vpack.c.b16 %v394, %v393
      %v418 = vpack.c.b16 %v396, %v395
      %v419 = vpack.c.b16 %v398, %v397
      %v420 = vpack.c.b16 %v400, %v399
      %v421 = vpack.c.b16 %v402, %v401
      %v422 = vpack.c.b16 %v404, %v403
      %v423 = vpack.c.b16 %v406, %v405
      %v424 = vpack.c.b16 %v408, %v407
      %441 = vmatprep.subr.bf16.mxu0 0
      %442 = vmatpush1.bf16.msra.mxu0 %v416
      %443 = vmatprep.subr.bf16.mxu0 0
      %444 = vmatpush1.bf16.msra.mxu0 %v415
      %445 = vmatprep.subr.bf16.mxu0 0
      %446 = vmatpush1.bf16.msra.mxu0 %v414
      %447 = vmatprep.subr.bf16.mxu0 0
      %448 = vmatpush1.bf16.msra.mxu0 %v413
      %449 = vmatprep.subr.bf16.mxu0 0
      %450 = vmatpush1.bf16.msra.mxu0 %v412
      %451 = vmatprep.subr.bf16.mxu0 0
      %452 = vmatpush1.bf16.msra.mxu0 %v411
      %453 = vmatprep.subr.bf16.mxu0 0
      %454 = vmatpush1.bf16.msra.mxu0 %v410
      %455 = vmatprep.subr.bf16.mxu0 0
      %456 = vmatpush1.bf16.msra.mxu0 %v409
      %457 = vmatprep.subr.bf16.mxu0 0
      %458 = vmatpush2.bf16.msra.mxu0 %v424
      %459 = vmatprep.subr.bf16.mxu0 0
      %460 = vmatpush2.bf16.msra.mxu0 %v423
      %461 = vmatprep.subr.bf16.mxu0 0
      %462 = vmatpush2.bf16.msra.mxu0 %v422
      %463 = vmatprep.subr.bf16.mxu0 0
      %464 = vmatpush2.bf16.msra.mxu0 %v421
      %465 = vmatprep.subr.bf16.mxu0 0
      %466 = vmatpush2.bf16.msra.mxu0 %v420
      %467 = vmatprep.subr.bf16.mxu0 0
      %468 = vmatpush2.bf16.msra.mxu0 %v419
      %469 = vmatprep.subr.bf16.mxu0 0
      %470 = vmatpush2.bf16.msra.mxu0 %v418
      %471 = vmatprep.subr.bf16.mxu0 0
      %472 = vmatpush2.bf16.msra.mxu0 %v417
      %473 = vmatprep.mubr.bf16.mxu0 %v314
      %474 = vmatmul.mubr.bf16.gmra.mxu0 %v313
      %v475 = vpop.f32.mrf.mxu0
      %v476 = vadd.f32 0.0, %v475
      %v477 = vpop.f32.mrf.mxu0
      %v478 = vpop.f32.mrf.mxu0
      %v479 = vadd.f32 0.0, %v478
      %v480 = vpop.f32.mrf.mxu0
      %481 = vmatprep.mubr.bf16.mxu0 %v316
      %482 = vmatmul.mubr.bf16.gmra.mxu0 %v315
      %v483 = vpop.f32.mrf.mxu0
      %v484 = vadd.f32 0.0, %v483
      %v485 = vpop.f32.mrf.mxu0
      %v486 = vpop.f32.mrf.mxu0
      %v487 = vadd.f32 0.0, %v486
      %v488 = vpop.f32.mrf.mxu0
      %489 = vmatprep.mubr.bf16.mxu0 %v318
      %490 = vmatmul.mubr.bf16.gmra.mxu0 %v317
      %v491 = vpop.f32.mrf.mxu0
      %v492 = vadd.f32 0.0, %v491
      %v493 = vpop.f32.mrf.mxu0
      %v494 = vpop.f32.mrf.mxu0
      %v495 = vadd.f32 0.0, %v494
      %v496 = vpop.f32.mrf.mxu0
      %497 = vmatprep.mubr.bf16.mxu0 %v320
      %498 = vmatmul.mubr.bf16.gmra.mxu0 %v319
      %v499 = vpop.f32.mrf.mxu0
      %v500 = vadd.f32 0.0, %v499
      %v501 = vpop.f32.mrf.mxu0
      %v502 = vpop.f32.mrf.mxu0
      %v503 = vadd.f32 0.0, %v502
      %v504 = vpop.f32.mrf.mxu0
      %505 = vmatprep.mubr.bf16.mxu0 %v322
      %506 = vmatmul.mubr.bf16.gmra.mxu0 %v321
      %v507 = vpop.f32.mrf.mxu0
      %v508 = vadd.f32 0.0, %v507
      %v509 = vpop.f32.mrf.mxu0
      %v510 = vpop.f32.mrf.mxu0
      %v511 = vadd.f32 0.0, %v510
      %v512 = vpop.f32.mrf.mxu0
      %513 = vmatprep.mubr.bf16.mxu0 %v324
      %514 = vmatmul.mubr.bf16.gmra.mxu0 %v323
      %v515 = vpop.f32.mrf.mxu0
      %v516 = vadd.f32 0.0, %v515
      %v517 = vpop.f32.mrf.mxu0
      %v518 = vpop.f32.mrf.mxu0
      %v519 = vadd.f32 0.0, %v518
      %v520 = vpop.f32.mrf.mxu0
      %521 = vmatprep.mubr.bf16.mxu0 %v326
      %522 = vmatmul.mubr.bf16.gmra.mxu0 %v325
      %v523 = vpop.f32.mrf.mxu0
      %v524 = vadd.f32 0.0, %v523
      %v525 = vpop.f32.mrf.mxu0
      %v526 = vpop.f32.mrf.mxu0
      %v527 = vadd.f32 0.0, %v526
      %v528 = vpop.f32.mrf.mxu0
      %529 = vmatprep.mubr.bf16.mxu0 %v328
      %530 = vmatmul.mubr.bf16.gmra.mxu0 %v327
      %v531 = vpop.f32.mrf.mxu0
      %v532 = vadd.f32 0.0, %v531
      %v533 = vpop.f32.mrf.mxu0
      %v534 = vpop.f32.mrf.mxu0
      %v535 = vadd.f32 0.0, %v534
      %v536 = vpop.f32.mrf.mxu0
      %537 = vdwg.mxu0
      %p538 = scmp.eq.s32.totalorder %s19, 0
      %p539 = scmp.eq.s32.totalorder %s20, 0
      %p540 = pnand %p538, %p539
      %p541 = pneg %p540
      // Predicated region
      $region37: #{_lambda_.11} parent=35 // pred_check
        _
      $region38: #{_lambda_.11} parent=35 // pred_check_branch
        %543 = sbr.rel (%p540) target = $region40
      $region39: #{_lambda_.11} parent=35 // pred_region
        %544 = vst [vmem:[#allocation2] sm:$0x1] 0.0
        %545 = vst [vmem:[#allocation3] sm:$0x1] 0.0
      $region40: #{_lambda_.11} parent=35 // pred_fallthru
        _
      // Predicated region
      $region41: #{_lambda_.11} parent=35 // pred_check
        %p546 = pneg %p538
      $region42: #{_lambda_.11} parent=35 // pred_check_branch
        %548 = sbr.rel (%p546) target = $region44
      $region43: #{_lambda_.11} parent=35 // pred_region
        %v549 = vld [vmem:[#allocation2] sm:$0x1]
        %v550 = vadd.f32 %v476, %v479
        %v551 = vadd.f32 %v550, %v484
        %v552 = vadd.f32 %v551, %v487
        %v553 = vadd.f32 %v552, %v492
        %v554 = vadd.f32 %v553, %v495
        %v555 = vadd.f32 %v554, %v500
        %v556 = vadd.f32 %v555, %v503
        %v557 = vadd.f32 %v556, %v508
        %v558 = vadd.f32 %v557, %v511
        %v559 = vadd.f32 %v558, %v516
        %v560 = vadd.f32 %v559, %v519
        %v561 = vadd.f32 %v560, %v524
        %v562 = vadd.f32 %v561, %v527
        %v563 = vadd.f32 %v562, %v532
        %v564 = vadd.f32 %v563, %v535
        %v565 = vrot.slane %v564, 4
        %v566 = vadd.f32 %v564, %v565
        %v567 = vrot.slane %v566, 2
        %v568 = vadd.f32 %v566, %v567
        %v569 = vrot.slane %v568, 1
        %v570 = vadd.f32 %v568, %v569
        %v571 = vadd.f32 %v549, %v570
        %572 = vst [vmem:[#allocation2] sm:$0x1] %v571
        %v573 = vld [vmem:[#allocation3] sm:$0x1]
        %v574 = vmul.f32 %v476, %v476
        %v575 = vmul.f32 %v479, %v479
        %v576 = vmul.f32 %v484, %v484
        %v577 = vmul.f32 %v487, %v487
        %v578 = vmul.f32 %v492, %v492
        %v579 = vmul.f32 %v495, %v495
        %v580 = vmul.f32 %v500, %v500
        %v581 = vmul.f32 %v503, %v503
        %v582 = vmul.f32 %v508, %v508
        %v583 = vmul.f32 %v511, %v511
        %v584 = vmul.f32 %v516, %v516
        %v585 = vmul.f32 %v519, %v519
        %v586 = vmul.f32 %v524, %v524
        %v587 = vmul.f32 %v527, %v527
        %v588 = vmul.f32 %v532, %v532
        %v589 = vmul.f32 %v535, %v535
        %v590 = vadd.f32 %v574, %v575
        %v591 = vadd.f32 %v590, %v576
        %v592 = vadd.f32 %v591, %v577
        %v593 = vadd.f32 %v592, %v578
        %v594 = vadd.f32 %v593, %v579
        %v595 = vadd.f32 %v594, %v580
        %v596 = vadd.f32 %v595, %v581
        %v597 = vadd.f32 %v596, %v582
        %v598 = vadd.f32 %v597, %v583
        %v599 = vadd.f32 %v598, %v584
        %v600 = vadd.f32 %v599, %v585
        %v601 = vadd.f32 %v600, %v586
        %v602 = vadd.f32 %v601, %v587
        %v603 = vadd.f32 %v602, %v588
        %v604 = vadd.f32 %v603, %v589
        %v605 = vrot.slane %v604, 4
        %v606 = vadd.f32 %v604, %v605
        %v607 = vrot.slane %v606, 2
        %v608 = vadd.f32 %v606, %v607
        %v609 = vrot.slane %v608, 1
        %v610 = vadd.f32 %v608, %v609
        %v611 = vadd.f32 %v573, %v610
        %612 = vst [vmem:[#allocation3] sm:$0x1] %v611
      $region44: #{_lambda_.11} parent=35 // pred_fallthru
        _
      %p613 = scmp.eq.s32.totalorder %s19, 1
      // Predicated region
      $region45: #{_lambda_.11} parent=35 // pred_check
        %p614 = pneg %p613
      $region46: #{_lambda_.11} parent=35 // pred_check_branch
        %616 = sbr.rel (%p614) target = $region48
      $region47: #{_lambda_.11} parent=35 // pred_region
        %v617 = vld [vmem:[#allocation2] sm:$0x1]
        %v618 = vmul.f32 %v617, 0.0078125
        %v619 = vld [vmem:[#allocation3] sm:$0x1]
        %v620 = vmul.f32 %v619, 0.0078125
        %v621 = vmul.f32 %v618, %v618
        %v622 = vsub.f32 %v620, %v621
        %v623 = vmax.f32 %v622, 0.0
        %v624 = vadd.f32 %v623, 1e-05
        %v625 = vrsqrt.pop %v624
        %v626 = vld [vmem:[%s2] sm:$0x1]
        %v627 = vmul.f32 %v626, %v625
        %v628 = vld [vmem:[%s3] sm:$0x1]
        %v629 = vmul.f32 %v618, %v627
        %v630 = vsub.f32 %v628, %v629
        %v632 = vlaneseq
        %v633 = vshrl.u32 %v632, 7
        %v634 = vsub.s32 0, %v633
        %v635 = vrot.slane %v627, %v634
        %v637 = vmul.f32 %v476, %v635
        %v638 = vmul.f32 %v479, %v635
        %v639 = vmul.f32 %v484, %v635
        %v640 = vmul.f32 %v487, %v635
        %v641 = vmul.f32 %v492, %v635
        %v642 = vmul.f32 %v495, %v635
        %v643 = vmul.f32 %v500, %v635
        %v644 = vmul.f32 %v503, %v635
        %v645 = vmul.f32 %v508, %v635
        %v646 = vmul.f32 %v511, %v635
        %v647 = vmul.f32 %v516, %v635
        %v648 = vmul.f32 %v519, %v635
        %v649 = vmul.f32 %v524, %v635
        %v650 = vmul.f32 %v527, %v635
        %v651 = vmul.f32 %v532, %v635
        %v652 = vmul.f32 %v535, %v635
        %v654 = vlaneseq
        %v655 = vshrl.u32 %v654, 7
        %v656 = vsub.s32 0, %v655
        %v657 = vrot.slane %v630, %v656
        %v659 = vadd.f32 %v637, %v657
        %v660 = vadd.f32 %v638, %v657
        %v661 = vadd.f32 %v639, %v657
        %v662 = vadd.f32 %v640, %v657
        %v663 = vadd.f32 %v641, %v657
        %v664 = vadd.f32 %v642, %v657
        %v665 = vadd.f32 %v643, %v657
        %v666 = vadd.f32 %v644, %v657
        %v667 = vadd.f32 %v645, %v657
        %v668 = vadd.f32 %v646, %v657
        %v669 = vadd.f32 %v647, %v657
        %v670 = vadd.f32 %v648, %v657
        %v671 = vadd.f32 %v649, %v657
        %v672 = vadd.f32 %v650, %v657
        %v673 = vadd.f32 %v651, %v657
        %v674 = vadd.f32 %v652, %v657
        %vm675 = vcmp.gt.f32.partialorder %v659, 0.0
        %vm676 = vcmp.gt.f32.partialorder %v660, 0.0
        %vm677 = vcmp.gt.f32.partialorder %v661, 0.0
        %vm678 = vcmp.gt.f32.partialorder %v662, 0.0
        %vm679 = vcmp.gt.f32.partialorder %v663, 0.0
        %vm680 = vcmp.gt.f32.partialorder %v664, 0.0
        %vm681 = vcmp.gt.f32.partialorder %v665, 0.0
        %vm682 = vcmp.gt.f32.partialorder %v666, 0.0
        %vm683 = vcmp.gt.f32.partialorder %v667, 0.0
        %vm684 = vcmp.gt.f32.partialorder %v668, 0.0
        %vm685 = vcmp.gt.f32.partialorder %v669, 0.0
        %vm686 = vcmp.gt.f32.partialorder %v670, 0.0
        %vm687 = vcmp.gt.f32.partialorder %v671, 0.0
        %vm688 = vcmp.gt.f32.partialorder %v672, 0.0
        %vm689 = vcmp.gt.f32.partialorder %v673, 0.0
        %vm690 = vcmp.gt.f32.partialorder %v674, 0.0
        %v691 = vmul.f32 %v659, 0.2
        %v692 = vmul.f32 %v660, 0.2
        %v693 = vmul.f32 %v661, 0.2
        %v694 = vmul.f32 %v662, 0.2
        %v695 = vmul.f32 %v663, 0.2
        %v696 = vmul.f32 %v664, 0.2
        %v697 = vmul.f32 %v665, 0.2
        %v698 = vmul.f32 %v666, 0.2
        %v699 = vmul.f32 %v667, 0.2
        %v700 = vmul.f32 %v668, 0.2
        %v701 = vmul.f32 %v669, 0.2
        %v702 = vmul.f32 %v670, 0.2
        %v703 = vmul.f32 %v671, 0.2
        %v704 = vmul.f32 %v672, 0.2
        %v705 = vmul.f32 %v673, 0.2
        %v706 = vmul.f32 %v674, 0.2
        %v707 = vsel %vm675, %v659, %v691
        %v708 = vsel %vm676, %v660, %v692
        %v709 = vsel %vm677, %v661, %v693
        %v710 = vsel %vm678, %v662, %v694
        %v711 = vsel %vm679, %v663, %v695
        %v712 = vsel %vm680, %v664, %v696
        %v713 = vsel %vm681, %v665, %v697
        %v714 = vsel %vm682, %v666, %v698
        %v715 = vsel %vm683, %v667, %v699
        %v716 = vsel %vm684, %v668, %v700
        %v717 = vsel %vm685, %v669, %v701
        %v718 = vsel %vm686, %v670, %v702
        %v719 = vsel %vm687, %v671, %v703
        %v720 = vsel %vm688, %v672, %v704
        %v721 = vsel %vm689, %v673, %v705
        %v722 = vsel %vm690, %v674, %v706
        %v723 = vpack.c.bf16 %v708, %v707
        %v724 = vpack.c.bf16 %v710, %v709
        %v725 = vpack.c.bf16 %v712, %v711
        %v726 = vpack.c.bf16 %v714, %v713
        %v727 = vpack.c.bf16 %v716, %v715
        %v728 = vpack.c.bf16 %v718, %v717
        %v729 = vpack.c.bf16 %v720, %v719
        %v730 = vpack.c.bf16 %v722, %v721
        %v739 = vunpack.c.l.b16 %v723
        %v740 = vunpack.c.h.b16 %v723
        %v741 = vunpack.c.l.b16 %v724
        %v742 = vunpack.c.h.b16 %v724
        %v743 = vunpack.c.l.b16 %v725
        %v744 = vunpack.c.h.b16 %v725
        %v745 = vunpack.c.l.b16 %v726
        %v746 = vunpack.c.h.b16 %v726
        %v747 = vunpack.c.l.b16 %v727
        %v748 = vunpack.c.h.b16 %v727
        %v749 = vunpack.c.l.b16 %v728
        %v750 = vunpack.c.h.b16 %v728
        %v751 = vunpack.c.l.b16 %v729
        %v752 = vunpack.c.h.b16 %v729
        %v753 = vunpack.c.l.b16 %v730
        %v754 = vunpack.c.h.b16 %v730
        %v755 = vpack.c.b16 %v739, %v739
        %v756 = vpack.c.b16 %v740, %v740
        %v757 = vpack.c.b16 %v741, %v741
        %v758 = vpack.c.b16 %v742, %v742
        %v759 = vpack.c.b16 %v743, %v743
        %v760 = vpack.c.b16 %v744, %v744
        %v761 = vpack.c.b16 %v745, %v745
        %v762 = vpack.c.b16 %v746, %v746
        %v763 = vpack.c.b16 %v747, %v747
        %v764 = vpack.c.b16 %v748, %v748
        %v765 = vpack.c.b16 %v749, %v749
        %v766 = vpack.c.b16 %v750, %v750
        %v767 = vpack.c.b16 %v751, %v751
        %v768 = vpack.c.b16 %v752, %v752
        %v769 = vpack.c.b16 %v753, %v753
        %v770 = vpack.c.b16 %v754, %v754
        %787 = vst [vmem:[%s214] sm:$0xf] %v755
        %788 = vst [vmem:[%s214 + $0x4] sm:$0xf] %v756
        %789 = vst [vmem:[%s214 + $0x8] sm:$0xf] %v757
        %790 = vst [vmem:[%s214 + $0xc] sm:$0xf] %v758
        %791 = vst [vmem:[%s214 + $0x10] sm:$0xf] %v759
        %792 = vst [vmem:[%s214 + $0x14] sm:$0xf] %v760
        %793 = vst [vmem:[%s214 + $0x18] sm:$0xf] %v761
        %794 = vst [vmem:[%s214 + $0x1c] sm:$0xf] %v762
        %795 = vst [vmem:[%s214 + $0x20] sm:$0xf] %v763
        %796 = vst [vmem:[%s214 + $0x24] sm:$0xf] %v764
        %797 = vst [vmem:[%s214 + $0x28] sm:$0xf] %v765
        %798 = vst [vmem:[%s214 + $0x2c] sm:$0xf] %v766
        %799 = vst [vmem:[%s214 + $0x30] sm:$0xf] %v767
        %800 = vst [vmem:[%s214 + $0x34] sm:$0xf] %v768
        %801 = vst [vmem:[%s214 + $0x38] sm:$0xf] %v769
        %802 = vst [vmem:[%s214 + $0x3c] sm:$0xf] %v770
      $region48: #{_lambda_.11} parent=35 // pred_fallthru
        _
      %s803 = smul.u32 16, %s20
      %p804 = scmp.lt.s32.totalorder %s803, 15
      %s805 = scalar_select %p804, %s803, 15
      %s806 = smul.addr %s805, 4
      %s807 = scalar_lea.vmem %s4, %s806
      // Predicated region
      $region49: #{_lambda_.11} parent=35 // pred_check
        %p808 = pneg %p134
      $region50: #{_lambda_.11} parent=35 // pred_check_branch
        %810 = sbr.rel (%p808) target = $region52
      $region51: #{_lambda_.11} parent=35 // pred_region
        %s811 = smul.u32 16, %s20
      $region52: #{_lambda_.11} parent=35 // pred_fallthru
        _
      // Predicated region
      $region53: #{_lambda_.11} parent=35 // pred_check
        %p812 = pneg %p134
      $region54: #{_lambda_.11} parent=35 // pred_check_branch
        %814 = sbr.rel (%p812) target = $region56
      $region55: #{_lambda_.11} parent=35 // pred_region
        %s815 = smul.u32 16, %s20
        %p816 = scmp.lt.s32.totalorder %s815, 15
        %s817 = scalar_select %p816, %s815, 15
        %s818 = smul.addr %s817, 4
        %s819 = scalar_lea.vmem %s4, %s818
      $region56: #{_lambda_.11} parent=35 // pred_fallthru
        _
    $region36: #{_lambda_.11} parent=5 // pred_fallthru
      _
    %p820 = scmp.le.s32.totalorder 2, %s10
    // Predicated region
    $region57: #{_lambda_.11} parent=5 // pred_check
      %p821 = pneg %p820
    $region58: #{_lambda_.11} parent=5 // pred_check_branch
      %823 = sbr.rel (%p821) target = $region60
    $region59: #{_lambda_.11} parent=5 // pred_region
      %s824 = ssub.s32 %s10, 2
    $region60: #{_lambda_.11} parent=5 // pred_fallthru
      _
  $region6: #{_lambda_.11} parent=0 // loop_footer
    %s14 = sadd.s32 1, %s10
  $region7: #{_lambda_.11} parent=0 // loop_footer_branch
    %9 = sbr.rel target = $region3
  $region8: #{_lambda_.11} parent=0 // loop_exit
    _

// kernel: _lambda_.12
$region0: #{_lambda_.12}
  #allocation0 [shape = 'u32[]', space=smem, size = 0x4, offset = 0x4, fixed_abs, tag = 'smem constant byte address 0x4 - core index']
  #allocation1 [shape = 'u32[144,128]{1,0:T(1,128)}', space=vmem, size = 0x12000, scoped, tag = 'internal scratch']
  #allocation2 [shape = 'f32[1,128]{1,0:T(1,128)}', space=vmem, size = 0x200, scoped, tag = 'scratch operand']
  #allocation3 [shape = 'f32[1,128]{1,0:T(1,128)}', space=vmem, size = 0x200, scoped, tag = 'scratch operand']
  %s0 = inlined_call_operand.vmem [shape: bf16[32,256], index: 0, kind: input, shape index: {}]
  %s1 = inlined_call_operand.vmem [shape: bf16[256,128], index: 1, kind: input, shape index: {}]
  %s2 = inlined_call_operand.vmem [shape: f32[1,128], index: 2, kind: input, shape index: {}]
  %s3 = inlined_call_operand.vmem [shape: f32[1,128], index: 3, kind: input, shape index: {}]
  %s4 = inlined_call_operand.vmem [shape: bf16[32,128], index: 4, kind: output, shape index: {}]
  %s5 = sld [smem:[#allocation0]]
  $region61: #{_lambda_.12} parent=0
    _
  %s7 = ssub.s32 1, %s5
  %s8 = scalar_select 0, %s7, %s5
  loop: start=0, step=1, limit=4
  $region2: #{_lambda_.12} parent=0 // loop_pre_header
    _
  $region3: #{_lambda_.12} parent=0 // loop_header
    %s10 = sphi 0, %s14
    %p11 = scmp.ge.s32.totalorder %s10, 4
    %s17 = sphi 0, %s29
    %s18 = sphi 0, %s25
    %s19 = sphi 0, %s17
    %s20 = sphi 0, %s18
    %s21 = sphi 0, %s19
    %s22 = sphi 0, %s20
    %s32 = sphi 0, %s34
    %s35 = sphi 0, %s32
    %s36 = sphi 0, %s35
    %s52 = sphi 0, %s36
    %s56 = sphi 0, %s56
    %s58 = sphi 0, %s56
    %s59 = sphi 0, %s58
    %s73 = sphi 0, %s59
    %s77 = sphi 0, %s77
    %s79 = sphi 0, %s77
    %s80 = sphi 0, %s79
    %s94 = sphi 0, %s80
    %s98 = sphi 0, %s98
    %s100 = sphi 0, %s98
    %s101 = sphi 0, %s100
    %s115 = sphi 0, %s101
    %s121 = sphi 0, %s123
    %s124 = sphi 0, %s121
    %s125 = sphi 0, %s124
    %s141 = sphi 0, %s125
  $region4: #{_lambda_.12} parent=0 // loop_header_branch
    %13 = sbr.rel (%p11) target = $region8
  $region5: #{_lambda_.12} parent=0 // loop_body
    %s15 = ssub.s32 %s10, 1
    %s16 = ssub.s32 %s10, 2
    %s23 = sadd.s32 1, %s18
    %p24 = scmp.ge.s32.totalorder %s23, 1
    %s25 = scalar_select %p24, 0, %s23
    %s26 = sadd.s32 1, %s17
    %s27 = scalar_select %p24, %s26, %s17
    %p28 = scmp.ge.s32.totalorder %s27, 2
    %s29 = scalar_select %p28, 0, %s27
    %s30 = ssub.s32 %s18, %s25
    %p31 = scmp.eq.s32.totalorder %s30, 0
    %s33 = sadd.s32 %s32, 1
    %s34 = scalar_select %p31, %s32, %s33
    %p37 = pneg %p31
    %p38 = scmp.eq.s32.totalorder %s10, 1
    %p39 = por %p37, %p38
    %p40 = scmp.ne.s32.totalorder %s32, %s35
    %p41 = scmp.eq.s32.totalorder %s10, 0
    %p42 = por %p40, %p41
    %p43 = scmp.ne.s32.totalorder %s32, %s35
    %p44 = scmp.eq.s32.totalorder %s15, 1
    %p45 = por %p43, %p44
    %p46 = scmp.ne.s32.totalorder %s35, %s36
    %p47 = scmp.eq.s32.totalorder %s15, 0
    %p48 = por %p46, %p47
    %p49 = scmp.ne.s32.totalorder %s35, %s36
    %p50 = scmp.eq.s32.totalorder %s16, 1
    %p51 = por %p49, %p50
    %p53 = scmp.ne.s32.totalorder %s36, %s52
    %p54 = scmp.eq.s32.totalorder %s16, 0
    %p55 = por %p53, %p54
    %s57 = sadd.s32 %s56, 1
    %p60 = scmp.eq.s32.totalorder %s10, 1
    %p61 = scmp.ne.s32.totalorder %s56, %s58
    %p62 = scmp.eq.s32.totalorder %s10, 0
    %p63 = por %p61, %p62
    %p64 = scmp.ne.s32.totalorder %s56, %s58
    %p65 = scmp.eq.s32.totalorder %s15, 1
    %p66 = por %p64, %p65
    %p67 = scmp.ne.s32.totalorder %s58, %s59
    %p68 = scmp.eq.s32.totalorder %s15, 0
    %p69 = por %p67, %p68
    %p70 = scmp.ne.s32.totalorder %s58, %s59
    %p71 = scmp.eq.s32.totalorder %s16, 1
    %p72 = por %p70, %p71
    %p74 = scmp.ne.s32.totalorder %s59, %s73
    %p75 = scmp.eq.s32.totalorder %s16, 0
    %p76 = por %p74, %p75
    %s78 = sadd.s32 %s77, 1
    %p81 = scmp.eq.s32.totalorder %s10, 1
    %p82 = scmp.ne.s32.totalorder %s77, %s79
    %p83 = scmp.eq.s32.totalorder %s10, 0
    %p84 = por %p82, %p83
    %p85 = scmp.ne.s32.totalorder %s77, %s79
    %p86 = scmp.eq.s32.totalorder %s15, 1
    %p87 = por %p85, %p86
    %p88 = scmp.ne.s32.totalorder %s79, %s80
    %p89 = scmp.eq.s32.totalorder %s15, 0
    %p90 = por %p88, %p89
    %p91 = scmp.ne.s32.totalorder %s79, %s80
    %p92 = scmp.eq.s32.totalorder %s16, 1
    %p93 = por %p91, %p92
    %p95 = scmp.ne.s32.totalorder %s80, %s94
    %p96 = scmp.eq.s32.totalorder %s16, 0
    %p97 = por %p95, %p96
    %s99 = sadd.s32 %s98, 1
    %p102 = scmp.eq.s32.totalorder %s10, 1
    %p103 = scmp.ne.s32.totalorder %s98, %s100
    %p104 = scmp.eq.s32.totalorder %s10, 0
    %p105 = por %p103, %p104
    %p106 = scmp.ne.s32.totalorder %s98, %s100
    %p107 = scmp.eq.s32.totalorder %s15, 1
    %p108 = por %p106, %p107
    %p109 = scmp.ne.s32.totalorder %s100, %s101
    %p110 = scmp.eq.s32.totalorder %s15, 0
    %p111 = por %p109, %p110
    %p112 = scmp.ne.s32.totalorder %s100, %s101
    %p113 = scmp.eq.s32.totalorder %s16, 1
    %p114 = por %p112, %p113
    %p116 = scmp.ne.s32.totalorder %s101, %s115
    %p117 = scmp.eq.s32.totalorder %s16, 0
    %p118 = por %p116, %p117
    %s119 = ssub.s32 %s18, %s25
    %p120 = scmp.eq.s32.totalorder %s119, 0
    %s122 = sadd.s32 %s121, 1
    %s123 = scalar_select %p120, %s121, %s122
    %p126 = pneg %p120
    %p127 = scmp.eq.s32.totalorder %s10, 1
    %p128 = por %p126, %p127
    %p129 = scmp.ne.s32.totalorder %s121, %s124
    %p130 = scmp.eq.s32.totalorder %s10, 0
    %p131 = por %p129, %p130
    %p132 = scmp.ne.s32.totalorder %s121, %s124
    %p133 = scmp.eq.s32.totalorder %s15, 1
    %p134 = por %p132, %p133
    %p135 = scmp.ne.s32.totalorder %s124, %s125
    %p136 = scmp.eq.s32.totalorder %s15, 0
    %p137 = por %p135, %p136
    %p138 = scmp.ne.s32.totalorder %s124, %s125
    %p139 = scmp.eq.s32.totalorder %s16, 1
    %p140 = por %p138, %p139
    %p142 = scmp.ne.s32.totalorder %s125, %s141
    %p143 = scmp.eq.s32.totalorder %s16, 0
    %p144 = por %p142, %p143
    %p145 = scmp.le.s32.totalorder 1, %s10
    %p146 = scmp.lt.s32.totalorder %s10, 3
    %p147 = pnand %p145, %p146
    %p148 = pneg %p147
    // Predicated region
    $region9: #{_lambda_.12} parent=5 // pred_check
      _
    $region10: #{_lambda_.12} parent=5 // pred_check_branch
      %150 = sbr.rel (%p147) target = $region12
    $region11: #{_lambda_.12} parent=5 // pred_region
      %s151 = ssub.s32 %s10, 1
      // Predicated region
      $region13: #{_lambda_.12} parent=11 // pred_check
        %p152 = pneg %p48
      $region14: #{_lambda_.12} parent=11 // pred_check_branch
        %154 = sbr.rel (%p152) target = $region16
      $region15: #{_lambda_.12} parent=11 // pred_region
        %s155 = smul.u32 4, %s20
        %p156 = scmp.lt.s32.totalorder %s155, 3
        %s157 = scalar_select %p156, %s155, 3
        %s158 = smul.addr %s157, 2
        %s159 = smul.addr %s158, 4
        %s160 = scalar_lea.vmem %s0, %s159
        %s161 = smul.u32 4, %s20
      $region16: #{_lambda_.12} parent=11 // pred_fallthru
        _
      // Predicated region
      $region17: #{_lambda_.12} parent=11 // pred_check
        %p162 = pneg %p69
      $region18: #{_lambda_.12} parent=11 // pred_check_branch
        %164 = sbr.rel (%p162) target = $region20
      $region19: #{_lambda_.12} parent=11 // pred_region
        _
      $region20: #{_lambda_.12} parent=11 // pred_fallthru
        _
      // Predicated region
      $region21: #{_lambda_.12} parent=11 // pred_check
        %p165 = pneg %p90
      $region22: #{_lambda_.12} parent=11 // pred_check_branch
        %167 = sbr.rel (%p165) target = $region24
      $region23: #{_lambda_.12} parent=11 // pred_region
        _
      $region24: #{_lambda_.12} parent=11 // pred_fallthru
        _
      // Predicated region
      $region25: #{_lambda_.12} parent=11 // pred_check
        %p168 = pneg %p111
      $region26: #{_lambda_.12} parent=11 // pred_check_branch
        %170 = sbr.rel (%p168) target = $region28
      $region27: #{_lambda_.12} parent=11 // pred_region
        _
      $region28: #{_lambda_.12} parent=11 // pred_fallthru
        _
    $region12: #{_lambda_.12} parent=5 // pred_fallthru
      _
    %p171 = scmp.lt.s32.totalorder %s10, 2
    // Predicated region
    $region29: #{_lambda_.12} parent=5 // pred_check
      %p172 = pneg %p171
    $region30: #{_lambda_.12} parent=5 // pred_check_branch
      %174 = sbr.rel (%p172) target = $region32
    $region31: #{_lambda_.12} parent=5 // pred_region
      _
    $region32: #{_lambda_.12} parent=5 // pred_fallthru
      _
    %p175 = scmp.le.s32.totalorder 1, %s10
    %p176 = scmp.lt.s32.totalorder %s10, 3
    %p177 = pnand %p175, %p176
    %p178 = pneg %p177
    // Predicated region
    $region33: #{_lambda_.12} parent=5 // pred_check
      _
    $region34: #{_lambda_.12} parent=5 // pred_check_branch
      %180 = sbr.rel (%p177) target = $region36
    $region35: #{_lambda_.12} parent=5 // pred_region
      %s181 = ssub.s32 %s10, 1
      %s182 = smul.u32 4, %s20
      %p183 = scmp.lt.s32.totalorder %s182, 3
      %s184 = scalar_select %p183, %s182, 3
      %s185 = smul.addr %s184, 2
      %s186 = smul.addr %s185, 4
      %s187 = scalar_lea.vmem %s0, %s186
      %p188 = pneg %p48
      %p189 = pneg %p45
      %p190 = pneg %p69
      %p191 = pneg %p66
      %p192 = pneg %p90
      %p193 = pneg %p87
      %p194 = pneg %p111
      %p195 = pneg %p108
      %p196 = pneg %p137
      %p197 = pneg %p134
      %s198 = smul.u32 4, %s20
      %p199 = scmp.lt.s32.totalorder %s198, 3
      %s200 = scalar_select %p199, %s198, 3
      %s201 = smul.addr %s200, 4
      %s202 = scalar_lea.vmem %s4, %s201
      %s203 = smul.u32 4, %s20
      %p204 = scmp.lt.s32.totalorder %s203, 3
      %s205 = scalar_select %p204, %s203, 3
      %s206 = smul.addr %s205, 2
      %s207 = smul.addr %s206, 4
      %s208 = scalar_lea.vmem %s0, %s207
      %s209 = smul.u32 4, %s20
      %s210 = smul.u32 4, %s20
      %p211 = scmp.lt.s32.totalorder %s210, 3
      %s212 = scalar_select %p211, %s210, 3
      %s213 = smul.addr %s212, 4
      %s214 = scalar_lea.vmem %s4, %s213
      %s215 = smul.u32 4, %s20
      %v217 = vld [vmem:[%s208] sm:$0xff]
      %v218 = vld [vmem:[%s208 + $0x8] sm:$0xff]
      %v219 = vld [vmem:[%s208 + $0x10] sm:$0xff]
      %v220 = vld [vmem:[%s208 + $0x18] sm:$0xff]
      %v221 = vld [vmem:[%s1] sm:$0xf]
      %v222 = vld [vmem:[%s1 + $0x4] sm:$0xf]
      %v223 = vld [vmem:[%s1 + $0x8] sm:$0xf]
      %v224 = vld [vmem:[%s1 + $0xc] sm:$0xf]
      %v225 = vld [vmem:[%s1 + $0x10] sm:$0xf]
      %v226 = vld [vmem:[%s1 + $0x14] sm:$0xf]
      %v227 = vld [vmem:[%s1 + $0x18] sm:$0xf]
      %v228 = vld [vmem:[%s1 + $0x1c] sm:$0xf]
      %v229 = vld [vmem:[%s1 + $0x20] sm:$0xf]
      %v230 = vld [vmem:[%s1 + $0x24] sm:$0xf]
      %v231 = vld [vmem:[%s1 + $0x28] sm:$0xf]
      %v232 = vld [vmem:[%s1 + $0x2c] sm:$0xf]
      %v233 = vld [vmem:[%s1 + $0x30] sm:$0xf]
      %v234 = vld [vmem:[%s1 + $0x34] sm:$0xf]
      %v235 = vld [vmem:[%s1 + $0x38] sm:$0xf]
      %v236 = vld [vmem:[%s1 + $0x3c] sm:$0xf]
      %v237 = vld [vmem:[%s1 + $0x40] sm:$0xf]
      %v238 = vld [vmem:[%s1 + $0x44] sm:$0xf]
      %v239 = vld [vmem:[%s1 + $0x48] sm:$0xf]
      %v240 = vld [vmem:[%s1 + $0x4c] sm:$0xf]
      %v241 = vld [vmem:[%s1 + $0x50] sm:$0xf]
      %v242 = vld [vmem:[%s1 + $0x54] sm:$0xf]
      %v243 = vld [vmem:[%s1 + $0x58] sm:$0xf]
      %v244 = vld [vmem:[%s1 + $0x5c] sm:$0xf]
      %v245 = vld [vmem:[%s1 + $0x60] sm:$0xf]
      %v246 = vld [vmem:[%s1 + $0x64] sm:$0xf]
      %v247 = vld [vmem:[%s1 + $0x68] sm:$0xf]
      %v248 = vld [vmem:[%s1 + $0x6c] sm:$0xf]
      %v249 = vld [vmem:[%s1 + $0x70] sm:$0xf]
      %v250 = vld [vmem:[%s1 + $0x74] sm:$0xf]
      %v251 = vld [vmem:[%s1 + $0x78] sm:$0xf]
      %v252 = vld [vmem:[%s1 + $0x7c] sm:$0xf]
      %v257 = vunpack.c.l.b16 %v217
      %v258 = vunpack.c.h.b16 %v217
      %v259 = vunpack.c.l.b16 %v218
      %v260 = vunpack.c.h.b16 %v218
      %v261 = vunpack.c.l.b16 %v219
      %v262 = vunpack.c.h.b16 %v219
      %v263 = vunpack.c.l.b16 %v220
      %v264 = vunpack.c.h.b16 %v220
      %v265 = vpack.c.b16 %v259, %v257
      %v266 = vpack.c.b16 %v260, %v258
      %v267 = vpack.c.b16 %v263, %v261
      %v268 = vpack.c.b16 %v264, %v262
      %v305 = vunpack.c.l.b16 %v221
      %v306 = vunpack.c.l.b16 %v222
      %v307 = vunpack.c.l.b16 %v223
      %v308 = vunpack.c.l.b16 %v224
      %v309 = vunpack.c.l.b16 %v225
      %v310 = vunpack.c.l.b16 %v226
      %v311 = vunpack.c.l.b16 %v227
      %v312 = vunpack.c.l.b16 %v228
      %v313 = vunpack.c.l.b16 %v229
      %v314 = vunpack.c.l.b16 %v230
      %v315 = vunpack.c.l.b16 %v231
      %v316 = vunpack.c.l.b16 %v232
      %v317 = vunpack.c.l.b16 %v233
      %v318 = vunpack.c.l.b16 %v234
      %v319 = vunpack.c.l.b16 %v235
      %v320 = vunpack.c.l.b16 %v236
      %v321 = vunpack.c.l.b16 %v237
      %v322 = vunpack.c.l.b16 %v238
      %v323 = vunpack.c.l.b16 %v239
      %v324 = vunpack.c.l.b16 %v240
      %v325 = vunpack.c.l.b16 %v241
      %v326 = vunpack.c.l.b16 %v242
      %v327 = vunpack.c.l.b16 %v243
      %v328 = vunpack.c.l.b16 %v244
      %v329 = vunpack.c.l.b16 %v245
      %v330 = vunpack.c.l.b16 %v246
      %v331 = vunpack.c.l.b16 %v247
      %v332 = vunpack.c.l.b16 %v248
      %v333 = vunpack.c.l.b16 %v249
      %v334 = vunpack.c.l.b16 %v250
      %v335 = vunpack.c.l.b16 %v251
      %v336 = vunpack.c.l.b16 %v252
      %v337 = vpack.c.b16 %v306, %v305
      %v338 = vpack.c.b16 %v308, %v307
      %v339 = vpack.c.b16 %v310, %v309
      %v340 = vpack.c.b16 %v312, %v311
      %v341 = vpack.c.b16 %v314, %v313
      %v342 = vpack.c.b16 %v316, %v315
      %v343 = vpack.c.b16 %v318, %v317
      %v344 = vpack.c.b16 %v320, %v319
      %v345 = vpack.c.b16 %v322, %v321
      %v346 = vpack.c.b16 %v324, %v323
      %v347 = vpack.c.b16 %v326, %v325
      %v348 = vpack.c.b16 %v328, %v327
      %v349 = vpack.c.b16 %v330, %v329
      %v350 = vpack.c.b16 %v332, %v331
      %v351 = vpack.c.b16 %v334, %v333
      %v352 = vpack.c.b16 %v336, %v335
      %369 = vmatprep.subr.bf16.mxu0 0
      %370 = vmatpush1.bf16.msra.mxu0 %v344
      %371 = vmatprep.subr.bf16.mxu0 0
      %372 = vmatpush1.bf16.msra.mxu0 %v343
      %373 = vmatprep.subr.bf16.mxu0 0
      %374 = vmatpush1.bf16.msra.mxu0 %v342
      %375 = vmatprep.subr.bf16.mxu0 0
      %376 = vmatpush1.bf16.msra.mxu0 %v341
      %377 = vmatprep.subr.bf16.mxu0 0
      %378 = vmatpush1.bf16.msra.mxu0 %v340
      %379 = vmatprep.subr.bf16.mxu0 0
      %380 = vmatpush1.bf16.msra.mxu0 %v339
      %381 = vmatprep.subr.bf16.mxu0 0
      %382 = vmatpush1.bf16.msra.mxu0 %v338
      %383 = vmatprep.subr.bf16.mxu0 0
      %384 = vmatpush1.bf16.msra.mxu0 %v337
      %385 = vmatprep.subr.bf16.mxu0 0
      %386 = vmatpush2.bf16.msra.mxu0 %v352
      %387 = vmatprep.subr.bf16.mxu0 0
      %388 = vmatpush2.bf16.msra.mxu0 %v351
      %389 = vmatprep.subr.bf16.mxu0 0
      %390 = vmatpush2.bf16.msra.mxu0 %v350
      %391 = vmatprep.subr.bf16.mxu0 0
      %392 = vmatpush2.bf16.msra.mxu0 %v349
      %393 = vmatprep.subr.bf16.mxu0 0
      %394 = vmatpush2.bf16.msra.mxu0 %v348
      %395 = vmatprep.subr.bf16.mxu0 0
      %396 = vmatpush2.bf16.msra.mxu0 %v347
      %397 = vmatprep.subr.bf16.mxu0 0
      %398 = vmatpush2.bf16.msra.mxu0 %v346
      %399 = vmatprep.subr.bf16.mxu0 0
      %400 = vmatpush2.bf16.msra.mxu0 %v345
      %401 = vmatprep.mubr.bf16.mxu0 %v266
      %402 = vmatmul.mubr.bf16.gmra.mxu0 %v265
      %v403 = vpop.f32.mrf.mxu0
      %v404 = vadd.f32 0.0, %v403
      %v405 = vpop.f32.mrf.mxu0
      %v406 = vpop.f32.mrf.mxu0
      %v407 = vadd.f32 0.0, %v406
      %v408 = vpop.f32.mrf.mxu0
      %409 = vmatprep.mubr.bf16.mxu0 %v268
      %410 = vmatmul.mubr.bf16.gmra.mxu0 %v267
      %v411 = vpop.f32.mrf.mxu0
      %v412 = vadd.f32 0.0, %v411
      %v413 = vpop.f32.mrf.mxu0
      %v414 = vpop.f32.mrf.mxu0
      %v415 = vadd.f32 0.0, %v414
      %v416 = vpop.f32.mrf.mxu0
      %417 = vdwg.mxu0
      %p418 = scmp.eq.s32.totalorder %s19, 0
      %p419 = scmp.eq.s32.totalorder %s20, 0
      %p420 = pnand %p418, %p419
      %p421 = pneg %p420
      // Predicated region
      $region37: #{_lambda_.12} parent=35 // pred_check
        _
      $region38: #{_lambda_.12} parent=35 // pred_check_branch
        %423 = sbr.rel (%p420) target = $region40
      $region39: #{_lambda_.12} parent=35 // pred_region
        %424 = vst [vmem:[#allocation2] sm:$0x1] 0.0
        %425 = vst [vmem:[#allocation3] sm:$0x1] 0.0
      $region40: #{_lambda_.12} parent=35 // pred_fallthru
        _
      // Predicated region
      $region41: #{_lambda_.12} parent=35 // pred_check
        %p426 = pneg %p418
      $region42: #{_lambda_.12} parent=35 // pred_check_branch
        %428 = sbr.rel (%p426) target = $region44
      $region43: #{_lambda_.12} parent=35 // pred_region
        %v429 = vld [vmem:[#allocation2] sm:$0x1]
        %v430 = vadd.f32 %v404, %v407
        %v431 = vadd.f32 %v430, %v412
        %v432 = vadd.f32 %v431, %v415
        %v433 = vrot.slane %v432, 4
        %v434 = vadd.f32 %v432, %v433
        %v435 = vrot.slane %v434, 2
        %v436 = vadd.f32 %v434, %v435
        %v437 = vrot.slane %v436, 1
        %v438 = vadd.f32 %v436, %v437
        %v439 = vadd.f32 %v429, %v438
        %440 = vst [vmem:[#allocation2] sm:$0x1] %v439
        %v441 = vld [vmem:[#allocation3] sm:$0x1]
        %v442 = vmul.f32 %v404, %v404
        %v443 = vmul.f32 %v407, %v407
        %v444 = vmul.f32 %v412, %v412
        %v445 = vmul.f32 %v415, %v415
        %v446 = vadd.f32 %v442, %v443
        %v447 = vadd.f32 %v446, %v444
        %v448 = vadd.f32 %v447, %v445
        %v449 = vrot.slane %v448, 4
        %v450 = vadd.f32 %v448, %v449
        %v451 = vrot.slane %v450, 2
        %v452 = vadd.f32 %v450, %v451
        %v453 = vrot.slane %v452, 1
        %v454 = vadd.f32 %v452, %v453
        %v455 = vadd.f32 %v441, %v454
        %456 = vst [vmem:[#allocation3] sm:$0x1] %v455
      $region44: #{_lambda_.12} parent=35 // pred_fallthru
        _
      %p457 = scmp.eq.s32.totalorder %s19, 1
      // Predicated region
      $region45: #{_lambda_.12} parent=35 // pred_check
        %p458 = pneg %p457
      $region46: #{_lambda_.12} parent=35 // pred_check_branch
        %460 = sbr.rel (%p458) target = $region48
      $region47: #{_lambda_.12} parent=35 // pred_region
        %v461 = vld [vmem:[#allocation2] sm:$0x1]
        %v462 = vmul.f32 %v461, 0.03125
        %v463 = vld [vmem:[#allocation3] sm:$0x1]
        %v464 = vmul.f32 %v463, 0.03125
        %v465 = vmul.f32 %v462, %v462
        %v466 = vsub.f32 %v464, %v465
        %v467 = vmax.f32 %v466, 0.0
        %v468 = vadd.f32 %v467, 1e-05
        %v469 = vrsqrt.pop %v468
        %v470 = vld [vmem:[%s2] sm:$0x1]
        %v471 = vmul.f32 %v470, %v469
        %v472 = vld [vmem:[%s3] sm:$0x1]
        %v473 = vmul.f32 %v462, %v471
        %v474 = vsub.f32 %v472, %v473
        %v476 = vlaneseq
        %v477 = vshrl.u32 %v476, 7
        %v478 = vsub.s32 0, %v477
        %v479 = vrot.slane %v471, %v478
        %v481 = vmul.f32 %v404, %v479
        %v482 = vmul.f32 %v407, %v479
        %v483 = vmul.f32 %v412, %v479
        %v484 = vmul.f32 %v415, %v479
        %v486 = vlaneseq
        %v487 = vshrl.u32 %v486, 7
        %v488 = vsub.s32 0, %v487
        %v489 = vrot.slane %v474, %v488
        %v491 = vadd.f32 %v481, %v489
        %v492 = vadd.f32 %v482, %v489
        %v493 = vadd.f32 %v483, %v489
        %v494 = vadd.f32 %v484, %v489
        %vm495 = vcmp.gt.f32.partialorder %v491, 0.0
        %vm496 = vcmp.gt.f32.partialorder %v492, 0.0
        %vm497 = vcmp.gt.f32.partialorder %v493, 0.0
        %vm498 = vcmp.gt.f32.partialorder %v494, 0.0
        %v499 = vmul.f32 %v491, 0.2
        %v500 = vmul.f32 %v492, 0.2
        %v501 = vmul.f32 %v493, 0.2
        %v502 = vmul.f32 %v494, 0.2
        %v503 = vsel %vm495, %v491, %v499
        %v504 = vsel %vm496, %v492, %v500
        %v505 = vsel %vm497, %v493, %v501
        %v506 = vsel %vm498, %v494, %v502
        %v507 = vpack.c.bf16 %v504, %v503
        %v508 = vpack.c.bf16 %v506, %v505
        %v511 = vunpack.c.l.b16 %v507
        %v512 = vunpack.c.h.b16 %v507
        %v513 = vunpack.c.l.b16 %v508
        %v514 = vunpack.c.h.b16 %v508
        %v515 = vpack.c.b16 %v511, %v511
        %v516 = vpack.c.b16 %v512, %v512
        %v517 = vpack.c.b16 %v513, %v513
        %v518 = vpack.c.b16 %v514, %v514
        %523 = vst [vmem:[%s214] sm:$0xf] %v515
        %524 = vst [vmem:[%s214 + $0x4] sm:$0xf] %v516
        %525 = vst [vmem:[%s214 + $0x8] sm:$0xf] %v517
        %526 = vst [vmem:[%s214 + $0xc] sm:$0xf] %v518
      $region48: #{_lambda_.12} parent=35 // pred_fallthru
        _
      %s527 = smul.u32 4, %s20
      %p528 = scmp.lt.s32.totalorder %s527, 3
      %s529 = scalar_select %p528, %s527, 3
      %s530 = smul.addr %s529, 4
      %s531 = scalar_lea.vmem %s4, %s530
      // Predicated region
      $region49: #{_lambda_.12} parent=35 // pred_check
        %p532 = pneg %p134
      $region50: #{_lambda_.12} parent=35 // pred_check_branch
        %534 = sbr.rel (%p532) target = $region52
      $region51: #{_lambda_.12} parent=35 // pred_region
        %s535 = smul.u32 4, %s20
      $region52: #{_lambda_.12} parent=35 // pred_fallthru
        _
      // Predicated region
      $region53: #{_lambda_.12} parent=35 // pred_check
        %p536 = pneg %p134
      $region54: #{_lambda_.12} parent=35 // pred_check_branch
        %538 = sbr.rel (%p536) target = $region56
      $region55: #{_lambda_.12} parent=35 // pred_region
        %s539 = smul.u32 4, %s20
        %p540 = scmp.lt.s32.totalorder %s539, 3
        %s541 = scalar_select %p540, %s539, 3
        %s542 = smul.addr %s541, 4
        %s543 = scalar_lea.vmem %s4, %s542
      $region56: #{_lambda_.12} parent=35 // pred_fallthru
        _
    $region36: #{_lambda_.12} parent=5 // pred_fallthru
      _
    %p544 = scmp.le.s32.totalorder 2, %s10
    // Predicated region
    $region57: #{_lambda_.12} parent=5 // pred_check
      %p545 = pneg %p544
    $region58: #{_lambda_.12} parent=5 // pred_check_branch
      %547 = sbr.rel (%p545) target = $region60
    $region59: #{_lambda_.12} parent=5 // pred_region
      %s548 = ssub.s32 %s10, 2
    $region60: #{_lambda_.12} parent=5 // pred_fallthru
      _
  $region6: #{_lambda_.12} parent=0 // loop_footer
    %s14 = sadd.s32 1, %s10
  $region7: #{_lambda_.12} parent=0 // loop_footer_branch
    %9 = sbr.rel target = $region3
  $region8: #{_lambda_.12} parent=0 // loop_exit
    _

// kernel: _lambda_.15
$region0: #{_lambda_.15}
  #allocation0 [shape = 'u32[]', space=smem, size = 0x4, offset = 0x4, fixed_abs, tag = 'smem constant byte address 0x4 - core index']
  #allocation1 [shape = 'u32[144,128]{1,0:T(1,128)}', space=vmem, size = 0x12000, scoped, tag = 'internal scratch']
  #allocation2 [shape = 'f32[8,128]{1,0:T(8,128)}', space=vmem, size = 0x1000, scoped, tag = 'scratch operand']
  %s0 = inlined_call_operand.vmem [shape: bf16[8,384], index: 0, kind: input, shape index: {}]
  %s1 = inlined_call_operand.vmem [shape: bf16[384,128], index: 1, kind: input, shape index: {}]
  %s2 = inlined_call_operand.vmem [shape: f32[1,128], index: 2, kind: input, shape index: {}]
  %s3 = inlined_call_operand.vmem [shape: f32[8,128], index: 3, kind: output, shape index: {}]
  %s4 = sld [smem:[#allocation0]]
  $region30: #{_lambda_.15} parent=0
    _
  %s6 = ssub.s32 1, %s4
  %s7 = scalar_select 0, %s6, %s4
  // Predicated region
  $region2: #{_lambda_.15} parent=0 // pred_check
    _
  $region3: #{_lambda_.15} parent=0 // pred_check_branch
    %9 = sbr.rel (0) target = $region5
  $region4: #{_lambda_.15} parent=0 // pred_region
    _
  $region5: #{_lambda_.15} parent=0 // pred_fallthru
    _
  // Predicated region
  $region6: #{_lambda_.15} parent=0 // pred_check
    _
  $region7: #{_lambda_.15} parent=0 // pred_check_branch
    %11 = sbr.rel (0) target = $region9
  $region8: #{_lambda_.15} parent=0 // pred_region
    _
  $region9: #{_lambda_.15} parent=0 // pred_fallthru
    _
  // Predicated region
  $region10: #{_lambda_.15} parent=0 // pred_check
    _
  $region11: #{_lambda_.15} parent=0 // pred_check_branch
    %13 = sbr.rel (0) target = $region13
  $region12: #{_lambda_.15} parent=0 // pred_region
    _
  $region13: #{_lambda_.15} parent=0 // pred_fallthru
    _
  %p15 = scmp.eq.s32.totalorder 0, 0
  // Predicated region
  $region14: #{_lambda_.15} parent=0 // pred_check
    %p16 = pneg %p15
  $region15: #{_lambda_.15} parent=0 // pred_check_branch
    %18 = sbr.rel (%p16) target = $region17
  $region16: #{_lambda_.15} parent=0 // pred_region
    %19 = vst [vmem:[#allocation2] sm:$0xff] 0.0
  $region17: #{_lambda_.15} parent=0 // pred_fallthru
    _
  %v20 = vld [vmem:[#allocation2] sm:$0xff]
  %v21 = vld [vmem:[%s0] sm:$0xff]
  %v22 = vld [vmem:[%s0 + $0x8] sm:$0xf]
  %v23 = vld [vmem:[%s1] sm:$0xf]
  %v24 = vld [vmem:[%s1 + $0x4] sm:$0xf]
  %v25 = vld [vmem:[%s1 + $0x8] sm:$0xf]
  %v26 = vld [vmem:[%s1 + $0xc] sm:$0xf]
  %v27 = vld [vmem:[%s1 + $0x10] sm:$0xf]
  %v28 = vld [vmem:[%s1 + $0x14] sm:$0xf]
  %v29 = vld [vmem:[%s1 + $0x18] sm:$0xf]
  %v30 = vld [vmem:[%s1 + $0x1c] sm:$0xf]
  %v31 = vld [vmem:[%s1 + $0x20] sm:$0xf]
  %v32 = vld [vmem:[%s1 + $0x24] sm:$0xf]
  %v33 = vld [vmem:[%s1 + $0x28] sm:$0xf]
  %v34 = vld [vmem:[%s1 + $0x2c] sm:$0xf]
  %v35 = vld [vmem:[%s1 + $0x30] sm:$0xf]
  %v36 = vld [vmem:[%s1 + $0x34] sm:$0xf]
  %v37 = vld [vmem:[%s1 + $0x38] sm:$0xf]
  %v38 = vld [vmem:[%s1 + $0x3c] sm:$0xf]
  %v39 = vld [vmem:[%s1 + $0x40] sm:$0xf]
  %v40 = vld [vmem:[%s1 + $0x44] sm:$0xf]
  %v41 = vld [vmem:[%s1 + $0x48] sm:$0xf]
  %v42 = vld [vmem:[%s1 + $0x4c] sm:$0xf]
  %v43 = vld [vmem:[%s1 + $0x50] sm:$0xf]
  %v44 = vld [vmem:[%s1 + $0x54] sm:$0xf]
  %v45 = vld [vmem:[%s1 + $0x58] sm:$0xf]
  %v46 = vld [vmem:[%s1 + $0x5c] sm:$0xf]
  %v47 = vld [vmem:[%s1 + $0x60] sm:$0xf]
  %v48 = vld [vmem:[%s1 + $0x64] sm:$0xf]
  %v49 = vld [vmem:[%s1 + $0x68] sm:$0xf]
  %v50 = vld [vmem:[%s1 + $0x6c] sm:$0xf]
  %v51 = vld [vmem:[%s1 + $0x70] sm:$0xf]
  %v52 = vld [vmem:[%s1 + $0x74] sm:$0xf]
  %v53 = vld [vmem:[%s1 + $0x78] sm:$0xf]
  %v54 = vld [vmem:[%s1 + $0x7c] sm:$0xf]
  %v55 = vld [vmem:[%s1 + $0x80] sm:$0xf]
  %v56 = vld [vmem:[%s1 + $0x84] sm:$0xf]
  %v57 = vld [vmem:[%s1 + $0x88] sm:$0xf]
  %v58 = vld [vmem:[%s1 + $0x8c] sm:$0xf]
  %v59 = vld [vmem:[%s1 + $0x90] sm:$0xf]
  %v60 = vld [vmem:[%s1 + $0x94] sm:$0xf]
  %v61 = vld [vmem:[%s1 + $0x98] sm:$0xf]
  %v62 = vld [vmem:[%s1 + $0x9c] sm:$0xf]
  %v63 = vld [vmem:[%s1 + $0xa0] sm:$0xf]
  %v64 = vld [vmem:[%s1 + $0xa4] sm:$0xf]
  %v65 = vld [vmem:[%s1 + $0xa8] sm:$0xf]
  %v66 = vld [vmem:[%s1 + $0xac] sm:$0xf]
  %v67 = vld [vmem:[%s1 + $0xb0] sm:$0xf]
  %v68 = vld [vmem:[%s1 + $0xb4] sm:$0xf]
  %v69 = vld [vmem:[%s1 + $0xb8] sm:$0xf]
  %v70 = vld [vmem:[%s1 + $0xbc] sm:$0xf]
  %v73 = vunpack.c.l.b16 %v21
  %v74 = vunpack.c.h.b16 %v21
  %v75 = vunpack.c.l.b16 %v22
  %v76 = vpack.c.b16 %v73, %v73
  %v77 = vpack.c.b16 %v74, %v74
  %v78 = vpack.c.b16 %v75, %v75
  %v130 = vunpack.c.l.b16 %v23
  %v131 = vunpack.c.l.b16 %v24
  %v132 = vunpack.c.l.b16 %v25
  %v133 = vunpack.c.l.b16 %v26
  %v134 = vunpack.c.l.b16 %v27
  %v135 = vunpack.c.l.b16 %v28
  %v136 = vunpack.c.l.b16 %v29
  %v137 = vunpack.c.l.b16 %v30
  %v138 = vunpack.c.l.b16 %v31
  %v139 = vunpack.c.l.b16 %v32
  %v140 = vunpack.c.l.b16 %v33
  %v141 = vunpack.c.l.b16 %v34
  %v142 = vunpack.c.l.b16 %v35
  %v143 = vunpack.c.l.b16 %v36
  %v144 = vunpack.c.l.b16 %v37
  %v145 = vunpack.c.l.b16 %v38
  %v146 = vunpack.c.l.b16 %v39
  %v147 = vunpack.c.l.b16 %v40
  %v148 = vunpack.c.l.b16 %v41
  %v149 = vunpack.c.l.b16 %v42
  %v150 = vunpack.c.l.b16 %v43
  %v151 = vunpack.c.l.b16 %v44
  %v152 = vunpack.c.l.b16 %v45
  %v153 = vunpack.c.l.b16 %v46
  %v154 = vunpack.c.l.b16 %v47
  %v155 = vunpack.c.l.b16 %v48
  %v156 = vunpack.c.l.b16 %v49
  %v157 = vunpack.c.l.b16 %v50
  %v158 = vunpack.c.l.b16 %v51
  %v159 = vunpack.c.l.b16 %v52
  %v160 = vunpack.c.l.b16 %v53
  %v161 = vunpack.c.l.b16 %v54
  %v162 = vunpack.c.l.b16 %v55
  %v163 = vunpack.c.l.b16 %v56
  %v164 = vunpack.c.l.b16 %v57
  %v165 = vunpack.c.l.b16 %v58
  %v166 = vunpack.c.l.b16 %v59
  %v167 = vunpack.c.l.b16 %v60
  %v168 = vunpack.c.l.b16 %v61
  %v169 = vunpack.c.l.b16 %v62
  %v170 = vunpack.c.l.b16 %v63
  %v171 = vunpack.c.l.b16 %v64
  %v172 = vunpack.c.l.b16 %v65
  %v173 = vunpack.c.l.b16 %v66
  %v174 = vunpack.c.l.b16 %v67
  %v175 = vunpack.c.l.b16 %v68
  %v176 = vunpack.c.l.b16 %v69
  %v177 = vunpack.c.l.b16 %v70
  %v178 = vpack.c.b16 %v131, %v130
  %v179 = vpack.c.b16 %v133, %v132
  %v180 = vpack.c.b16 %v135, %v134
  %v181 = vpack.c.b16 %v137, %v136
  %v182 = vpack.c.b16 %v139, %v138
  %v183 = vpack.c.b16 %v141, %v140
  %v184 = vpack.c.b16 %v143, %v142
  %v185 = vpack.c.b16 %v145, %v144
  %v186 = vpack.c.b16 %v147, %v146
  %v187 = vpack.c.b16 %v149, %v148
  %v188 = vpack.c.b16 %v151, %v150
  %v189 = vpack.c.b16 %v153, %v152
  %v190 = vpack.c.b16 %v155, %v154
  %v191 = vpack.c.b16 %v157, %v156
  %v192 = vpack.c.b16 %v159, %v158
  %v193 = vpack.c.b16 %v161, %v160
  %v194 = vpack.c.b16 %v163, %v162
  %v195 = vpack.c.b16 %v165, %v164
  %v196 = vpack.c.b16 %v167, %v166
  %v197 = vpack.c.b16 %v169, %v168
  %v198 = vpack.c.b16 %v171, %v170
  %v199 = vpack.c.b16 %v173, %v172
  %v200 = vpack.c.b16 %v175, %v174
  %v201 = vpack.c.b16 %v177, %v176
  %226 = vmatprep.subr.bf16.mxu0 0
  %227 = vmatpush1.bf16.msra.mxu0 %v185
  %228 = vmatprep.subr.bf16.mxu0 0
  %229 = vmatpush1.bf16.msra.mxu0 %v184
  %230 = vmatprep.subr.bf16.mxu0 0
  %231 = vmatpush1.bf16.msra.mxu0 %v183
  %232 = vmatprep.subr.bf16.mxu0 0
  %233 = vmatpush1.bf16.msra.mxu0 %v182
  %234 = vmatprep.subr.bf16.mxu0 0
  %235 = vmatpush1.bf16.msra.mxu0 %v181
  %236 = vmatprep.subr.bf16.mxu0 0
  %237 = vmatpush1.bf16.msra.mxu0 %v180
  %238 = vmatprep.subr.bf16.mxu0 0
  %239 = vmatpush1.bf16.msra.mxu0 %v179
  %240 = vmatprep.subr.bf16.mxu0 0
  %241 = vmatpush1.bf16.msra.mxu0 %v178
  %242 = vmatprep.subr.bf16.mxu0 0
  %243 = vmatpush2.bf16.msra.mxu0 %v193
  %244 = vmatprep.subr.bf16.mxu0 0
  %245 = vmatpush2.bf16.msra.mxu0 %v192
  %246 = vmatprep.subr.bf16.mxu0 0
  %247 = vmatpush2.bf16.msra.mxu0 %v191
  %248 = vmatprep.subr.bf16.mxu0 0
  %249 = vmatpush2.bf16.msra.mxu0 %v190
  %250 = vmatprep.subr.bf16.mxu0 0
  %251 = vmatpush2.bf16.msra.mxu0 %v189
  %252 = vmatprep.subr.bf16.mxu0 0
  %253 = vmatpush2.bf16.msra.mxu0 %v188
  %254 = vmatprep.subr.bf16.mxu0 0
  %255 = vmatpush2.bf16.msra.mxu0 %v187
  %256 = vmatprep.subr.bf16.mxu0 0
  %257 = vmatpush2.bf16.msra.mxu0 %v186
  %258 = vmatprep.mubr.bf16.mxu0 %v77
  %259 = vmatmul.mubr.bf16.gmra.mxu0 %v76
  %v260 = vpop.f32.mrf.mxu0
  %v261 = vadd.f32 0.0, %v260
  %v262 = vpop.f32.mrf.mxu0
  %v263 = vpop.f32.mrf.mxu0
  %v264 = vpop.f32.mrf.mxu0
  %265 = vdwg.mxu0
  %266 = vmatprep.subr.bf16.mxu0 0
  %267 = vmatpush1.bf16.msra.mxu0 %v201
  %268 = vmatprep.subr.bf16.mxu0 0
  %269 = vmatpush1.bf16.msra.mxu0 %v200
  %270 = vmatprep.subr.bf16.mxu0 0
  %271 = vmatpush1.bf16.msra.mxu0 %v199
  %272 = vmatprep.subr.bf16.mxu0 0
  %273 = vmatpush1.bf16.msra.mxu0 %v198
  %274 = vmatprep.subr.bf16.mxu0 0
  %275 = vmatpush1.bf16.msra.mxu0 %v197
  %276 = vmatprep.subr.bf16.mxu0 0
  %277 = vmatpush1.bf16.msra.mxu0 %v196
  %278 = vmatprep.subr.bf16.mxu0 0
  %279 = vmatpush1.bf16.msra.mxu0 %v195
  %280 = vmatprep.subr.bf16.mxu0 0
  %281 = vmatpush1.bf16.msra.mxu0 %v194
  %282 = vmatprep.subr.bf16.mxu0 0
  %283 = vmatpush2.bf16.msra.mxu0 0
  %284 = vmatprep.subr.bf16.mxu0 0
  %285 = vmatpush2.bf16.msra.mxu0 0
  %286 = vmatprep.subr.bf16.mxu0 0
  %287 = vmatpush2.bf16.msra.mxu0 0
  %288 = vmatprep.subr.bf16.mxu0 0
  %289 = vmatpush2.bf16.msra.mxu0 0
  %290 = vmatprep.subr.bf16.mxu0 0
  %291 = vmatpush2.bf16.msra.mxu0 0
  %292 = vmatprep.subr.bf16.mxu0 0
  %293 = vmatpush2.bf16.msra.mxu0 0
  %294 = vmatprep.subr.bf16.mxu0 0
  %295 = vmatpush2.bf16.msra.mxu0 0
  %296 = vmatprep.subr.bf16.mxu0 0
  %297 = vmatpush2.bf16.msra.mxu0 0
  %298 = vmatprep.mubr.bf16.mxu0 0
  %299 = vmatmul.mubr.bf16.gmra.mxu0 %v78
  %v300 = vpop.f32.mrf.mxu0
  %v301 = vadd.f32 %v261, %v300
  %v302 = vpop.f32.mrf.mxu0
  %v303 = vpop.f32.mrf.mxu0
  %v304 = vpop.f32.mrf.mxu0
  %305 = vdwg.mxu0
  %v306 = vadd.f32 %v20, %v301
  %307 = vst [vmem:[#allocation2] sm:$0xff] %v306
  // Predicated region
  $region18: #{_lambda_.15} parent=0 // pred_check
    %p308 = pneg %p15
  $region19: #{_lambda_.15} parent=0 // pred_check_branch
    %310 = sbr.rel (%p308) target = $region21
  $region20: #{_lambda_.15} parent=0 // pred_region
    %v311 = vld [vmem:[#allocation2] sm:$0xff]
    %v312 = vld [vmem:[%s2] sm:$0x1]
    %v314 = vlaneseq
    %v315 = vshrl.u32 %v314, 7
    %v316 = vsub.s32 0, %v315
    %v317 = vrot.slane %v312, %v316
    %v319 = vadd.f32 %v311, %v317
    %320 = vst [vmem:[%s3] sm:$0xff] %v319
  $region21: #{_lambda_.15} parent=0 // pred_fallthru
    _
  // Predicated region
  $region22: #{_lambda_.15} parent=0 // pred_check
    _
  $region23: #{_lambda_.15} parent=0 // pred_check_branch
    %322 = sbr.rel (0) target = $region25
  $region24: #{_lambda_.15} parent=0 // pred_region
    _
  $region25: #{_lambda_.15} parent=0 // pred_fallthru
    _
  // Predicated region
  $region26: #{_lambda_.15} parent=0 // pred_check
    _
  $region27: #{_lambda_.15} parent=0 // pred_check_branch
    %324 = sbr.rel (0) target = $region29
  $region28: #{_lambda_.15} parent=0 // pred_region
    _
  $region29: #{_lambda_.15} parent=0 // pred_fallthru
    _

</llo_original>
